<compile_context>
chip_gen: v7x
topology: tpu7x:2x2x1
jax: 0.10.0
libtpu: 0.0.40
codegen_flags: <defaults>
</compile_context>

<pallas_src>
import jax
import jax.numpy as jnp
from jax.experimental import pallas as pl
from jax.experimental.pallas import tpu as pltpu

FRAME = 128      # samples per frame (stand-in for the conv feature-extractor stride)
HIDDEN = 768     # wav2vec2-base hidden size (matches nn.Linear(768, 32) in_features)
OUT = 32         # fc head output size
OUT_PAD = 128    # lane-dense padded output width (slice back to OUT in wrapper)
HC = 128         # hidden-dim chunk processed per inner step (768 / 128 = 6 slabs)
TM = 256         # rows (frames) processed per grid step (sweep 512/1024 for long audio)


def speech_kernel(x_ref, w1_ref, b1_ref, wfc_ref, bfc_ref, o_ref):
    """Fused: frame-features @ W1 + b1 -> GELU -> @ W_fc + b_fc (HIDDEN chunked).

    x_ref:   (TM, FRAME)        f32  (cast to bf16 in-kernel)
    w1_ref:  (FRAME, HIDDEN)    bf16 (resident across grid steps)
    b1_ref:  (1, HIDDEN)        f32
    wfc_ref: (HIDDEN, OUT_PAD)  bf16 (zero-padded cols 32..127; resident)
    bfc_ref: (1, OUT_PAD)       f32  (zero-padded)
    o_ref:   (TM, OUT_PAD)      f32  (lane-dense store; cols 32..127 are zeros)
    """
    x = x_ref[...].astype(jnp.bfloat16)                       # bf16 MXU operand
    acc = jnp.zeros((x.shape[0], OUT_PAD), jnp.float32)

    # Static (fully unrolled) loop over HIDDEN slabs of HC columns.  Each slab
    # keeps a (TM, HC) f32 intermediate (~32 vregs) instead of the full
    # (TM, HIDDEN) tensor, so nothing large spills to VMEM.
    for c in range(HIDDEN // HC):
        lo = c * HC
        h = jnp.dot(x, w1_ref[:, lo:lo + HC],
                    preferred_element_type=jnp.float32)        # MXU, f32 accum
        h = h + b1_ref[:, lo:lo + HC]                          # f32 bias (VALU)
        h = h * jax.nn.sigmoid(1.702 * h)                      # sigmoid-form GELU (1 EUP op)
        acc = acc + jnp.dot(h.astype(jnp.bfloat16), wfc_ref[lo:lo + HC, :],
                            preferred_element_type=jnp.float32)

    o_ref[...] = acc + bfc_ref[...]


def _pick_tm(m_rows, tm=TM):
    # Keep >= 2 grid steps when possible so both v7x TensorCores get work
    # under dimension_semantics=("parallel",); no effect on v5e/v6e.
    while tm > 128 and pl.cdiv(m_rows, tm) < 2:
        tm //= 2
    return tm


def speech_model_forward(inputs, params):
    """Mirrors SpeechModel(model_type='wav2vec2').forward(inputs).

    `params` must come from prepare_params() (weights pre-cast / pre-padded
    once, outside the per-call path).
    """
    # PyTorch: if inputs.dim() == 4: inputs = inputs.squeeze(1)
    if inputs.ndim == 4:
        inputs = jnp.squeeze(inputs, axis=1)
    if inputs.ndim == 3:          # [B, 1, samples] -> [B, samples]
        inputs = jnp.squeeze(inputs, axis=1)

    B, S = inputs.shape

    # pad samples up to a FRAME multiple (no hard assert on audio length)
    s_pad = pl.cdiv(S, FRAME) * FRAME
    if s_pad != S:
        inputs = jnp.pad(inputs, ((0, 0), (0, s_pad - S)))
    T = s_pad // FRAME

    # frame the waveform: [B, s_pad] -> [B*T, FRAME]; pad rows to a tm multiple.
    # x stays f32 here — the bf16 cast happens inside the kernel (one fewer
    # full HBM read+write pass over the framed waveform).
    M = B * T
    tm = _pick_tm(M)
    m_pad = pl.cdiv(M, tm) * tm
    x = inputs.reshape(M, FRAME)
    if m_pad != M:
        x = jnp.pad(x, ((0, m_pad - M), (0, 0)))

    w1, b1 = params["w1"], params["b1"]
    wfc, bfc = params["wfc_pad"], params["bfc_pad"]

    grid = (m_pad // tm,)

    cost = pl.CostEstimate(
        flops=2 * m_pad * HIDDEN * (FRAME + OUT_PAD),
        transcendentals=m_pad * HIDDEN,                        # sigmoid in GELU
        bytes_accessed=(x.size * 4                             # f32 framed input
                        + w1.size * 2 + wfc.size * 2           # bf16 weights
                        + b1.size * 4 + bfc.size * 4           # f32 biases
                        + m_pad * OUT_PAD * 4),                # f32 lane-dense output
    )

    out = pl.pallas_call(
        speech_kernel,
        out_shape=jax.ShapeDtypeStruct((m_pad, OUT_PAD), jnp.float32),
        grid_spec=pltpu.PrefetchScalarGridSpec(
            num_scalar_prefetch=0,
            grid=grid,
            in_specs=[
                pl.BlockSpec((tm, FRAME), lambda i: (i, 0)),        # framed input tile
                pl.BlockSpec((FRAME, HIDDEN), lambda i: (0, 0)),    # encoder weight (resident)
                pl.BlockSpec((1, HIDDEN), lambda i: (0, 0)),        # encoder bias
                pl.BlockSpec((HIDDEN, OUT_PAD), lambda i: (0, 0)),  # fc weight, lane-padded (resident)
                pl.BlockSpec((1, OUT_PAD), lambda i: (0, 0)),       # fc bias, lane-padded
            ],
            out_specs=pl.BlockSpec((tm, OUT_PAD), lambda i: (i, 0)),
        ),
        compiler_params=pltpu.CompilerParams(
            dimension_semantics=("parallel",),   # shards grid steps across TCs on v7x
        ),
        cost_estimate=cost,
    )(x, w1, b1, wfc, bfc)

    # drop row padding and the zero output lanes; == fc(last_hidden_state): [B, T, 32]
    return out[:M, :OUT].reshape(B, T, OUT)


def init_params(key):
    k1, k2, k3, k4 = jax.random.split(key, 4)
    return {
        "w1": jax.random.normal(k1, (FRAME, HIDDEN), jnp.float32) / jnp.sqrt(FRAME),
        "b1": jax.random.normal(k2, (1, HIDDEN), jnp.float32) * 0.01,
        "wfc": jax.random.normal(k3, (HIDDEN, OUT), jnp.float32) / jnp.sqrt(HIDDEN),
        "bfc": jax.random.normal(k4, (1, OUT), jnp.float32) * 0.01,
    }


def prepare_params(raw):
    """One-time weight prep (cast to bf16, lane-pad the fc head to 128 cols)."""
    wfc_pad = jnp.zeros((HIDDEN, OUT_PAD), jnp.bfloat16)
    wfc_pad = wfc_pad.at[:, :OUT].set(raw["wfc"].astype(jnp.bfloat16))
    bfc_pad = jnp.zeros((1, OUT_PAD), jnp.float32)
    bfc_pad = bfc_pad.at[:, :OUT].set(raw["bfc"].astype(jnp.float32))
    return {
        "w1": raw["w1"].astype(jnp.bfloat16),
        "b1": raw["b1"].astype(jnp.float32),
        "wfc_pad": wfc_pad,
        "bfc_pad": bfc_pad,
    }


if __name__ == "__main__":
    key = jax.random.PRNGKey(0)
    pkey, xkey = jax.random.split(key)

    params = prepare_params(init_params(pkey))

    # ~1s of 16 kHz audio per example; length deliberately NOT a multiple of
    # FRAME so the padding path is exercised.  B*T = 4*126 = 504 -> padded to
    # 512 rows -> grid of 2 steps with TM=256 (even, so both v7x TCs are used).
    B, SAMPLES = 4, 16037
    inputs = jax.random.normal(xkey, (B, SAMPLES), jnp.float32)

    fwd = jax.jit(speech_model_forward)
    out = jax.block_until_ready(fwd(inputs, params))

    T = pl.cdiv(SAMPLES, FRAME)
    assert out.shape == (B, T, OUT), out.shape
    assert bool(jnp.all(jnp.isfinite(out)))
    print("KERNEL_OK")
</pallas_src>

<mosaic_0001>
module attributes {stable_mosaic.version = 11 : i64} {
  func.func @speech_kernel(%arg0: i32, %arg1: memref<256x128xf32, #tpu.memory_space<vmem>>, %arg2: memref<128x768xbf16, #tpu.memory_space<vmem>>, %arg3: memref<1x768xf32, #tpu.memory_space<vmem>>, %arg4: memref<768x128xbf16, #tpu.memory_space<vmem>>, %arg5: memref<1x128xf32, #tpu.memory_space<vmem>>, %arg6: memref<256x128xf32, #tpu.memory_space<vmem>>) attributes {dimension_semantics = [#tpu.dimension_semantics<parallel>], iteration_bounds = array<i64: 2>, scalar_prefetch = 0 : i64, scratch_operands = 0 : i64, tpu.core_type = #tpu.core_type<tc>, window_params = [{transform_indices = @transform_0, window_bounds = array<i64: 256, 128>}, {pipeline_mode = #tpu.pipeline_mode<synchronous>, transform_indices = @transform_1, window_bounds = array<i64: 128, 768>}, {pipeline_mode = #tpu.pipeline_mode<synchronous>, transform_indices = @transform_2, window_bounds = array<i64: 1, 768>}, {pipeline_mode = #tpu.pipeline_mode<synchronous>, transform_indices = @transform_3, window_bounds = array<i64: 768, 128>}, {pipeline_mode = #tpu.pipeline_mode<synchronous>, transform_indices = @transform_4, window_bounds = array<i64: 1, 128>}, {transform_indices = @transform_5, window_bounds = array<i64: 256, 128>}]} {
    %c0 = arith.constant 0 : index
    %c0_0 = arith.constant 0 : index
    %0 = vector.load %arg1[%c0, %c0_0] : memref<256x128xf32, #tpu.memory_space<vmem>>, vector<256x128xf32>
    %1 = arith.truncf %0 : vector<256x128xf32> to vector<256x128xbf16>
    %cst = arith.constant 0.000000e+00 : f32
    %2 = vector.broadcast %cst : f32 to vector<256x128xf32>
    %c0_1 = arith.constant 0 : index
    %c0_2 = arith.constant 0 : index
    %3 = vector.load %arg2[%c0_1, %c0_2] : memref<128x768xbf16, #tpu.memory_space<vmem>>, vector<128x128xbf16>
    %cst_3 = arith.constant dense<0.000000e+00> : vector<256x128xf32>
    %4 = tpu.matmul %1, %3, %cst_3 {dimension_numbers = #tpu.dot_dimension_numbers<[1], [0], [0], [1], [0, 0, 1, 1], [], []>} : vector<256x128xbf16>, vector<128x128xbf16>, vector<256x128xf32> -> vector<256x128xf32>
    %c0_4 = arith.constant 0 : index
    %c0_5 = arith.constant 0 : index
    %5 = vector.load %arg3[%c0_4, %c0_5] : memref<1x768xf32, #tpu.memory_space<vmem>>, vector<1x128xf32>
    %6 = vector.broadcast %5 : vector<1x128xf32> to vector<256x128xf32>
    %7 = arith.addf %4, %6 : vector<256x128xf32>
    %cst_6 = arith.constant 1.702000e+00 : f32
    %8 = vector.broadcast %cst_6 : f32 to vector<256x128xf32>
    %9 = arith.mulf %8, %7 : vector<256x128xf32>
    %10 = arith.negf %9 : vector<256x128xf32>
    %11 = math.exp %10 : vector<256x128xf32>
    %cst_7 = arith.constant 1.000000e+00 : f32
    %12 = vector.broadcast %cst_7 : f32 to vector<256x128xf32>
    %13 = arith.addf %12, %11 : vector<256x128xf32>
    %14 = arith.divf %12, %13 : vector<256x128xf32>
    %15 = arith.mulf %7, %14 : vector<256x128xf32>
    %16 = arith.truncf %15 : vector<256x128xf32> to vector<256x128xbf16>
    %c0_8 = arith.constant 0 : index
    %c0_9 = arith.constant 0 : index
    %17 = vector.load %arg4[%c0_8, %c0_9] : memref<768x128xbf16, #tpu.memory_space<vmem>>, vector<128x128xbf16>
    %cst_10 = arith.constant dense<0.000000e+00> : vector<256x128xf32>
    %18 = tpu.matmul %16, %17, %cst_10 {dimension_numbers = #tpu.dot_dimension_numbers<[1], [0], [0], [1], [0, 0, 1, 1], [], []>} : vector<256x128xbf16>, vector<128x128xbf16>, vector<256x128xf32> -> vector<256x128xf32>
    %19 = arith.addf %2, %18 : vector<256x128xf32>
    %c0_11 = arith.constant 0 : index
    %c128 = arith.constant 128 : index
    %20 = vector.load %arg2[%c0_11, %c128] : memref<128x768xbf16, #tpu.memory_space<vmem>>, vector<128x128xbf16>
    %cst_12 = arith.constant dense<0.000000e+00> : vector<256x128xf32>
    %21 = tpu.matmul %1, %20, %cst_12 {dimension_numbers = #tpu.dot_dimension_numbers<[1], [0], [0], [1], [0, 0, 1, 1], [], []>} : vector<256x128xbf16>, vector<128x128xbf16>, vector<256x128xf32> -> vector<256x128xf32>
    %c0_13 = arith.constant 0 : index
    %c128_14 = arith.constant 128 : index
    %22 = vector.load %arg3[%c0_13, %c128_14] : memref<1x768xf32, #tpu.memory_space<vmem>>, vector<1x128xf32>
    %23 = vector.broadcast %22 : vector<1x128xf32> to vector<256x128xf32>
    %24 = arith.addf %21, %23 : vector<256x128xf32>
    %cst_15 = arith.constant 1.702000e+00 : f32
    %25 = vector.broadcast %cst_15 : f32 to vector<256x128xf32>
    %26 = arith.mulf %25, %24 : vector<256x128xf32>
    %27 = arith.negf %26 : vector<256x128xf32>
    %28 = math.exp %27 : vector<256x128xf32>
    %cst_16 = arith.constant 1.000000e+00 : f32
    %29 = vector.broadcast %cst_16 : f32 to vector<256x128xf32>
    %30 = arith.addf %29, %28 : vector<256x128xf32>
    %31 = arith.divf %29, %30 : vector<256x128xf32>
    %32 = arith.mulf %24, %31 : vector<256x128xf32>
    %33 = arith.truncf %32 : vector<256x128xf32> to vector<256x128xbf16>
    %c128_17 = arith.constant 128 : index
    %c0_18 = arith.constant 0 : index
    %34 = vector.load %arg4[%c128_17, %c0_18] : memref<768x128xbf16, #tpu.memory_space<vmem>>, vector<128x128xbf16>
    %cst_19 = arith.constant dense<0.000000e+00> : vector<256x128xf32>
    %35 = tpu.matmul %33, %34, %cst_19 {dimension_numbers = #tpu.dot_dimension_numbers<[1], [0], [0], [1], [0, 0, 1, 1], [], []>} : vector<256x128xbf16>, vector<128x128xbf16>, vector<256x128xf32> -> vector<256x128xf32>
    %36 = arith.addf %19, %35 : vector<256x128xf32>
    %c0_20 = arith.constant 0 : index
    %c256 = arith.constant 256 : index
    %37 = vector.load %arg2[%c0_20, %c256] : memref<128x768xbf16, #tpu.memory_space<vmem>>, vector<128x128xbf16>
    %cst_21 = arith.constant dense<0.000000e+00> : vector<256x128xf32>
    %38 = tpu.matmul %1, %37, %cst_21 {dimension_numbers = #tpu.dot_dimension_numbers<[1], [0], [0], [1], [0, 0, 1, 1], [], []>} : vector<256x128xbf16>, vector<128x128xbf16>, vector<256x128xf32> -> vector<256x128xf32>
    %c0_22 = arith.constant 0 : index
    %c256_23 = arith.constant 256 : index
    %39 = vector.load %arg3[%c0_22, %c256_23] : memref<1x768xf32, #tpu.memory_space<vmem>>, vector<1x128xf32>
    %40 = vector.broadcast %39 : vector<1x128xf32> to vector<256x128xf32>
    %41 = arith.addf %38, %40 : vector<256x128xf32>
    %cst_24 = arith.constant 1.702000e+00 : f32
    %42 = vector.broadcast %cst_24 : f32 to vector<256x128xf32>
    %43 = arith.mulf %42, %41 : vector<256x128xf32>
    %44 = arith.negf %43 : vector<256x128xf32>
    %45 = math.exp %44 : vector<256x128xf32>
    %cst_25 = arith.constant 1.000000e+00 : f32
    %46 = vector.broadcast %cst_25 : f32 to vector<256x128xf32>
    %47 = arith.addf %46, %45 : vector<256x128xf32>
    %48 = arith.divf %46, %47 : vector<256x128xf32>
    %49 = arith.mulf %41, %48 : vector<256x128xf32>
    %50 = arith.truncf %49 : vector<256x128xf32> to vector<256x128xbf16>
    %c256_26 = arith.constant 256 : index
    %c0_27 = arith.constant 0 : index
    %51 = vector.load %arg4[%c256_26, %c0_27] : memref<768x128xbf16, #tpu.memory_space<vmem>>, vector<128x128xbf16>
    %cst_28 = arith.constant dense<0.000000e+00> : vector<256x128xf32>
    %52 = tpu.matmul %50, %51, %cst_28 {dimension_numbers = #tpu.dot_dimension_numbers<[1], [0], [0], [1], [0, 0, 1, 1], [], []>} : vector<256x128xbf16>, vector<128x128xbf16>, vector<256x128xf32> -> vector<256x128xf32>
    %53 = arith.addf %36, %52 : vector<256x128xf32>
    %c0_29 = arith.constant 0 : index
    %c384 = arith.constant 384 : index
    %54 = vector.load %arg2[%c0_29, %c384] : memref<128x768xbf16, #tpu.memory_space<vmem>>, vector<128x128xbf16>
    %cst_30 = arith.constant dense<0.000000e+00> : vector<256x128xf32>
    %55 = tpu.matmul %1, %54, %cst_30 {dimension_numbers = #tpu.dot_dimension_numbers<[1], [0], [0], [1], [0, 0, 1, 1], [], []>} : vector<256x128xbf16>, vector<128x128xbf16>, vector<256x128xf32> -> vector<256x128xf32>
    %c0_31 = arith.constant 0 : index
    %c384_32 = arith.constant 384 : index
    %56 = vector.load %arg3[%c0_31, %c384_32] : memref<1x768xf32, #tpu.memory_space<vmem>>, vector<1x128xf32>
    %57 = vector.broadcast %56 : vector<1x128xf32> to vector<256x128xf32>
    %58 = arith.addf %55, %57 : vector<256x128xf32>
    %cst_33 = arith.constant 1.702000e+00 : f32
    %59 = vector.broadcast %cst_33 : f32 to vector<256x128xf32>
    %60 = arith.mulf %59, %58 : vector<256x128xf32>
    %61 = arith.negf %60 : vector<256x128xf32>
    %62 = math.exp %61 : vector<256x128xf32>
    %cst_34 = arith.constant 1.000000e+00 : f32
    %63 = vector.broadcast %cst_34 : f32 to vector<256x128xf32>
    %64 = arith.addf %63, %62 : vector<256x128xf32>
    %65 = arith.divf %63, %64 : vector<256x128xf32>
    %66 = arith.mulf %58, %65 : vector<256x128xf32>
    %67 = arith.truncf %66 : vector<256x128xf32> to vector<256x128xbf16>
    %c384_35 = arith.constant 384 : index
    %c0_36 = arith.constant 0 : index
    %68 = vector.load %arg4[%c384_35, %c0_36] : memref<768x128xbf16, #tpu.memory_space<vmem>>, vector<128x128xbf16>
    %cst_37 = arith.constant dense<0.000000e+00> : vector<256x128xf32>
    %69 = tpu.matmul %67, %68, %cst_37 {dimension_numbers = #tpu.dot_dimension_numbers<[1], [0], [0], [1], [0, 0, 1, 1], [], []>} : vector<256x128xbf16>, vector<128x128xbf16>, vector<256x128xf32> -> vector<256x128xf32>
    %70 = arith.addf %53, %69 : vector<256x128xf32>
    %c0_38 = arith.constant 0 : index
    %c512 = arith.constant 512 : index
    %71 = vector.load %arg2[%c0_38, %c512] : memref<128x768xbf16, #tpu.memory_space<vmem>>, vector<128x128xbf16>
    %cst_39 = arith.constant dense<0.000000e+00> : vector<256x128xf32>
    %72 = tpu.matmul %1, %71, %cst_39 {dimension_numbers = #tpu.dot_dimension_numbers<[1], [0], [0], [1], [0, 0, 1, 1], [], []>} : vector<256x128xbf16>, vector<128x128xbf16>, vector<256x128xf32> -> vector<256x128xf32>
    %c0_40 = arith.constant 0 : index
    %c512_41 = arith.constant 512 : index
    %73 = vector.load %arg3[%c0_40, %c512_41] : memref<1x768xf32, #tpu.memory_space<vmem>>, vector<1x128xf32>
    %74 = vector.broadcast %73 : vector<1x128xf32> to vector<256x128xf32>
    %75 = arith.addf %72, %74 : vector<256x128xf32>
    %cst_42 = arith.constant 1.702000e+00 : f32
    %76 = vector.broadcast %cst_42 : f32 to vector<256x128xf32>
    %77 = arith.mulf %76, %75 : vector<256x128xf32>
    %78 = arith.negf %77 : vector<256x128xf32>
    %79 = math.exp %78 : vector<256x128xf32>
    %cst_43 = arith.constant 1.000000e+00 : f32
    %80 = vector.broadcast %cst_43 : f32 to vector<256x128xf32>
    %81 = arith.addf %80, %79 : vector<256x128xf32>
    %82 = arith.divf %80, %81 : vector<256x128xf32>
    %83 = arith.mulf %75, %82 : vector<256x128xf32>
    %84 = arith.truncf %83 : vector<256x128xf32> to vector<256x128xbf16>
    %c512_44 = arith.constant 512 : index
    %c0_45 = arith.constant 0 : index
    %85 = vector.load %arg4[%c512_44, %c0_45] : memref<768x128xbf16, #tpu.memory_space<vmem>>, vector<128x128xbf16>
    %cst_46 = arith.constant dense<0.000000e+00> : vector<256x128xf32>
    %86 = tpu.matmul %84, %85, %cst_46 {dimension_numbers = #tpu.dot_dimension_numbers<[1], [0], [0], [1], [0, 0, 1, 1], [], []>} : vector<256x128xbf16>, vector<128x128xbf16>, vector<256x128xf32> -> vector<256x128xf32>
    %87 = arith.addf %70, %86 : vector<256x128xf32>
    %c0_47 = arith.constant 0 : index
    %c640 = arith.constant 640 : index
    %88 = vector.load %arg2[%c0_47, %c640] : memref<128x768xbf16, #tpu.memory_space<vmem>>, vector<128x128xbf16>
    %cst_48 = arith.constant dense<0.000000e+00> : vector<256x128xf32>
    %89 = tpu.matmul %1, %88, %cst_48 {dimension_numbers = #tpu.dot_dimension_numbers<[1], [0], [0], [1], [0, 0, 1, 1], [], []>} : vector<256x128xbf16>, vector<128x128xbf16>, vector<256x128xf32> -> vector<256x128xf32>
    %c0_49 = arith.constant 0 : index
    %c640_50 = arith.constant 640 : index
    %90 = vector.load %arg3[%c0_49, %c640_50] : memref<1x768xf32, #tpu.memory_space<vmem>>, vector<1x128xf32>
    %91 = vector.broadcast %90 : vector<1x128xf32> to vector<256x128xf32>
    %92 = arith.addf %89, %91 : vector<256x128xf32>
    %cst_51 = arith.constant 1.702000e+00 : f32
    %93 = vector.broadcast %cst_51 : f32 to vector<256x128xf32>
    %94 = arith.mulf %93, %92 : vector<256x128xf32>
    %95 = arith.negf %94 : vector<256x128xf32>
    %96 = math.exp %95 : vector<256x128xf32>
    %cst_52 = arith.constant 1.000000e+00 : f32
    %97 = vector.broadcast %cst_52 : f32 to vector<256x128xf32>
    %98 = arith.addf %97, %96 : vector<256x128xf32>
    %99 = arith.divf %97, %98 : vector<256x128xf32>
    %100 = arith.mulf %92, %99 : vector<256x128xf32>
    %101 = arith.truncf %100 : vector<256x128xf32> to vector<256x128xbf16>
    %c640_53 = arith.constant 640 : index
    %c0_54 = arith.constant 0 : index
    %102 = vector.load %arg4[%c640_53, %c0_54] : memref<768x128xbf16, #tpu.memory_space<vmem>>, vector<128x128xbf16>
    %cst_55 = arith.constant dense<0.000000e+00> : vector<256x128xf32>
    %103 = tpu.matmul %101, %102, %cst_55 {dimension_numbers = #tpu.dot_dimension_numbers<[1], [0], [0], [1], [0, 0, 1, 1], [], []>} : vector<256x128xbf16>, vector<128x128xbf16>, vector<256x128xf32> -> vector<256x128xf32>
    %104 = arith.addf %87, %103 : vector<256x128xf32>
    %c0_56 = arith.constant 0 : index
    %c0_57 = arith.constant 0 : index
    %105 = vector.load %arg5[%c0_56, %c0_57] : memref<1x128xf32, #tpu.memory_space<vmem>>, vector<1x128xf32>
    %106 = vector.broadcast %105 : vector<1x128xf32> to vector<256x128xf32>
    %107 = arith.addf %104, %106 : vector<256x128xf32>
    %c0_58 = arith.constant 0 : index
    %c0_59 = arith.constant 0 : index
    %108 = vector.load %arg6[%c0_58, %c0_59] : memref<256x128xf32, #tpu.memory_space<vmem>>, vector<256x128xf32>
    tpu.vector_store %arg6[%c0_58, %c0_59], %107 {strides = array<i32>} : memref<256x128xf32, #tpu.memory_space<vmem>>, vector<256x128xf32>,
    return
  }
  func.func @transform_0(%arg0: i32) -> (i32, i32) {
    %c0_i32 = arith.constant 0 : i32
    %c0_i32_0 = arith.constant 0 : i32
    return %arg0, %c0_i32 : i32, i32
  }
  func.func @transform_1(%arg0: i32) -> (i32, i32) {
    %c0_i32 = arith.constant 0 : i32
    %c0_i32_0 = arith.constant 0 : i32
    %c0_i32_1 = arith.constant 0 : i32
    return %c0_i32, %c0_i32_0 : i32, i32
  }
  func.func @transform_2(%arg0: i32) -> (i32, i32) {
    %c0_i32 = arith.constant 0 : i32
    %c0_i32_0 = arith.constant 0 : i32
    %c0_i32_1 = arith.constant 0 : i32
    return %c0_i32, %c0_i32_0 : i32, i32
  }
  func.func @transform_3(%arg0: i32) -> (i32, i32) {
    %c0_i32 = arith.constant 0 : i32
    %c0_i32_0 = arith.constant 0 : i32
    %c0_i32_1 = arith.constant 0 : i32
    return %c0_i32, %c0_i32_0 : i32, i32
  }
  func.func @transform_4(%arg0: i32) -> (i32, i32) {
    %c0_i32 = arith.constant 0 : i32
    %c0_i32_0 = arith.constant 0 : i32
    %c0_i32_1 = arith.constant 0 : i32
    return %c0_i32, %c0_i32_0 : i32, i32
  }
  func.func @transform_5(%arg0: i32) -> (i32, i32) {
    %c0_i32 = arith.constant 0 : i32
    %c0_i32_0 = arith.constant 0 : i32
    return %arg0, %c0_i32 : i32, i32
  }
}

</mosaic_0001>

<llo_original>
// kernel: speech_model_forward.1
$region0: #{speech_model_forward.1}
  #allocation0 [shape = 'u32[]', space=smem, size = 0x4, offset = 0x4, fixed_abs, tag = 'smem constant byte address 0x4 - core index']
  #allocation1 [shape = 'u32[144,128]{1,0:T(1,128)}', space=vmem, size = 0x12000, scoped, tag = 'internal scratch']
  %s0 = inlined_call_operand.vmem [shape: f32[512,128], index: 0, kind: input, shape index: {}]
  %s1 = inlined_call_operand.vmem [shape: bf16[128,768], index: 1, kind: input, shape index: {}]
  %s2 = inlined_call_operand.vmem [shape: f32[1,768], index: 2, kind: input, shape index: {}]
  %s3 = inlined_call_operand.vmem [shape: bf16[768,128], index: 3, kind: input, shape index: {}]
  %s4 = inlined_call_operand.vmem [shape: f32[1,128], index: 4, kind: input, shape index: {}]
  %s5 = inlined_call_operand.vmem [shape: f32[512,128], index: 5, kind: output, shape index: {}]
  %s6 = sld [smem:[#allocation0]]
  $region53: #{speech_model_forward.1} parent=0
    _
  %s8 = ssub.s32 1, %s6
  %s9 = scalar_select 0, %s8, %s6
  loop: start=0, step=1, limit=4
  $region2: #{speech_model_forward.1} parent=0 // loop_pre_header
    _
  $region3: #{speech_model_forward.1} parent=0 // loop_header
    %s11 = sphi 0, %s15
    %p12 = scmp.ge.s32.totalorder %s11, 4
    %s21 = sphi 0, %s23
    %s24 = sphi 0, %s21
    %s25 = sphi 0, %s24
    %s41 = sphi 0, %s25
    %s45 = sphi 0, %s45
    %s47 = sphi 0, %s45
    %s48 = sphi 0, %s47
    %s62 = sphi 0, %s48
    %s66 = sphi 0, %s66
    %s68 = sphi 0, %s66
    %s69 = sphi 0, %s68
    %s83 = sphi 0, %s69
    %s87 = sphi 0, %s87
    %s89 = sphi 0, %s87
    %s90 = sphi 0, %s89
    %s104 = sphi 0, %s90
    %s108 = sphi 0, %s108
    %s110 = sphi 0, %s108
    %s111 = sphi 0, %s110
    %s125 = sphi 0, %s111
    %s131 = sphi 0, %s133
    %s134 = sphi 0, %s131
    %s135 = sphi 0, %s134
    %s151 = sphi 0, %s135
  $region4: #{speech_model_forward.1} parent=0 // loop_header_branch
    %14 = sbr.rel (%p12) target = $region8
  $region5: #{speech_model_forward.1} parent=0 // loop_body
    %s16 = ssub.s32 %s11, 1
    %s17 = ssub.s32 %s11, 2
    %s18 = sadd.s32 %s11, 1
    %s19 = ssub.s32 %s11, %s18
    %p20 = scmp.eq.s32.totalorder %s19, 0
    %s22 = sadd.s32 %s21, 1
    %s23 = scalar_select %p20, %s21, %s22
    %p26 = pneg %p20
    %p27 = scmp.eq.s32.totalorder %s11, 1
    %p28 = por %p26, %p27
    %p29 = scmp.ne.s32.totalorder %s21, %s24
    %p30 = scmp.eq.s32.totalorder %s11, 0
    %p31 = por %p29, %p30
    %p32 = scmp.ne.s32.totalorder %s21, %s24
    %p33 = scmp.eq.s32.totalorder %s16, 1
    %p34 = por %p32, %p33
    %p35 = scmp.ne.s32.totalorder %s24, %s25
    %p36 = scmp.eq.s32.totalorder %s16, 0
    %p37 = por %p35, %p36
    %p38 = scmp.ne.s32.totalorder %s24, %s25
    %p39 = scmp.eq.s32.totalorder %s17, 1
    %p40 = por %p38, %p39
    %p42 = scmp.ne.s32.totalorder %s25, %s41
    %p43 = scmp.eq.s32.totalorder %s17, 0
    %p44 = por %p42, %p43
    %s46 = sadd.s32 %s45, 1
    %p49 = scmp.eq.s32.totalorder %s11, 1
    %p50 = scmp.ne.s32.totalorder %s45, %s47
    %p51 = scmp.eq.s32.totalorder %s11, 0
    %p52 = por %p50, %p51
    %p53 = scmp.ne.s32.totalorder %s45, %s47
    %p54 = scmp.eq.s32.totalorder %s16, 1
    %p55 = por %p53, %p54
    %p56 = scmp.ne.s32.totalorder %s47, %s48
    %p57 = scmp.eq.s32.totalorder %s16, 0
    %p58 = por %p56, %p57
    %p59 = scmp.ne.s32.totalorder %s47, %s48
    %p60 = scmp.eq.s32.totalorder %s17, 1
    %p61 = por %p59, %p60
    %p63 = scmp.ne.s32.totalorder %s48, %s62
    %p64 = scmp.eq.s32.totalorder %s17, 0
    %p65 = por %p63, %p64
    %s67 = sadd.s32 %s66, 1
    %p70 = scmp.eq.s32.totalorder %s11, 1
    %p71 = scmp.ne.s32.totalorder %s66, %s68
    %p72 = scmp.eq.s32.totalorder %s11, 0
    %p73 = por %p71, %p72
    %p74 = scmp.ne.s32.totalorder %s66, %s68
    %p75 = scmp.eq.s32.totalorder %s16, 1
    %p76 = por %p74, %p75
    %p77 = scmp.ne.s32.totalorder %s68, %s69
    %p78 = scmp.eq.s32.totalorder %s16, 0
    %p79 = por %p77, %p78
    %p80 = scmp.ne.s32.totalorder %s68, %s69
    %p81 = scmp.eq.s32.totalorder %s17, 1
    %p82 = por %p80, %p81
    %p84 = scmp.ne.s32.totalorder %s69, %s83
    %p85 = scmp.eq.s32.totalorder %s17, 0
    %p86 = por %p84, %p85
    %s88 = sadd.s32 %s87, 1
    %p91 = scmp.eq.s32.totalorder %s11, 1
    %p92 = scmp.ne.s32.totalorder %s87, %s89
    %p93 = scmp.eq.s32.totalorder %s11, 0
    %p94 = por %p92, %p93
    %p95 = scmp.ne.s32.totalorder %s87, %s89
    %p96 = scmp.eq.s32.totalorder %s16, 1
    %p97 = por %p95, %p96
    %p98 = scmp.ne.s32.totalorder %s89, %s90
    %p99 = scmp.eq.s32.totalorder %s16, 0
    %p100 = por %p98, %p99
    %p101 = scmp.ne.s32.totalorder %s89, %s90
    %p102 = scmp.eq.s32.totalorder %s17, 1
    %p103 = por %p101, %p102
    %p105 = scmp.ne.s32.totalorder %s90, %s104
    %p106 = scmp.eq.s32.totalorder %s17, 0
    %p107 = por %p105, %p106
    %s109 = sadd.s32 %s108, 1
    %p112 = scmp.eq.s32.totalorder %s11, 1
    %p113 = scmp.ne.s32.totalorder %s108, %s110
    %p114 = scmp.eq.s32.totalorder %s11, 0
    %p115 = por %p113, %p114
    %p116 = scmp.ne.s32.totalorder %s108, %s110
    %p117 = scmp.eq.s32.totalorder %s16, 1
    %p118 = por %p116, %p117
    %p119 = scmp.ne.s32.totalorder %s110, %s111
    %p120 = scmp.eq.s32.totalorder %s16, 0
    %p121 = por %p119, %p120
    %p122 = scmp.ne.s32.totalorder %s110, %s111
    %p123 = scmp.eq.s32.totalorder %s17, 1
    %p124 = por %p122, %p123
    %p126 = scmp.ne.s32.totalorder %s111, %s125
    %p127 = scmp.eq.s32.totalorder %s17, 0
    %p128 = por %p126, %p127
    %s129 = ssub.s32 %s11, %s18
    %p130 = scmp.eq.s32.totalorder %s129, 0
    %s132 = sadd.s32 %s131, 1
    %s133 = scalar_select %p130, %s131, %s132
    %p136 = pneg %p130
    %p137 = scmp.eq.s32.totalorder %s11, 1
    %p138 = por %p136, %p137
    %p139 = scmp.ne.s32.totalorder %s131, %s134
    %p140 = scmp.eq.s32.totalorder %s11, 0
    %p141 = por %p139, %p140
    %p142 = scmp.ne.s32.totalorder %s131, %s134
    %p143 = scmp.eq.s32.totalorder %s16, 1
    %p144 = por %p142, %p143
    %p145 = scmp.ne.s32.totalorder %s134, %s135
    %p146 = scmp.eq.s32.totalorder %s16, 0
    %p147 = por %p145, %p146
    %p148 = scmp.ne.s32.totalorder %s134, %s135
    %p149 = scmp.eq.s32.totalorder %s17, 1
    %p150 = por %p148, %p149
    %p152 = scmp.ne.s32.totalorder %s135, %s151
    %p153 = scmp.eq.s32.totalorder %s17, 0
    %p154 = por %p152, %p153
    %p155 = scmp.le.s32.totalorder 1, %s11
    %p156 = scmp.lt.s32.totalorder %s11, 3
    %p157 = pnand %p155, %p156
    %p158 = pneg %p157
    // Predicated region
    $region9: #{speech_model_forward.1} parent=5 // pred_check
      _
    $region10: #{speech_model_forward.1} parent=5 // pred_check_branch
      %160 = sbr.rel (%p157) target = $region12
    $region11: #{speech_model_forward.1} parent=5 // pred_region
      %s161 = ssub.s32 %s11, 1
      // Predicated region
      $region13: #{speech_model_forward.1} parent=11 // pred_check
        %p162 = pneg %p58
      $region14: #{speech_model_forward.1} parent=11 // pred_check_branch
        %164 = sbr.rel (%p162) target = $region16
      $region15: #{speech_model_forward.1} parent=11 // pred_region
        _
      $region16: #{speech_model_forward.1} parent=11 // pred_fallthru
        _
      // Predicated region
      $region17: #{speech_model_forward.1} parent=11 // pred_check
        %p165 = pneg %p79
      $region18: #{speech_model_forward.1} parent=11 // pred_check_branch
        %167 = sbr.rel (%p165) target = $region20
      $region19: #{speech_model_forward.1} parent=11 // pred_region
        _
      $region20: #{speech_model_forward.1} parent=11 // pred_fallthru
        _
      // Predicated region
      $region21: #{speech_model_forward.1} parent=11 // pred_check
        %p168 = pneg %p100
      $region22: #{speech_model_forward.1} parent=11 // pred_check_branch
        %170 = sbr.rel (%p168) target = $region24
      $region23: #{speech_model_forward.1} parent=11 // pred_region
        _
      $region24: #{speech_model_forward.1} parent=11 // pred_fallthru
        _
      // Predicated region
      $region25: #{speech_model_forward.1} parent=11 // pred_check
        %p171 = pneg %p121
      $region26: #{speech_model_forward.1} parent=11 // pred_check_branch
        %173 = sbr.rel (%p171) target = $region28
      $region27: #{speech_model_forward.1} parent=11 // pred_region
        _
      $region28: #{speech_model_forward.1} parent=11 // pred_fallthru
        _
    $region12: #{speech_model_forward.1} parent=5 // pred_fallthru
      _
    %p174 = scmp.lt.s32.totalorder %s11, 2
    // Predicated region
    $region29: #{speech_model_forward.1} parent=5 // pred_check
      %p175 = pneg %p174
    $region30: #{speech_model_forward.1} parent=5 // pred_check_branch
      %177 = sbr.rel (%p175) target = $region32
    $region31: #{speech_model_forward.1} parent=5 // pred_region
      // Predicated region
      $region33: #{speech_model_forward.1} parent=31 // pred_check
        %p178 = pneg %p31
      $region34: #{speech_model_forward.1} parent=31 // pred_check_branch
        %180 = sbr.rel (%p178) target = $region36
      $region35: #{speech_model_forward.1} parent=31 // pred_region
        %s181 = smul.u32 32, %s11
        %p182 = scmp.lt.s32.totalorder %s181, 63
        %s183 = scalar_select %p182, %s181, 63
        %s184 = smul.addr %s183, 8
        %s185 = scalar_lea.vmem %s0, %s184
        %s186 = smul.u32 32, %s11
      $region36: #{speech_model_forward.1} parent=31 // pred_fallthru
        _
    $region32: #{speech_model_forward.1} parent=5 // pred_fallthru
      _
    %p187 = scmp.le.s32.totalorder 1, %s11
    %p188 = scmp.lt.s32.totalorder %s11, 3
    %p189 = pnand %p187, %p188
    %p190 = pneg %p189
    // Predicated region
    $region37: #{speech_model_forward.1} parent=5 // pred_check
      _
    $region38: #{speech_model_forward.1} parent=5 // pred_check_branch
      %192 = sbr.rel (%p189) target = $region40
    $region39: #{speech_model_forward.1} parent=5 // pred_region
      %s193 = ssub.s32 %s11, 1
      %s194 = smul.u32 32, %s16
      %p195 = scmp.lt.s32.totalorder %s194, 63
      %s196 = scalar_select %p195, %s194, 63
      %s197 = smul.addr %s196, 8
      %s198 = scalar_lea.vmem %s0, %s197
      %p199 = pneg %p37
      %p200 = pneg %p34
      %p201 = pneg %p58
      %p202 = pneg %p55
      %p203 = pneg %p79
      %p204 = pneg %p76
      %p205 = pneg %p100
      %p206 = pneg %p97
      %p207 = pneg %p121
      %p208 = pneg %p118
      %p209 = pneg %p147
      %p210 = pneg %p144
      %s211 = smul.u32 32, %s16
      %p212 = scmp.lt.s32.totalorder %s211, 63
      %s213 = scalar_select %p212, %s211, 63
      %s214 = smul.addr %s213, 8
      %s215 = scalar_lea.vmem %s5, %s214
      %s216 = smul.u32 32, %s16
      %p217 = scmp.lt.s32.totalorder %s216, 63
      %s218 = scalar_select %p217, %s216, 63
      %s219 = smul.addr %s218, 8
      %s220 = scalar_lea.vmem %s0, %s219
      %s221 = smul.u32 32, %s16
      %s222 = smul.u32 32, %s16
      %p223 = scmp.lt.s32.totalorder %s222, 63
      %s224 = scalar_select %p223, %s222, 63
      %s225 = smul.addr %s224, 8
      %s226 = scalar_lea.vmem %s5, %s225
      %s227 = smul.u32 32, %s16
      %v229 = vld [vmem:[%s220] sm:$0xff]
      %v230 = vld [vmem:[%s220 + $0x8] sm:$0xff]
      %v231 = vld [vmem:[%s220 + $0x10] sm:$0xff]
      %v232 = vld [vmem:[%s220 + $0x18] sm:$0xff]
      %v233 = vld [vmem:[%s220 + $0x20] sm:$0xff]
      %v234 = vld [vmem:[%s220 + $0x28] sm:$0xff]
      %v235 = vld [vmem:[%s220 + $0x30] sm:$0xff]
      %v236 = vld [vmem:[%s220 + $0x38] sm:$0xff]
      %v237 = vld [vmem:[%s220 + $0x40] sm:$0xff]
      %v238 = vld [vmem:[%s220 + $0x48] sm:$0xff]
      %v239 = vld [vmem:[%s220 + $0x50] sm:$0xff]
      %v240 = vld [vmem:[%s220 + $0x58] sm:$0xff]
      %v241 = vld [vmem:[%s220 + $0x60] sm:$0xff]
      %v242 = vld [vmem:[%s220 + $0x68] sm:$0xff]
      %v243 = vld [vmem:[%s220 + $0x70] sm:$0xff]
      %v244 = vld [vmem:[%s220 + $0x78] sm:$0xff]
      %v245 = vld [vmem:[%s220 + $0x80] sm:$0xff]
      %v246 = vld [vmem:[%s220 + $0x88] sm:$0xff]
      %v247 = vld [vmem:[%s220 + $0x90] sm:$0xff]
      %v248 = vld [vmem:[%s220 + $0x98] sm:$0xff]
      %v249 = vld [vmem:[%s220 + $0xa0] sm:$0xff]
      %v250 = vld [vmem:[%s220 + $0xa8] sm:$0xff]
      %v251 = vld [vmem:[%s220 + $0xb0] sm:$0xff]
      %v252 = vld [vmem:[%s220 + $0xb8] sm:$0xff]
      %v253 = vld [vmem:[%s220 + $0xc0] sm:$0xff]
      %v254 = vld [vmem:[%s220 + $0xc8] sm:$0xff]
      %v255 = vld [vmem:[%s220 + $0xd0] sm:$0xff]
      %v256 = vld [vmem:[%s220 + $0xd8] sm:$0xff]
      %v257 = vld [vmem:[%s220 + $0xe0] sm:$0xff]
      %v258 = vld [vmem:[%s220 + $0xe8] sm:$0xff]
      %v259 = vld [vmem:[%s220 + $0xf0] sm:$0xff]
      %v260 = vld [vmem:[%s220 + $0xf8] sm:$0xff]
      %v261 = vpack.c.bf16 %v230, %v229
      %v262 = vpack.c.bf16 %v232, %v231
      %v263 = vpack.c.bf16 %v234, %v233
      %v264 = vpack.c.bf16 %v236, %v235
      %v265 = vpack.c.bf16 %v238, %v237
      %v266 = vpack.c.bf16 %v240, %v239
      %v267 = vpack.c.bf16 %v242, %v241
      %v268 = vpack.c.bf16 %v244, %v243
      %v269 = vpack.c.bf16 %v246, %v245
      %v270 = vpack.c.bf16 %v248, %v247
      %v271 = vpack.c.bf16 %v250, %v249
      %v272 = vpack.c.bf16 %v252, %v251
      %v273 = vpack.c.bf16 %v254, %v253
      %v274 = vpack.c.bf16 %v256, %v255
      %v275 = vpack.c.bf16 %v258, %v257
      %v276 = vpack.c.bf16 %v260, %v259
      %v277 = vld [vmem:[%s1] sm:$0xf]
      %v278 = vld [vmem:[%s1 + $0x18] sm:$0xf]
      %v279 = vld [vmem:[%s1 + $0x30] sm:$0xf]
      %v280 = vld [vmem:[%s1 + $0x48] sm:$0xf]
      %v281 = vld [vmem:[%s1 + $0x60] sm:$0xf]
      %v282 = vld [vmem:[%s1 + $0x78] sm:$0xf]
      %v283 = vld [vmem:[%s1 + $0x90] sm:$0xf]
      %v284 = vld [vmem:[%s1 + $0xa8] sm:$0xf]
      %v285 = vld [vmem:[%s1 + $0xc0] sm:$0xf]
      %v286 = vld [vmem:[%s1 + $0xd8] sm:$0xf]
      %v287 = vld [vmem:[%s1 + $0xf0] sm:$0xf]
      %v288 = vld [vmem:[%s1 + $0x108] sm:$0xf]
      %v289 = vld [vmem:[%s1 + $0x120] sm:$0xf]
      %v290 = vld [vmem:[%s1 + $0x138] sm:$0xf]
      %v291 = vld [vmem:[%s1 + $0x150] sm:$0xf]
      %v292 = vld [vmem:[%s1 + $0x168] sm:$0xf]
      %v293 = vld [vmem:[%s2] sm:$0x1]
      %v295 = vlaneseq
      %v296 = vshrl.u32 %v295, 7
      %v297 = vsub.s32 0, %v296
      %v298 = vrot.slane %v293, %v297
      %v316 = vunpack.c.l.b16 %v277
      %v317 = vunpack.c.l.b16 %v278
      %v318 = vunpack.c.l.b16 %v279
      %v319 = vunpack.c.l.b16 %v280
      %v320 = vunpack.c.l.b16 %v281
      %v321 = vunpack.c.l.b16 %v282
      %v322 = vunpack.c.l.b16 %v283
      %v323 = vunpack.c.l.b16 %v284
      %v324 = vunpack.c.l.b16 %v285
      %v325 = vunpack.c.l.b16 %v286
      %v326 = vunpack.c.l.b16 %v287
      %v327 = vunpack.c.l.b16 %v288
      %v328 = vunpack.c.l.b16 %v289
      %v329 = vunpack.c.l.b16 %v290
      %v330 = vunpack.c.l.b16 %v291
      %v331 = vunpack.c.l.b16 %v292
      %v332 = vpack.c.b16 %v317, %v316
      %v333 = vpack.c.b16 %v319, %v318
      %v334 = vpack.c.b16 %v321, %v320
      %v335 = vpack.c.b16 %v323, %v322
      %v336 = vpack.c.b16 %v325, %v324
      %v337 = vpack.c.b16 %v327, %v326
      %v338 = vpack.c.b16 %v329, %v328
      %v339 = vpack.c.b16 %v331, %v330
      %348 = vmatprep.subr.bf16.mxu0 0
      %349 = vmatpush1.bf16.msra.mxu0 %v332
      %350 = vmatprep.subr.bf16.mxu0 0
      %351 = vmatpush1.bf16.msra.mxu0 %v333
      %352 = vmatprep.subr.bf16.mxu0 0
      %353 = vmatpush1.bf16.msra.mxu0 %v334
      %354 = vmatprep.subr.bf16.mxu0 0
      %355 = vmatpush1.bf16.msra.mxu0 %v335
      %356 = vmatprep.subr.bf16.mxu0 0
      %357 = vmatpush1.bf16.msra.mxu0 %v336
      %358 = vmatprep.subr.bf16.mxu0 0
      %359 = vmatpush1.bf16.msra.mxu0 %v337
      %360 = vmatprep.subr.bf16.mxu0 0
      %361 = vmatpush1.bf16.msra.mxu0 %v338
      %362 = vmatprep.subr.bf16.mxu0 0
      %363 = vmatpush1.bf16.msra.mxu0 %v339
      %364 = vmatprep.subr.bf16.mxu0 0
      %365 = vmatpush1.bf16.msra.mxu0 0
      %366 = vmatprep.subr.bf16.mxu0 0
      %367 = vmatpush1.bf16.msra.mxu0 0
      %368 = vmatprep.subr.bf16.mxu0 0
      %369 = vmatpush1.bf16.msra.mxu0 0
      %370 = vmatprep.subr.bf16.mxu0 0
      %371 = vmatpush1.bf16.msra.mxu0 0
      %372 = vmatprep.subr.bf16.mxu0 0
      %373 = vmatpush1.bf16.msra.mxu0 0
      %374 = vmatprep.subr.bf16.mxu0 0
      %375 = vmatpush1.bf16.msra.mxu0 0
      %376 = vmatprep.subr.bf16.mxu0 0
      %377 = vmatpush1.bf16.msra.mxu0 0
      %378 = vmatprep.subr.bf16.mxu0 0
      %379 = vmatpush1.bf16.msra.mxu0 0
      %380 = vmatprep.mubr.bf16.mxu0 0
      %381 = vmatmul.mubr.bf16.gmra.mrb[0].mxu0 %v261
      %v382 = vpop.f32.mrb[0].mxu0
      %v383 = vadd.f32 %v298, %v382
      %v384 = vpop.f32.mrb[0].mxu0
      %v385 = vpop.f32.mrb[0].mxu0
      %v386 = vadd.f32 %v298, %v385
      %v387 = vpop.f32.mrb[0].mxu0
      %388 = vmatprep.mubr.bf16.mxu0 0
      %389 = vmatmul.mubr.bf16.gmra.mrb[0].mxu0 %v262
      %v390 = vpop.f32.mrb[0].mxu0
      %v391 = vadd.f32 %v298, %v390
      %v392 = vpop.f32.mrb[0].mxu0
      %v393 = vpop.f32.mrb[0].mxu0
      %v394 = vadd.f32 %v298, %v393
      %v395 = vpop.f32.mrb[0].mxu0
      %396 = vmatprep.mubr.bf16.mxu0 0
      %397 = vmatmul.mubr.bf16.gmra.mrb[0].mxu0 %v263
      %v398 = vpop.f32.mrb[0].mxu0
      %v399 = vadd.f32 %v298, %v398
      %v400 = vpop.f32.mrb[0].mxu0
      %v401 = vpop.f32.mrb[0].mxu0
      %v402 = vadd.f32 %v298, %v401
      %v403 = vpop.f32.mrb[0].mxu0
      %404 = vmatprep.mubr.bf16.mxu0 0
      %405 = vmatmul.mubr.bf16.gmra.mrb[0].mxu0 %v264
      %v406 = vpop.f32.mrb[0].mxu0
      %v407 = vadd.f32 %v298, %v406
      %v408 = vpop.f32.mrb[0].mxu0
      %v409 = vpop.f32.mrb[0].mxu0
      %v410 = vadd.f32 %v298, %v409
      %v411 = vpop.f32.mrb[0].mxu0
      %412 = vmatprep.mubr.bf16.mxu0 0
      %413 = vmatmul.mubr.bf16.gmra.mrb[0].mxu0 %v265
      %v414 = vpop.f32.mrb[0].mxu0
      %v415 = vadd.f32 %v298, %v414
      %v416 = vpop.f32.mrb[0].mxu0
      %v417 = vpop.f32.mrb[0].mxu0
      %v418 = vadd.f32 %v298, %v417
      %v419 = vpop.f32.mrb[0].mxu0
      %420 = vmatprep.mubr.bf16.mxu0 0
      %421 = vmatmul.mubr.bf16.gmra.mrb[0].mxu0 %v266
      %v422 = vpop.f32.mrb[0].mxu0
      %v423 = vadd.f32 %v298, %v422
      %v424 = vpop.f32.mrb[0].mxu0
      %v425 = vpop.f32.mrb[0].mxu0
      %v426 = vadd.f32 %v298, %v425
      %v427 = vpop.f32.mrb[0].mxu0
      %428 = vmatprep.mubr.bf16.mxu0 0
      %429 = vmatmul.mubr.bf16.gmra.mrb[0].mxu0 %v267
      %v430 = vpop.f32.mrb[0].mxu0
      %v431 = vadd.f32 %v298, %v430
      %v432 = vpop.f32.mrb[0].mxu0
      %v433 = vpop.f32.mrb[0].mxu0
      %v434 = vadd.f32 %v298, %v433
      %v435 = vpop.f32.mrb[0].mxu0
      %436 = vmatprep.mubr.bf16.mxu0 0
      %437 = vmatmul.mubr.bf16.gmra.mrb[0].mxu0 %v268
      %v438 = vpop.f32.mrb[0].mxu0
      %v439 = vadd.f32 %v298, %v438
      %v440 = vpop.f32.mrb[0].mxu0
      %v441 = vpop.f32.mrb[0].mxu0
      %v442 = vadd.f32 %v298, %v441
      %v443 = vpop.f32.mrb[0].mxu0
      %444 = vmatprep.mubr.bf16.mxu0 0
      %445 = vmatmul.mubr.bf16.gmra.mrb[0].mxu0 %v269
      %v446 = vpop.f32.mrb[0].mxu0
      %v447 = vadd.f32 %v298, %v446
      %v448 = vpop.f32.mrb[0].mxu0
      %v449 = vpop.f32.mrb[0].mxu0
      %v450 = vadd.f32 %v298, %v449
      %v451 = vpop.f32.mrb[0].mxu0
      %452 = vmatprep.mubr.bf16.mxu0 0
      %453 = vmatmul.mubr.bf16.gmra.mrb[0].mxu0 %v270
      %v454 = vpop.f32.mrb[0].mxu0
      %v455 = vadd.f32 %v298, %v454
      %v456 = vpop.f32.mrb[0].mxu0
      %v457 = vpop.f32.mrb[0].mxu0
      %v458 = vadd.f32 %v298, %v457
      %v459 = vpop.f32.mrb[0].mxu0
      %460 = vmatprep.mubr.bf16.mxu0 0
      %461 = vmatmul.mubr.bf16.gmra.mrb[0].mxu0 %v271
      %v462 = vpop.f32.mrb[0].mxu0
      %v463 = vadd.f32 %v298, %v462
      %v464 = vpop.f32.mrb[0].mxu0
      %v465 = vpop.f32.mrb[0].mxu0
      %v466 = vadd.f32 %v298, %v465
      %v467 = vpop.f32.mrb[0].mxu0
      %468 = vmatprep.mubr.bf16.mxu0 0
      %469 = vmatmul.mubr.bf16.gmra.mrb[0].mxu0 %v272
      %v470 = vpop.f32.mrb[0].mxu0
      %v471 = vadd.f32 %v298, %v470
      %v472 = vpop.f32.mrb[0].mxu0
      %v473 = vpop.f32.mrb[0].mxu0
      %v474 = vadd.f32 %v298, %v473
      %v475 = vpop.f32.mrb[0].mxu0
      %476 = vmatprep.mubr.bf16.mxu0 0
      %477 = vmatmul.mubr.bf16.gmra.mrb[0].mxu0 %v273
      %v478 = vpop.f32.mrb[0].mxu0
      %v479 = vadd.f32 %v298, %v478
      %v480 = vpop.f32.mrb[0].mxu0
      %v481 = vpop.f32.mrb[0].mxu0
      %v482 = vadd.f32 %v298, %v481
      %v483 = vpop.f32.mrb[0].mxu0
      %484 = vmatprep.mubr.bf16.mxu0 0
      %485 = vmatmul.mubr.bf16.gmra.mrb[0].mxu0 %v274
      %v486 = vpop.f32.mrb[0].mxu0
      %v487 = vadd.f32 %v298, %v486
      %v488 = vpop.f32.mrb[0].mxu0
      %v489 = vpop.f32.mrb[0].mxu0
      %v490 = vadd.f32 %v298, %v489
      %v491 = vpop.f32.mrb[0].mxu0
      %492 = vmatprep.mubr.bf16.mxu0 0
      %493 = vmatmul.mubr.bf16.gmra.mrb[0].mxu0 %v275
      %v494 = vpop.f32.mrb[0].mxu0
      %v495 = vadd.f32 %v298, %v494
      %v496 = vpop.f32.mrb[0].mxu0
      %v497 = vpop.f32.mrb[0].mxu0
      %v498 = vadd.f32 %v298, %v497
      %v499 = vpop.f32.mrb[0].mxu0
      %500 = vmatprep.mubr.bf16.mxu0 0
      %501 = vmatmul.mubr.bf16.gmra.mrb[0].mxu0 %v276
      %v502 = vpop.f32.mrb[0].mxu0
      %v503 = vadd.f32 %v298, %v502
      %v504 = vpop.f32.mrb[0].mxu0
      %v505 = vpop.f32.mrb[0].mxu0
      %v506 = vadd.f32 %v298, %v505
      %v507 = vpop.f32.mrb[0].mxu0
      %508 = vdwg.mxu0
      %v509 = vmul.f32 %v383, 1.702
      %v510 = vmul.f32 %v386, 1.702
      %v511 = vmul.f32 %v391, 1.702
      %v512 = vmul.f32 %v394, 1.702
      %v513 = vmul.f32 %v399, 1.702
      %v514 = vmul.f32 %v402, 1.702
      %v515 = vmul.f32 %v407, 1.702
      %v516 = vmul.f32 %v410, 1.702
      %v517 = vmul.f32 %v415, 1.702
      %v518 = vmul.f32 %v418, 1.702
      %v519 = vmul.f32 %v423, 1.702
      %v520 = vmul.f32 %v426, 1.702
      %v521 = vmul.f32 %v431, 1.702
      %v522 = vmul.f32 %v434, 1.702
      %v523 = vmul.f32 %v439, 1.702
      %v524 = vmul.f32 %v442, 1.702
      %v525 = vmul.f32 %v447, 1.702
      %v526 = vmul.f32 %v450, 1.702
      %v527 = vmul.f32 %v455, 1.702
      %v528 = vmul.f32 %v458, 1.702
      %v529 = vmul.f32 %v463, 1.702
      %v530 = vmul.f32 %v466, 1.702
      %v531 = vmul.f32 %v471, 1.702
      %v532 = vmul.f32 %v474, 1.702
      %v533 = vmul.f32 %v479, 1.702
      %v534 = vmul.f32 %v482, 1.702
      %v535 = vmul.f32 %v487, 1.702
      %v536 = vmul.f32 %v490, 1.702
      %v537 = vmul.f32 %v495, 1.702
      %v538 = vmul.f32 %v498, 1.702
      %v539 = vmul.f32 %v503, 1.702
      %v540 = vmul.f32 %v506, 1.702
      %v541 = vxor.u32 %v509, 2147483648
      %v542 = vxor.u32 %v510, 2147483648
      %v543 = vxor.u32 %v511, 2147483648
      %v544 = vxor.u32 %v512, 2147483648
      %v545 = vxor.u32 %v513, 2147483648
      %v546 = vxor.u32 %v514, 2147483648
      %v547 = vxor.u32 %v515, 2147483648
      %v548 = vxor.u32 %v516, 2147483648
      %v549 = vxor.u32 %v517, 2147483648
      %v550 = vxor.u32 %v518, 2147483648
      %v551 = vxor.u32 %v519, 2147483648
      %v552 = vxor.u32 %v520, 2147483648
      %v553 = vxor.u32 %v521, 2147483648
      %v554 = vxor.u32 %v522, 2147483648
      %v555 = vxor.u32 %v523, 2147483648
      %v556 = vxor.u32 %v524, 2147483648
      %v557 = vxor.u32 %v525, 2147483648
      %v558 = vxor.u32 %v526, 2147483648
      %v559 = vxor.u32 %v527, 2147483648
      %v560 = vxor.u32 %v528, 2147483648
      %v561 = vxor.u32 %v529, 2147483648
      %v562 = vxor.u32 %v530, 2147483648
      %v563 = vxor.u32 %v531, 2147483648
      %v564 = vxor.u32 %v532, 2147483648
      %v565 = vxor.u32 %v533, 2147483648
      %v566 = vxor.u32 %v534, 2147483648
      %v567 = vxor.u32 %v535, 2147483648
      %v568 = vxor.u32 %v536, 2147483648
      %v569 = vxor.u32 %v537, 2147483648
      %v570 = vxor.u32 %v538, 2147483648
      %v571 = vxor.u32 %v539, 2147483648
      %v572 = vxor.u32 %v540, 2147483648
      %v573 = vmul.f32 %v541, 1.442695
      %v574 = vpow.pop %v573
      %v575 = vmul.f32 %v542, 1.442695
      %v576 = vpow.pop %v575
      %v577 = vmul.f32 %v543, 1.442695
      %v578 = vpow.pop %v577
      %v579 = vmul.f32 %v544, 1.442695
      %v580 = vpow.pop %v579
      %v581 = vmul.f32 %v545, 1.442695
      %v582 = vpow.pop %v581
      %v583 = vmul.f32 %v546, 1.442695
      %v584 = vpow.pop %v583
      %v585 = vmul.f32 %v547, 1.442695
      %v586 = vpow.pop %v585
      %v587 = vmul.f32 %v548, 1.442695
      %v588 = vpow.pop %v587
      %v589 = vmul.f32 %v549, 1.442695
      %v590 = vpow.pop %v589
      %v591 = vmul.f32 %v550, 1.442695
      %v592 = vpow.pop %v591
      %v593 = vmul.f32 %v551, 1.442695
      %v594 = vpow.pop %v593
      %v595 = vmul.f32 %v552, 1.442695
      %v596 = vpow.pop %v595
      %v597 = vmul.f32 %v553, 1.442695
      %v598 = vpow.pop %v597
      %v599 = vmul.f32 %v554, 1.442695
      %v600 = vpow.pop %v599
      %v601 = vmul.f32 %v555, 1.442695
      %v602 = vpow.pop %v601
      %v603 = vmul.f32 %v556, 1.442695
      %v604 = vpow.pop %v603
      %v605 = vmul.f32 %v557, 1.442695
      %v606 = vpow.pop %v605
      %v607 = vmul.f32 %v558, 1.442695
      %v608 = vpow.pop %v607
      %v609 = vmul.f32 %v559, 1.442695
      %v610 = vpow.pop %v609
      %v611 = vmul.f32 %v560, 1.442695
      %v612 = vpow.pop %v611
      %v613 = vmul.f32 %v561, 1.442695
      %v614 = vpow.pop %v613
      %v615 = vmul.f32 %v562, 1.442695
      %v616 = vpow.pop %v615
      %v617 = vmul.f32 %v563, 1.442695
      %v618 = vpow.pop %v617
      %v619 = vmul.f32 %v564, 1.442695
      %v620 = vpow.pop %v619
      %v621 = vmul.f32 %v565, 1.442695
      %v622 = vpow.pop %v621
      %v623 = vmul.f32 %v566, 1.442695
      %v624 = vpow.pop %v623
      %v625 = vmul.f32 %v567, 1.442695
      %v626 = vpow.pop %v625
      %v627 = vmul.f32 %v568, 1.442695
      %v628 = vpow.pop %v627
      %v629 = vmul.f32 %v569, 1.442695
      %v630 = vpow.pop %v629
      %v631 = vmul.f32 %v570, 1.442695
      %v632 = vpow.pop %v631
      %v633 = vmul.f32 %v571, 1.442695
      %v634 = vpow.pop %v633
      %v635 = vmul.f32 %v572, 1.442695
      %v636 = vpow.pop %v635
      %v637 = vadd.f32 %v574, 1.0
      %v638 = vadd.f32 %v576, 1.0
      %v639 = vadd.f32 %v578, 1.0
      %v640 = vadd.f32 %v580, 1.0
      %v641 = vadd.f32 %v582, 1.0
      %v642 = vadd.f32 %v584, 1.0
      %v643 = vadd.f32 %v586, 1.0
      %v644 = vadd.f32 %v588, 1.0
      %v645 = vadd.f32 %v590, 1.0
      %v646 = vadd.f32 %v592, 1.0
      %v647 = vadd.f32 %v594, 1.0
      %v648 = vadd.f32 %v596, 1.0
      %v649 = vadd.f32 %v598, 1.0
      %v650 = vadd.f32 %v600, 1.0
      %v651 = vadd.f32 %v602, 1.0
      %v652 = vadd.f32 %v604, 1.0
      %v653 = vadd.f32 %v606, 1.0
      %v654 = vadd.f32 %v608, 1.0
      %v655 = vadd.f32 %v610, 1.0
      %v656 = vadd.f32 %v612, 1.0
      %v657 = vadd.f32 %v614, 1.0
      %v658 = vadd.f32 %v616, 1.0
      %v659 = vadd.f32 %v618, 1.0
      %v660 = vadd.f32 %v620, 1.0
      %v661 = vadd.f32 %v622, 1.0
      %v662 = vadd.f32 %v624, 1.0
      %v663 = vadd.f32 %v626, 1.0
      %v664 = vadd.f32 %v628, 1.0
      %v665 = vadd.f32 %v630, 1.0
      %v666 = vadd.f32 %v632, 1.0
      %v667 = vadd.f32 %v634, 1.0
      %v668 = vadd.f32 %v636, 1.0
      %v669 = vrcp.pop %v637
      %v670 = vmul.f32 1.0, %v669
      %v671 = vrcp.pop %v638
      %v672 = vmul.f32 1.0, %v671
      %v673 = vrcp.pop %v639
      %v674 = vmul.f32 1.0, %v673
      %v675 = vrcp.pop %v640
      %v676 = vmul.f32 1.0, %v675
      %v677 = vrcp.pop %v641
      %v678 = vmul.f32 1.0, %v677
      %v679 = vrcp.pop %v642
      %v680 = vmul.f32 1.0, %v679
      %v681 = vrcp.pop %v643
      %v682 = vmul.f32 1.0, %v681
      %v683 = vrcp.pop %v644
      %v684 = vmul.f32 1.0, %v683
      %v685 = vrcp.pop %v645
      %v686 = vmul.f32 1.0, %v685
      %v687 = vrcp.pop %v646
      %v688 = vmul.f32 1.0, %v687
      %v689 = vrcp.pop %v647
      %v690 = vmul.f32 1.0, %v689
      %v691 = vrcp.pop %v648
      %v692 = vmul.f32 1.0, %v691
      %v693 = vrcp.pop %v649
      %v694 = vmul.f32 1.0, %v693
      %v695 = vrcp.pop %v650
      %v696 = vmul.f32 1.0, %v695
      %v697 = vrcp.pop %v651
      %v698 = vmul.f32 1.0, %v697
      %v699 = vrcp.pop %v652
      %v700 = vmul.f32 1.0, %v699
      %v701 = vrcp.pop %v653
      %v702 = vmul.f32 1.0, %v701
      %v703 = vrcp.pop %v654
      %v704 = vmul.f32 1.0, %v703
      %v705 = vrcp.pop %v655
      %v706 = vmul.f32 1.0, %v705
      %v707 = vrcp.pop %v656
      %v708 = vmul.f32 1.0, %v707
      %v709 = vrcp.pop %v657
      %v710 = vmul.f32 1.0, %v709
      %v711 = vrcp.pop %v658
      %v712 = vmul.f32 1.0, %v711
      %v713 = vrcp.pop %v659
      %v714 = vmul.f32 1.0, %v713
      %v715 = vrcp.pop %v660
      %v716 = vmul.f32 1.0, %v715
      %v717 = vrcp.pop %v661
      %v718 = vmul.f32 1.0, %v717
      %v719 = vrcp.pop %v662
      %v720 = vmul.f32 1.0, %v719
      %v721 = vrcp.pop %v663
      %v722 = vmul.f32 1.0, %v721
      %v723 = vrcp.pop %v664
      %v724 = vmul.f32 1.0, %v723
      %v725 = vrcp.pop %v665
      %v726 = vmul.f32 1.0, %v725
      %v727 = vrcp.pop %v666
      %v728 = vmul.f32 1.0, %v727
      %v729 = vrcp.pop %v667
      %v730 = vmul.f32 1.0, %v729
      %v731 = vrcp.pop %v668
      %v732 = vmul.f32 1.0, %v731
      %v733 = vmul.f32 %v383, %v670
      %v734 = vmul.f32 %v386, %v672
      %v735 = vmul.f32 %v391, %v674
      %v736 = vmul.f32 %v394, %v676
      %v737 = vmul.f32 %v399, %v678
      %v738 = vmul.f32 %v402, %v680
      %v739 = vmul.f32 %v407, %v682
      %v740 = vmul.f32 %v410, %v684
      %v741 = vmul.f32 %v415, %v686
      %v742 = vmul.f32 %v418, %v688
      %v743 = vmul.f32 %v423, %v690
      %v744 = vmul.f32 %v426, %v692
      %v745 = vmul.f32 %v431, %v694
      %v746 = vmul.f32 %v434, %v696
      %v747 = vmul.f32 %v439, %v698
      %v748 = vmul.f32 %v442, %v700
      %v749 = vmul.f32 %v447, %v702
      %v750 = vmul.f32 %v450, %v704
      %v751 = vmul.f32 %v455, %v706
      %v752 = vmul.f32 %v458, %v708
      %v753 = vmul.f32 %v463, %v710
      %v754 = vmul.f32 %v466, %v712
      %v755 = vmul.f32 %v471, %v714
      %v756 = vmul.f32 %v474, %v716
      %v757 = vmul.f32 %v479, %v718
      %v758 = vmul.f32 %v482, %v720
      %v759 = vmul.f32 %v487, %v722
      %v760 = vmul.f32 %v490, %v724
      %v761 = vmul.f32 %v495, %v726
      %v762 = vmul.f32 %v498, %v728
      %v763 = vmul.f32 %v503, %v730
      %v764 = vmul.f32 %v506, %v732
      %v765 = vpack.c.bf16 %v734, %v733
      %v766 = vpack.c.bf16 %v736, %v735
      %v767 = vpack.c.bf16 %v738, %v737
      %v768 = vpack.c.bf16 %v740, %v739
      %v769 = vpack.c.bf16 %v742, %v741
      %v770 = vpack.c.bf16 %v744, %v743
      %v771 = vpack.c.bf16 %v746, %v745
      %v772 = vpack.c.bf16 %v748, %v747
      %v773 = vpack.c.bf16 %v750, %v749
      %v774 = vpack.c.bf16 %v752, %v751
      %v775 = vpack.c.bf16 %v754, %v753
      %v776 = vpack.c.bf16 %v756, %v755
      %v777 = vpack.c.bf16 %v758, %v757
      %v778 = vpack.c.bf16 %v760, %v759
      %v779 = vpack.c.bf16 %v762, %v761
      %v780 = vpack.c.bf16 %v764, %v763
      %v781 = vld [vmem:[%s3] sm:$0xf]
      %v782 = vld [vmem:[%s3 + $0x4] sm:$0xf]
      %v783 = vld [vmem:[%s3 + $0x8] sm:$0xf]
      %v784 = vld [vmem:[%s3 + $0xc] sm:$0xf]
      %v785 = vld [vmem:[%s3 + $0x10] sm:$0xf]
      %v786 = vld [vmem:[%s3 + $0x14] sm:$0xf]
      %v787 = vld [vmem:[%s3 + $0x18] sm:$0xf]
      %v788 = vld [vmem:[%s3 + $0x1c] sm:$0xf]
      %v789 = vld [vmem:[%s3 + $0x20] sm:$0xf]
      %v790 = vld [vmem:[%s3 + $0x24] sm:$0xf]
      %v791 = vld [vmem:[%s3 + $0x28] sm:$0xf]
      %v792 = vld [vmem:[%s3 + $0x2c] sm:$0xf]
      %v793 = vld [vmem:[%s3 + $0x30] sm:$0xf]
      %v794 = vld [vmem:[%s3 + $0x34] sm:$0xf]
      %v795 = vld [vmem:[%s3 + $0x38] sm:$0xf]
      %v796 = vld [vmem:[%s3 + $0x3c] sm:$0xf]
      %v797 = vld [vmem:[%s1 + $0x4] sm:$0xf]
      %v798 = vld [vmem:[%s1 + $0x1c] sm:$0xf]
      %v799 = vld [vmem:[%s1 + $0x34] sm:$0xf]
      %v800 = vld [vmem:[%s1 + $0x4c] sm:$0xf]
      %v801 = vld [vmem:[%s1 + $0x64] sm:$0xf]
      %v802 = vld [vmem:[%s1 + $0x7c] sm:$0xf]
      %v803 = vld [vmem:[%s1 + $0x94] sm:$0xf]
      %v804 = vld [vmem:[%s1 + $0xac] sm:$0xf]
      %v805 = vld [vmem:[%s1 + $0xc4] sm:$0xf]
      %v806 = vld [vmem:[%s1 + $0xdc] sm:$0xf]
      %v807 = vld [vmem:[%s1 + $0xf4] sm:$0xf]
      %v808 = vld [vmem:[%s1 + $0x10c] sm:$0xf]
      %v809 = vld [vmem:[%s1 + $0x124] sm:$0xf]
      %v810 = vld [vmem:[%s1 + $0x13c] sm:$0xf]
      %v811 = vld [vmem:[%s1 + $0x154] sm:$0xf]
      %v812 = vld [vmem:[%s1 + $0x16c] sm:$0xf]
      %v813 = vld [vmem:[%s2 + $0x1] sm:$0x1]
      %v815 = vlaneseq
      %v816 = vshrl.u32 %v815, 7
      %v817 = vsub.s32 0, %v816
      %v818 = vrot.slane %v813, %v817
      %v836 = vunpack.c.l.b16 %v797
      %v837 = vunpack.c.l.b16 %v798
      %v838 = vunpack.c.l.b16 %v799
      %v839 = vunpack.c.l.b16 %v800
      %v840 = vunpack.c.l.b16 %v801
      %v841 = vunpack.c.l.b16 %v802
      %v842 = vunpack.c.l.b16 %v803
      %v843 = vunpack.c.l.b16 %v804
      %v844 = vunpack.c.l.b16 %v805
      %v845 = vunpack.c.l.b16 %v806
      %v846 = vunpack.c.l.b16 %v807
      %v847 = vunpack.c.l.b16 %v808
      %v848 = vunpack.c.l.b16 %v809
      %v849 = vunpack.c.l.b16 %v810
      %v850 = vunpack.c.l.b16 %v811
      %v851 = vunpack.c.l.b16 %v812
      %v852 = vpack.c.b16 %v837, %v836
      %v853 = vpack.c.b16 %v839, %v838
      %v854 = vpack.c.b16 %v841, %v840
      %v855 = vpack.c.b16 %v843, %v842
      %v856 = vpack.c.b16 %v845, %v844
      %v857 = vpack.c.b16 %v847, %v846
      %v858 = vpack.c.b16 %v849, %v848
      %v859 = vpack.c.b16 %v851, %v850
      %868 = vmatprep.subr.bf16.mxu0 0
      %869 = vmatpush1.bf16.msra.mxu0 %v852
      %870 = vmatprep.subr.bf16.mxu0 0
      %871 = vmatpush1.bf16.msra.mxu0 %v853
      %872 = vmatprep.subr.bf16.mxu0 0
      %873 = vmatpush1.bf16.msra.mxu0 %v854
      %874 = vmatprep.subr.bf16.mxu0 0
      %875 = vmatpush1.bf16.msra.mxu0 %v855
      %876 = vmatprep.subr.bf16.mxu0 0
      %877 = vmatpush1.bf16.msra.mxu0 %v856
      %878 = vmatprep.subr.bf16.mxu0 0
      %879 = vmatpush1.bf16.msra.mxu0 %v857
      %880 = vmatprep.subr.bf16.mxu0 0
      %881 = vmatpush1.bf16.msra.mxu0 %v858
      %882 = vmatprep.subr.bf16.mxu0 0
      %883 = vmatpush1.bf16.msra.mxu0 %v859
      %884 = vmatprep.subr.bf16.mxu0 0
      %885 = vmatpush1.bf16.msra.mxu0 0
      %886 = vmatprep.subr.bf16.mxu0 0
      %887 = vmatpush1.bf16.msra.mxu0 0
      %888 = vmatprep.subr.bf16.mxu0 0
      %889 = vmatpush1.bf16.msra.mxu0 0
      %890 = vmatprep.subr.bf16.mxu0 0
      %891 = vmatpush1.bf16.msra.mxu0 0
      %892 = vmatprep.subr.bf16.mxu0 0
      %893 = vmatpush1.bf16.msra.mxu0 0
      %894 = vmatprep.subr.bf16.mxu0 0
      %895 = vmatpush1.bf16.msra.mxu0 0
      %896 = vmatprep.subr.bf16.mxu0 0
      %897 = vmatpush1.bf16.msra.mxu0 0
      %898 = vmatprep.subr.bf16.mxu0 0
      %899 = vmatpush1.bf16.msra.mxu0 0
      %900 = vmatprep.mubr.bf16.mxu0 0
      %901 = vmatmul.mubr.bf16.gmra.mrb[0].mxu0 %v261
      %v902 = vpop.f32.mrb[0].mxu0
      %v903 = vadd.f32 %v818, %v902
      %v904 = vpop.f32.mrb[0].mxu0
      %v905 = vpop.f32.mrb[0].mxu0
      %v906 = vadd.f32 %v818, %v905
      %v907 = vpop.f32.mrb[0].mxu0
      %908 = vmatprep.mubr.bf16.mxu0 0
      %909 = vmatmul.mubr.bf16.gmra.mrb[0].mxu0 %v262
      %v910 = vpop.f32.mrb[0].mxu0
      %v911 = vadd.f32 %v818, %v910
      %v912 = vpop.f32.mrb[0].mxu0
      %v913 = vpop.f32.mrb[0].mxu0
      %v914 = vadd.f32 %v818, %v913
      %v915 = vpop.f32.mrb[0].mxu0
      %916 = vmatprep.mubr.bf16.mxu0 0
      %917 = vmatmul.mubr.bf16.gmra.mrb[0].mxu0 %v263
      %v918 = vpop.f32.mrb[0].mxu0
      %v919 = vadd.f32 %v818, %v918
      %v920 = vpop.f32.mrb[0].mxu0
      %v921 = vpop.f32.mrb[0].mxu0
      %v922 = vadd.f32 %v818, %v921
      %v923 = vpop.f32.mrb[0].mxu0
      %924 = vmatprep.mubr.bf16.mxu0 0
      %925 = vmatmul.mubr.bf16.gmra.mrb[0].mxu0 %v264
      %v926 = vpop.f32.mrb[0].mxu0
      %v927 = vadd.f32 %v818, %v926
      %v928 = vpop.f32.mrb[0].mxu0
      %v929 = vpop.f32.mrb[0].mxu0
      %v930 = vadd.f32 %v818, %v929
      %v931 = vpop.f32.mrb[0].mxu0
      %932 = vmatprep.mubr.bf16.mxu0 0
      %933 = vmatmul.mubr.bf16.gmra.mrb[0].mxu0 %v265
      %v934 = vpop.f32.mrb[0].mxu0
      %v935 = vadd.f32 %v818, %v934
      %v936 = vpop.f32.mrb[0].mxu0
      %v937 = vpop.f32.mrb[0].mxu0
      %v938 = vadd.f32 %v818, %v937
      %v939 = vpop.f32.mrb[0].mxu0
      %940 = vmatprep.mubr.bf16.mxu0 0
      %941 = vmatmul.mubr.bf16.gmra.mrb[0].mxu0 %v266
      %v942 = vpop.f32.mrb[0].mxu0
      %v943 = vadd.f32 %v818, %v942
      %v944 = vpop.f32.mrb[0].mxu0
      %v945 = vpop.f32.mrb[0].mxu0
      %v946 = vadd.f32 %v818, %v945
      %v947 = vpop.f32.mrb[0].mxu0
      %948 = vmatprep.mubr.bf16.mxu0 0
      %949 = vmatmul.mubr.bf16.gmra.mrb[0].mxu0 %v267
      %v950 = vpop.f32.mrb[0].mxu0
      %v951 = vadd.f32 %v818, %v950
      %v952 = vpop.f32.mrb[0].mxu0
      %v953 = vpop.f32.mrb[0].mxu0
      %v954 = vadd.f32 %v818, %v953
      %v955 = vpop.f32.mrb[0].mxu0
      %956 = vmatprep.mubr.bf16.mxu0 0
      %957 = vmatmul.mubr.bf16.gmra.mrb[0].mxu0 %v268
      %v958 = vpop.f32.mrb[0].mxu0
      %v959 = vadd.f32 %v818, %v958
      %v960 = vpop.f32.mrb[0].mxu0
      %v961 = vpop.f32.mrb[0].mxu0
      %v962 = vadd.f32 %v818, %v961
      %v963 = vpop.f32.mrb[0].mxu0
      %964 = vmatprep.mubr.bf16.mxu0 0
      %965 = vmatmul.mubr.bf16.gmra.mrb[0].mxu0 %v269
      %v966 = vpop.f32.mrb[0].mxu0
      %v967 = vadd.f32 %v818, %v966
      %v968 = vpop.f32.mrb[0].mxu0
      %v969 = vpop.f32.mrb[0].mxu0
      %v970 = vadd.f32 %v818, %v969
      %v971 = vpop.f32.mrb[0].mxu0
      %972 = vmatprep.mubr.bf16.mxu0 0
      %973 = vmatmul.mubr.bf16.gmra.mrb[0].mxu0 %v270
      %v974 = vpop.f32.mrb[0].mxu0
      %v975 = vadd.f32 %v818, %v974
      %v976 = vpop.f32.mrb[0].mxu0
      %v977 = vpop.f32.mrb[0].mxu0
      %v978 = vadd.f32 %v818, %v977
      %v979 = vpop.f32.mrb[0].mxu0
      %980 = vmatprep.mubr.bf16.mxu0 0
      %981 = vmatmul.mubr.bf16.gmra.mrb[0].mxu0 %v271
      %v982 = vpop.f32.mrb[0].mxu0
      %v983 = vadd.f32 %v818, %v982
      %v984 = vpop.f32.mrb[0].mxu0
      %v985 = vpop.f32.mrb[0].mxu0
      %v986 = vadd.f32 %v818, %v985
      %v987 = vpop.f32.mrb[0].mxu0
      %988 = vmatprep.mubr.bf16.mxu0 0
      %989 = vmatmul.mubr.bf16.gmra.mrb[0].mxu0 %v272
      %v990 = vpop.f32.mrb[0].mxu0
      %v991 = vadd.f32 %v818, %v990
      %v992 = vpop.f32.mrb[0].mxu0
      %v993 = vpop.f32.mrb[0].mxu0
      %v994 = vadd.f32 %v818, %v993
      %v995 = vpop.f32.mrb[0].mxu0
      %996 = vmatprep.mubr.bf16.mxu0 0
      %997 = vmatmul.mubr.bf16.gmra.mrb[0].mxu0 %v273
      %v998 = vpop.f32.mrb[0].mxu0
      %v999 = vadd.f32 %v818, %v998
      %v1000 = vpop.f32.mrb[0].mxu0
      %v1001 = vpop.f32.mrb[0].mxu0
      %v1002 = vadd.f32 %v818, %v1001
      %v1003 = vpop.f32.mrb[0].mxu0
      %1004 = vmatprep.mubr.bf16.mxu0 0
      %1005 = vmatmul.mubr.bf16.gmra.mrb[0].mxu0 %v274
      %v1006 = vpop.f32.mrb[0].mxu0
      %v1007 = vadd.f32 %v818, %v1006
      %v1008 = vpop.f32.mrb[0].mxu0
      %v1009 = vpop.f32.mrb[0].mxu0
      %v1010 = vadd.f32 %v818, %v1009
      %v1011 = vpop.f32.mrb[0].mxu0
      %1012 = vmatprep.mubr.bf16.mxu0 0
      %1013 = vmatmul.mubr.bf16.gmra.mrb[0].mxu0 %v275
      %v1014 = vpop.f32.mrb[0].mxu0
      %v1015 = vadd.f32 %v818, %v1014
      %v1016 = vpop.f32.mrb[0].mxu0
      %v1017 = vpop.f32.mrb[0].mxu0
      %v1018 = vadd.f32 %v818, %v1017
      %v1019 = vpop.f32.mrb[0].mxu0
      %1020 = vmatprep.mubr.bf16.mxu0 0
      %1021 = vmatmul.mubr.bf16.gmra.mrb[0].mxu0 %v276
      %v1022 = vpop.f32.mrb[0].mxu0
      %v1023 = vadd.f32 %v818, %v1022
      %v1024 = vpop.f32.mrb[0].mxu0
      %v1025 = vpop.f32.mrb[0].mxu0
      %v1026 = vadd.f32 %v818, %v1025
      %v1027 = vpop.f32.mrb[0].mxu0
      %1028 = vdwg.mxu0
      %v1029 = vmul.f32 %v903, 1.702
      %v1030 = vmul.f32 %v906, 1.702
      %v1031 = vmul.f32 %v911, 1.702
      %v1032 = vmul.f32 %v914, 1.702
      %v1033 = vmul.f32 %v919, 1.702
      %v1034 = vmul.f32 %v922, 1.702
      %v1035 = vmul.f32 %v927, 1.702
      %v1036 = vmul.f32 %v930, 1.702
      %v1037 = vmul.f32 %v935, 1.702
      %v1038 = vmul.f32 %v938, 1.702
      %v1039 = vmul.f32 %v943, 1.702
      %v1040 = vmul.f32 %v946, 1.702
      %v1041 = vmul.f32 %v951, 1.702
      %v1042 = vmul.f32 %v954, 1.702
      %v1043 = vmul.f32 %v959, 1.702
      %v1044 = vmul.f32 %v962, 1.702
      %v1045 = vmul.f32 %v967, 1.702
      %v1046 = vmul.f32 %v970, 1.702
      %v1047 = vmul.f32 %v975, 1.702
      %v1048 = vmul.f32 %v978, 1.702
      %v1049 = vmul.f32 %v983, 1.702
      %v1050 = vmul.f32 %v986, 1.702
      %v1051 = vmul.f32 %v991, 1.702
      %v1052 = vmul.f32 %v994, 1.702
      %v1053 = vmul.f32 %v999, 1.702
      %v1054 = vmul.f32 %v1002, 1.702
      %v1055 = vmul.f32 %v1007, 1.702
      %v1056 = vmul.f32 %v1010, 1.702
      %v1057 = vmul.f32 %v1015, 1.702
      %v1058 = vmul.f32 %v1018, 1.702
      %v1059 = vmul.f32 %v1023, 1.702
      %v1060 = vmul.f32 %v1026, 1.702
      %v1061 = vxor.u32 %v1029, 2147483648
      %v1062 = vxor.u32 %v1030, 2147483648
      %v1063 = vxor.u32 %v1031, 2147483648
      %v1064 = vxor.u32 %v1032, 2147483648
      %v1065 = vxor.u32 %v1033, 2147483648
      %v1066 = vxor.u32 %v1034, 2147483648
      %v1067 = vxor.u32 %v1035, 2147483648
      %v1068 = vxor.u32 %v1036, 2147483648
      %v1069 = vxor.u32 %v1037, 2147483648
      %v1070 = vxor.u32 %v1038, 2147483648
      %v1071 = vxor.u32 %v1039, 2147483648
      %v1072 = vxor.u32 %v1040, 2147483648
      %v1073 = vxor.u32 %v1041, 2147483648
      %v1074 = vxor.u32 %v1042, 2147483648
      %v1075 = vxor.u32 %v1043, 2147483648
      %v1076 = vxor.u32 %v1044, 2147483648
      %v1077 = vxor.u32 %v1045, 2147483648
      %v1078 = vxor.u32 %v1046, 2147483648
      %v1079 = vxor.u32 %v1047, 2147483648
      %v1080 = vxor.u32 %v1048, 2147483648
      %v1081 = vxor.u32 %v1049, 2147483648
      %v1082 = vxor.u32 %v1050, 2147483648
      %v1083 = vxor.u32 %v1051, 2147483648
      %v1084 = vxor.u32 %v1052, 2147483648
      %v1085 = vxor.u32 %v1053, 2147483648
      %v1086 = vxor.u32 %v1054, 2147483648
      %v1087 = vxor.u32 %v1055, 2147483648
      %v1088 = vxor.u32 %v1056, 2147483648
      %v1089 = vxor.u32 %v1057, 2147483648
      %v1090 = vxor.u32 %v1058, 2147483648
      %v1091 = vxor.u32 %v1059, 2147483648
      %v1092 = vxor.u32 %v1060, 2147483648
      %v1093 = vmul.f32 %v1061, 1.442695
      %v1094 = vpow.pop %v1093
      %v1095 = vmul.f32 %v1062, 1.442695
      %v1096 = vpow.pop %v1095
      %v1097 = vmul.f32 %v1063, 1.442695
      %v1098 = vpow.pop %v1097
      %v1099 = vmul.f32 %v1064, 1.442695
      %v1100 = vpow.pop %v1099
      %v1101 = vmul.f32 %v1065, 1.442695
      %v1102 = vpow.pop %v1101
      %v1103 = vmul.f32 %v1066, 1.442695
      %v1104 = vpow.pop %v1103
      %v1105 = vmul.f32 %v1067, 1.442695
      %v1106 = vpow.pop %v1105
      %v1107 = vmul.f32 %v1068, 1.442695
      %v1108 = vpow.pop %v1107
      %v1109 = vmul.f32 %v1069, 1.442695
      %v1110 = vpow.pop %v1109
      %v1111 = vmul.f32 %v1070, 1.442695
      %v1112 = vpow.pop %v1111
      %v1113 = vmul.f32 %v1071, 1.442695
      %v1114 = vpow.pop %v1113
      %v1115 = vmul.f32 %v1072, 1.442695
      %v1116 = vpow.pop %v1115
      %v1117 = vmul.f32 %v1073, 1.442695
      %v1118 = vpow.pop %v1117
      %v1119 = vmul.f32 %v1074, 1.442695
      %v1120 = vpow.pop %v1119
      %v1121 = vmul.f32 %v1075, 1.442695
      %v1122 = vpow.pop %v1121
      %v1123 = vmul.f32 %v1076, 1.442695
      %v1124 = vpow.pop %v1123
      %v1125 = vmul.f32 %v1077, 1.442695
      %v1126 = vpow.pop %v1125
      %v1127 = vmul.f32 %v1078, 1.442695
      %v1128 = vpow.pop %v1127
      %v1129 = vmul.f32 %v1079, 1.442695
      %v1130 = vpow.pop %v1129
      %v1131 = vmul.f32 %v1080, 1.442695
      %v1132 = vpow.pop %v1131
      %v1133 = vmul.f32 %v1081, 1.442695
      %v1134 = vpow.pop %v1133
      %v1135 = vmul.f32 %v1082, 1.442695
      %v1136 = vpow.pop %v1135
      %v1137 = vmul.f32 %v1083, 1.442695
      %v1138 = vpow.pop %v1137
      %v1139 = vmul.f32 %v1084, 1.442695
      %v1140 = vpow.pop %v1139
      %v1141 = vmul.f32 %v1085, 1.442695
      %v1142 = vpow.pop %v1141
      %v1143 = vmul.f32 %v1086, 1.442695
      %v1144 = vpow.pop %v1143
      %v1145 = vmul.f32 %v1087, 1.442695
      %v1146 = vpow.pop %v1145
      %v1147 = vmul.f32 %v1088, 1.442695
      %v1148 = vpow.pop %v1147
      %v1149 = vmul.f32 %v1089, 1.442695
      %v1150 = vpow.pop %v1149
      %v1151 = vmul.f32 %v1090, 1.442695
      %v1152 = vpow.pop %v1151
      %v1153 = vmul.f32 %v1091, 1.442695
      %v1154 = vpow.pop %v1153
      %v1155 = vmul.f32 %v1092, 1.442695
      %v1156 = vpow.pop %v1155
      %v1157 = vadd.f32 %v1094, 1.0
      %v1158 = vadd.f32 %v1096, 1.0
      %v1159 = vadd.f32 %v1098, 1.0
      %v1160 = vadd.f32 %v1100, 1.0
      %v1161 = vadd.f32 %v1102, 1.0
      %v1162 = vadd.f32 %v1104, 1.0
      %v1163 = vadd.f32 %v1106, 1.0
      %v1164 = vadd.f32 %v1108, 1.0
      %v1165 = vadd.f32 %v1110, 1.0
      %v1166 = vadd.f32 %v1112, 1.0
      %v1167 = vadd.f32 %v1114, 1.0
      %v1168 = vadd.f32 %v1116, 1.0
      %v1169 = vadd.f32 %v1118, 1.0
      %v1170 = vadd.f32 %v1120, 1.0
      %v1171 = vadd.f32 %v1122, 1.0
      %v1172 = vadd.f32 %v1124, 1.0
      %v1173 = vadd.f32 %v1126, 1.0
      %v1174 = vadd.f32 %v1128, 1.0
      %v1175 = vadd.f32 %v1130, 1.0
      %v1176 = vadd.f32 %v1132, 1.0
      %v1177 = vadd.f32 %v1134, 1.0
      %v1178 = vadd.f32 %v1136, 1.0
      %v1179 = vadd.f32 %v1138, 1.0
      %v1180 = vadd.f32 %v1140, 1.0
      %v1181 = vadd.f32 %v1142, 1.0
      %v1182 = vadd.f32 %v1144, 1.0
      %v1183 = vadd.f32 %v1146, 1.0
      %v1184 = vadd.f32 %v1148, 1.0
      %v1185 = vadd.f32 %v1150, 1.0
      %v1186 = vadd.f32 %v1152, 1.0
      %v1187 = vadd.f32 %v1154, 1.0
      %v1188 = vadd.f32 %v1156, 1.0
      %v1189 = vrcp.pop %v1157
      %v1190 = vmul.f32 1.0, %v1189
      %v1191 = vrcp.pop %v1158
      %v1192 = vmul.f32 1.0, %v1191
      %v1193 = vrcp.pop %v1159
      %v1194 = vmul.f32 1.0, %v1193
      %v1195 = vrcp.pop %v1160
      %v1196 = vmul.f32 1.0, %v1195
      %v1197 = vrcp.pop %v1161
      %v1198 = vmul.f32 1.0, %v1197
      %v1199 = vrcp.pop %v1162
      %v1200 = vmul.f32 1.0, %v1199
      %v1201 = vrcp.pop %v1163
      %v1202 = vmul.f32 1.0, %v1201
      %v1203 = vrcp.pop %v1164
      %v1204 = vmul.f32 1.0, %v1203
      %v1205 = vrcp.pop %v1165
      %v1206 = vmul.f32 1.0, %v1205
      %v1207 = vrcp.pop %v1166
      %v1208 = vmul.f32 1.0, %v1207
      %v1209 = vrcp.pop %v1167
      %v1210 = vmul.f32 1.0, %v1209
      %v1211 = vrcp.pop %v1168
      %v1212 = vmul.f32 1.0, %v1211
      %v1213 = vrcp.pop %v1169
      %v1214 = vmul.f32 1.0, %v1213
      %v1215 = vrcp.pop %v1170
      %v1216 = vmul.f32 1.0, %v1215
      %v1217 = vrcp.pop %v1171
      %v1218 = vmul.f32 1.0, %v1217
      %v1219 = vrcp.pop %v1172
      %v1220 = vmul.f32 1.0, %v1219
      %v1221 = vrcp.pop %v1173
      %v1222 = vmul.f32 1.0, %v1221
      %v1223 = vrcp.pop %v1174
      %v1224 = vmul.f32 1.0, %v1223
      %v1225 = vrcp.pop %v1175
      %v1226 = vmul.f32 1.0, %v1225
      %v1227 = vrcp.pop %v1176
      %v1228 = vmul.f32 1.0, %v1227
      %v1229 = vrcp.pop %v1177
      %v1230 = vmul.f32 1.0, %v1229
      %v1231 = vrcp.pop %v1178
      %v1232 = vmul.f32 1.0, %v1231
      %v1233 = vrcp.pop %v1179
      %v1234 = vmul.f32 1.0, %v1233
      %v1235 = vrcp.pop %v1180
      %v1236 = vmul.f32 1.0, %v1235
      %v1237 = vrcp.pop %v1181
      %v1238 = vmul.f32 1.0, %v1237
      %v1239 = vrcp.pop %v1182
      %v1240 = vmul.f32 1.0, %v1239
      %v1241 = vrcp.pop %v1183
      %v1242 = vmul.f32 1.0, %v1241
      %v1243 = vrcp.pop %v1184
      %v1244 = vmul.f32 1.0, %v1243
      %v1245 = vrcp.pop %v1185
      %v1246 = vmul.f32 1.0, %v1245
      %v1247 = vrcp.pop %v1186
      %v1248 = vmul.f32 1.0, %v1247
      %v1249 = vrcp.pop %v1187
      %v1250 = vmul.f32 1.0, %v1249
      %v1251 = vrcp.pop %v1188
      %v1252 = vmul.f32 1.0, %v1251
      %v1253 = vmul.f32 %v903, %v1190
      %v1254 = vmul.f32 %v906, %v1192
      %v1255 = vmul.f32 %v911, %v1194
      %v1256 = vmul.f32 %v914, %v1196
      %v1257 = vmul.f32 %v919, %v1198
      %v1258 = vmul.f32 %v922, %v1200
      %v1259 = vmul.f32 %v927, %v1202
      %v1260 = vmul.f32 %v930, %v1204
      %v1261 = vmul.f32 %v935, %v1206
      %v1262 = vmul.f32 %v938, %v1208
      %v1263 = vmul.f32 %v943, %v1210
      %v1264 = vmul.f32 %v946, %v1212
      %v1265 = vmul.f32 %v951, %v1214
      %v1266 = vmul.f32 %v954, %v1216
      %v1267 = vmul.f32 %v959, %v1218
      %v1268 = vmul.f32 %v962, %v1220
      %v1269 = vmul.f32 %v967, %v1222
      %v1270 = vmul.f32 %v970, %v1224
      %v1271 = vmul.f32 %v975, %v1226
      %v1272 = vmul.f32 %v978, %v1228
      %v1273 = vmul.f32 %v983, %v1230
      %v1274 = vmul.f32 %v986, %v1232
      %v1275 = vmul.f32 %v991, %v1234
      %v1276 = vmul.f32 %v994, %v1236
      %v1277 = vmul.f32 %v999, %v1238
      %v1278 = vmul.f32 %v1002, %v1240
      %v1279 = vmul.f32 %v1007, %v1242
      %v1280 = vmul.f32 %v1010, %v1244
      %v1281 = vmul.f32 %v1015, %v1246
      %v1282 = vmul.f32 %v1018, %v1248
      %v1283 = vmul.f32 %v1023, %v1250
      %v1284 = vmul.f32 %v1026, %v1252
      %v1285 = vpack.c.bf16 %v1254, %v1253
      %v1286 = vpack.c.bf16 %v1256, %v1255
      %v1287 = vpack.c.bf16 %v1258, %v1257
      %v1288 = vpack.c.bf16 %v1260, %v1259
      %v1289 = vpack.c.bf16 %v1262, %v1261
      %v1290 = vpack.c.bf16 %v1264, %v1263
      %v1291 = vpack.c.bf16 %v1266, %v1265
      %v1292 = vpack.c.bf16 %v1268, %v1267
      %v1293 = vpack.c.bf16 %v1270, %v1269
      %v1294 = vpack.c.bf16 %v1272, %v1271
      %v1295 = vpack.c.bf16 %v1274, %v1273
      %v1296 = vpack.c.bf16 %v1276, %v1275
      %v1297 = vpack.c.bf16 %v1278, %v1277
      %v1298 = vpack.c.bf16 %v1280, %v1279
      %v1299 = vpack.c.bf16 %v1282, %v1281
      %v1300 = vpack.c.bf16 %v1284, %v1283
      %v1301 = vld [vmem:[%s3 + $0x40] sm:$0xf]
      %v1302 = vld [vmem:[%s3 + $0x44] sm:$0xf]
      %v1303 = vld [vmem:[%s3 + $0x48] sm:$0xf]
      %v1304 = vld [vmem:[%s3 + $0x4c] sm:$0xf]
      %v1305 = vld [vmem:[%s3 + $0x50] sm:$0xf]
      %v1306 = vld [vmem:[%s3 + $0x54] sm:$0xf]
      %v1307 = vld [vmem:[%s3 + $0x58] sm:$0xf]
      %v1308 = vld [vmem:[%s3 + $0x5c] sm:$0xf]
      %v1309 = vld [vmem:[%s3 + $0x60] sm:$0xf]
      %v1310 = vld [vmem:[%s3 + $0x64] sm:$0xf]
      %v1311 = vld [vmem:[%s3 + $0x68] sm:$0xf]
      %v1312 = vld [vmem:[%s3 + $0x6c] sm:$0xf]
      %v1313 = vld [vmem:[%s3 + $0x70] sm:$0xf]
      %v1314 = vld [vmem:[%s3 + $0x74] sm:$0xf]
      %v1315 = vld [vmem:[%s3 + $0x78] sm:$0xf]
      %v1316 = vld [vmem:[%s3 + $0x7c] sm:$0xf]
      %v1333 = vunpack.c.l.b16 %v1301
      %v1334 = vunpack.c.l.b16 %v1302
      %v1335 = vunpack.c.l.b16 %v1303
      %v1336 = vunpack.c.l.b16 %v1304
      %v1337 = vunpack.c.l.b16 %v1305
      %v1338 = vunpack.c.l.b16 %v1306
      %v1339 = vunpack.c.l.b16 %v1307
      %v1340 = vunpack.c.l.b16 %v1308
      %v1341 = vunpack.c.l.b16 %v1309
      %v1342 = vunpack.c.l.b16 %v1310
      %v1343 = vunpack.c.l.b16 %v1311
      %v1344 = vunpack.c.l.b16 %v1312
      %v1345 = vunpack.c.l.b16 %v1313
      %v1346 = vunpack.c.l.b16 %v1314
      %v1347 = vunpack.c.l.b16 %v1315
      %v1348 = vunpack.c.l.b16 %v1316
      %v1349 = vpack.c.b16 %v1334, %v1333
      %v1350 = vpack.c.b16 %v1336, %v1335
      %v1351 = vpack.c.b16 %v1338, %v1337
      %v1352 = vpack.c.b16 %v1340, %v1339
      %v1353 = vpack.c.b16 %v1342, %v1341
      %v1354 = vpack.c.b16 %v1344, %v1343
      %v1355 = vpack.c.b16 %v1346, %v1345
      %v1356 = vpack.c.b16 %v1348, %v1347
      %1365 = vmatprep.subr.bf16.mxu0 0
      %1366 = vmatpush1.bf16.msra.mxu0 %v1349
      %1367 = vmatprep.subr.bf16.mxu0 0
      %1368 = vmatpush1.bf16.msra.mxu0 %v1350
      %1369 = vmatprep.subr.bf16.mxu0 0
      %1370 = vmatpush1.bf16.msra.mxu0 %v1351
      %1371 = vmatprep.subr.bf16.mxu0 0
      %1372 = vmatpush1.bf16.msra.mxu0 %v1352
      %1373 = vmatprep.subr.bf16.mxu0 0
      %1374 = vmatpush1.bf16.msra.mxu0 %v1353
      %1375 = vmatprep.subr.bf16.mxu0 0
      %1376 = vmatpush1.bf16.msra.mxu0 %v1354
      %1377 = vmatprep.subr.bf16.mxu0 0
      %1378 = vmatpush1.bf16.msra.mxu0 %v1355
      %1379 = vmatprep.subr.bf16.mxu0 0
      %1380 = vmatpush1.bf16.msra.mxu0 %v1356
      %1381 = vmatprep.subr.bf16.mxu0 0
      %1382 = vmatpush1.bf16.msra.mxu0 0
      %1383 = vmatprep.subr.bf16.mxu0 0
      %1384 = vmatpush1.bf16.msra.mxu0 0
      %1385 = vmatprep.subr.bf16.mxu0 0
      %1386 = vmatpush1.bf16.msra.mxu0 0
      %1387 = vmatprep.subr.bf16.mxu0 0
      %1388 = vmatpush1.bf16.msra.mxu0 0
      %1389 = vmatprep.subr.bf16.mxu0 0
      %1390 = vmatpush1.bf16.msra.mxu0 0
      %1391 = vmatprep.subr.bf16.mxu0 0
      %1392 = vmatpush1.bf16.msra.mxu0 0
      %1393 = vmatprep.subr.bf16.mxu0 0
      %1394 = vmatpush1.bf16.msra.mxu0 0
      %1395 = vmatprep.subr.bf16.mxu0 0
      %1396 = vmatpush1.bf16.msra.mxu0 0
      %1397 = vmatprep.mubr.bf16.mxu0 0
      %1398 = vmatmul.mubr.bf16.gmra.mrb[0].mxu0 %v1285
      %v1399 = vpop.f32.mrb[0].mxu0
      %v1400 = vadd.f32 0.0, %v1399
      %v1401 = vpop.f32.mrb[0].mxu0
      %v1402 = vpop.f32.mrb[0].mxu0
      %v1403 = vadd.f32 0.0, %v1402
      %v1404 = vpop.f32.mrb[0].mxu0
      %1405 = vmatprep.mubr.bf16.mxu0 0
      %1406 = vmatmul.mubr.bf16.gmra.mrb[0].mxu0 %v1286
      %v1407 = vpop.f32.mrb[0].mxu0
      %v1408 = vadd.f32 0.0, %v1407
      %v1409 = vpop.f32.mrb[0].mxu0
      %v1410 = vpop.f32.mrb[0].mxu0
      %v1411 = vadd.f32 0.0, %v1410
      %v1412 = vpop.f32.mrb[0].mxu0
      %1413 = vmatprep.mubr.bf16.mxu0 0
      %1414 = vmatmul.mubr.bf16.gmra.mrb[0].mxu0 %v1287
      %v1415 = vpop.f32.mrb[0].mxu0
      %v1416 = vadd.f32 0.0, %v1415
      %v1417 = vpop.f32.mrb[0].mxu0
      %v1418 = vpop.f32.mrb[0].mxu0
      %v1419 = vadd.f32 0.0, %v1418
      %v1420 = vpop.f32.mrb[0].mxu0
      %1421 = vmatprep.mubr.bf16.mxu0 0
      %1422 = vmatmul.mubr.bf16.gmra.mrb[0].mxu0 %v1288
      %v1423 = vpop.f32.mrb[0].mxu0
      %v1424 = vadd.f32 0.0, %v1423
      %v1425 = vpop.f32.mrb[0].mxu0
      %v1426 = vpop.f32.mrb[0].mxu0
      %v1427 = vadd.f32 0.0, %v1426
      %v1428 = vpop.f32.mrb[0].mxu0
      %1429 = vmatprep.mubr.bf16.mxu0 0
      %1430 = vmatmul.mubr.bf16.gmra.mrb[0].mxu0 %v1289
      %v1431 = vpop.f32.mrb[0].mxu0
      %v1432 = vadd.f32 0.0, %v1431
      %v1433 = vpop.f32.mrb[0].mxu0
      %v1434 = vpop.f32.mrb[0].mxu0
      %v1435 = vadd.f32 0.0, %v1434
      %v1436 = vpop.f32.mrb[0].mxu0
      %1437 = vmatprep.mubr.bf16.mxu0 0
      %1438 = vmatmul.mubr.bf16.gmra.mrb[0].mxu0 %v1290
      %v1439 = vpop.f32.mrb[0].mxu0
      %v1440 = vadd.f32 0.0, %v1439
      %v1441 = vpop.f32.mrb[0].mxu0
      %v1442 = vpop.f32.mrb[0].mxu0
      %v1443 = vadd.f32 0.0, %v1442
      %v1444 = vpop.f32.mrb[0].mxu0
      %1445 = vmatprep.mubr.bf16.mxu0 0
      %1446 = vmatmul.mubr.bf16.gmra.mrb[0].mxu0 %v1291
      %v1447 = vpop.f32.mrb[0].mxu0
      %v1448 = vadd.f32 0.0, %v1447
      %v1449 = vpop.f32.mrb[0].mxu0
      %v1450 = vpop.f32.mrb[0].mxu0
      %v1451 = vadd.f32 0.0, %v1450
      %v1452 = vpop.f32.mrb[0].mxu0
      %1453 = vmatprep.mubr.bf16.mxu0 0
      %1454 = vmatmul.mubr.bf16.gmra.mrb[0].mxu0 %v1292
      %v1455 = vpop.f32.mrb[0].mxu0
      %v1456 = vadd.f32 0.0, %v1455
      %v1457 = vpop.f32.mrb[0].mxu0
      %v1458 = vpop.f32.mrb[0].mxu0
      %v1459 = vadd.f32 0.0, %v1458
      %v1460 = vpop.f32.mrb[0].mxu0
      %1461 = vmatprep.mubr.bf16.mxu0 0
      %1462 = vmatmul.mubr.bf16.gmra.mrb[0].mxu0 %v1293
      %v1463 = vpop.f32.mrb[0].mxu0
      %v1464 = vadd.f32 0.0, %v1463
      %v1465 = vpop.f32.mrb[0].mxu0
      %v1466 = vpop.f32.mrb[0].mxu0
      %v1467 = vadd.f32 0.0, %v1466
      %v1468 = vpop.f32.mrb[0].mxu0
      %1469 = vmatprep.mubr.bf16.mxu0 0
      %1470 = vmatmul.mubr.bf16.gmra.mrb[0].mxu0 %v1294
      %v1471 = vpop.f32.mrb[0].mxu0
      %v1472 = vadd.f32 0.0, %v1471
      %v1473 = vpop.f32.mrb[0].mxu0
      %v1474 = vpop.f32.mrb[0].mxu0
      %v1475 = vadd.f32 0.0, %v1474
      %v1476 = vpop.f32.mrb[0].mxu0
      %1477 = vmatprep.mubr.bf16.mxu0 0
      %1478 = vmatmul.mubr.bf16.gmra.mrb[0].mxu0 %v1295
      %v1479 = vpop.f32.mrb[0].mxu0
      %v1480 = vadd.f32 0.0, %v1479
      %v1481 = vpop.f32.mrb[0].mxu0
      %v1482 = vpop.f32.mrb[0].mxu0
      %v1483 = vadd.f32 0.0, %v1482
      %v1484 = vpop.f32.mrb[0].mxu0
      %1485 = vmatprep.mubr.bf16.mxu0 0
      %1486 = vmatmul.mubr.bf16.gmra.mrb[0].mxu0 %v1296
      %v1487 = vpop.f32.mrb[0].mxu0
      %v1488 = vadd.f32 0.0, %v1487
      %v1489 = vpop.f32.mrb[0].mxu0
      %v1490 = vpop.f32.mrb[0].mxu0
      %v1491 = vadd.f32 0.0, %v1490
      %v1492 = vpop.f32.mrb[0].mxu0
      %1493 = vmatprep.mubr.bf16.mxu0 0
      %1494 = vmatmul.mubr.bf16.gmra.mrb[0].mxu0 %v1297
      %v1495 = vpop.f32.mrb[0].mxu0
      %v1496 = vadd.f32 0.0, %v1495
      %v1497 = vpop.f32.mrb[0].mxu0
      %v1498 = vpop.f32.mrb[0].mxu0
      %v1499 = vadd.f32 0.0, %v1498
      %v1500 = vpop.f32.mrb[0].mxu0
      %1501 = vmatprep.mubr.bf16.mxu0 0
      %1502 = vmatmul.mubr.bf16.gmra.mrb[0].mxu0 %v1298
      %v1503 = vpop.f32.mrb[0].mxu0
      %v1504 = vadd.f32 0.0, %v1503
      %v1505 = vpop.f32.mrb[0].mxu0
      %v1506 = vpop.f32.mrb[0].mxu0
      %v1507 = vadd.f32 0.0, %v1506
      %v1508 = vpop.f32.mrb[0].mxu0
      %1509 = vmatprep.mubr.bf16.mxu0 0
      %1510 = vmatmul.mubr.bf16.gmra.mrb[0].mxu0 %v1299
      %v1511 = vpop.f32.mrb[0].mxu0
      %v1512 = vadd.f32 0.0, %v1511
      %v1513 = vpop.f32.mrb[0].mxu0
      %v1514 = vpop.f32.mrb[0].mxu0
      %v1515 = vadd.f32 0.0, %v1514
      %v1516 = vpop.f32.mrb[0].mxu0
      %1517 = vmatprep.mubr.bf16.mxu0 0
      %1518 = vmatmul.mubr.bf16.gmra.mrb[0].mxu0 %v1300
      %v1519 = vpop.f32.mrb[0].mxu0
      %v1520 = vadd.f32 0.0, %v1519
      %v1521 = vpop.f32.mrb[0].mxu0
      %v1522 = vpop.f32.mrb[0].mxu0
      %v1523 = vadd.f32 0.0, %v1522
      %v1524 = vpop.f32.mrb[0].mxu0
      %1525 = vdwg.mxu0
      %v1542 = vunpack.c.l.b16 %v781
      %v1543 = vunpack.c.l.b16 %v782
      %v1544 = vunpack.c.l.b16 %v783
      %v1545 = vunpack.c.l.b16 %v784
      %v1546 = vunpack.c.l.b16 %v785
      %v1547 = vunpack.c.l.b16 %v786
      %v1548 = vunpack.c.l.b16 %v787
      %v1549 = vunpack.c.l.b16 %v788
      %v1550 = vunpack.c.l.b16 %v789
      %v1551 = vunpack.c.l.b16 %v790
      %v1552 = vunpack.c.l.b16 %v791
      %v1553 = vunpack.c.l.b16 %v792
      %v1554 = vunpack.c.l.b16 %v793
      %v1555 = vunpack.c.l.b16 %v794
      %v1556 = vunpack.c.l.b16 %v795
      %v1557 = vunpack.c.l.b16 %v796
      %v1558 = vpack.c.b16 %v1543, %v1542
      %v1559 = vpack.c.b16 %v1545, %v1544
      %v1560 = vpack.c.b16 %v1547, %v1546
      %v1561 = vpack.c.b16 %v1549, %v1548
      %v1562 = vpack.c.b16 %v1551, %v1550
      %v1563 = vpack.c.b16 %v1553, %v1552
      %v1564 = vpack.c.b16 %v1555, %v1554
      %v1565 = vpack.c.b16 %v1557, %v1556
      %1574 = vmatprep.subr.bf16.mxu0 0
      %1575 = vmatpush1.bf16.msra.mxu0 %v1558
      %1576 = vmatprep.subr.bf16.mxu0 0
      %1577 = vmatpush1.bf16.msra.mxu0 %v1559
      %1578 = vmatprep.subr.bf16.mxu0 0
      %1579 = vmatpush1.bf16.msra.mxu0 %v1560
      %1580 = vmatprep.subr.bf16.mxu0 0
      %1581 = vmatpush1.bf16.msra.mxu0 %v1561
      %1582 = vmatprep.subr.bf16.mxu0 0
      %1583 = vmatpush1.bf16.msra.mxu0 %v1562
      %1584 = vmatprep.subr.bf16.mxu0 0
      %1585 = vmatpush1.bf16.msra.mxu0 %v1563
      %1586 = vmatprep.subr.bf16.mxu0 0
      %1587 = vmatpush1.bf16.msra.mxu0 %v1564
      %1588 = vmatprep.subr.bf16.mxu0 0
      %1589 = vmatpush1.bf16.msra.mxu0 %v1565
      %1590 = vmatprep.subr.bf16.mxu0 0
      %1591 = vmatpush1.bf16.msra.mxu0 0
      %1592 = vmatprep.subr.bf16.mxu0 0
      %1593 = vmatpush1.bf16.msra.mxu0 0
      %1594 = vmatprep.subr.bf16.mxu0 0
      %1595 = vmatpush1.bf16.msra.mxu0 0
      %1596 = vmatprep.subr.bf16.mxu0 0
      %1597 = vmatpush1.bf16.msra.mxu0 0
      %1598 = vmatprep.subr.bf16.mxu0 0
      %1599 = vmatpush1.bf16.msra.mxu0 0
      %1600 = vmatprep.subr.bf16.mxu0 0
      %1601 = vmatpush1.bf16.msra.mxu0 0
      %1602 = vmatprep.subr.bf16.mxu0 0
      %1603 = vmatpush1.bf16.msra.mxu0 0
      %1604 = vmatprep.subr.bf16.mxu0 0
      %1605 = vmatpush1.bf16.msra.mxu0 0
      %1606 = vmatprep.mubr.bf16.mxu0 0
      %1607 = vmatmul.mubr.bf16.gmra.mrb[0].mxu0 %v765
      %v1608 = vpop.f32.mrb[0].mxu0
      %v1609 = vadd.f32 %v1400, %v1608
      %v1610 = vpop.f32.mrb[0].mxu0
      %v1611 = vpop.f32.mrb[0].mxu0
      %v1612 = vadd.f32 %v1403, %v1611
      %v1613 = vpop.f32.mrb[0].mxu0
      %1614 = vmatprep.mubr.bf16.mxu0 0
      %1615 = vmatmul.mubr.bf16.gmra.mrb[0].mxu0 %v766
      %v1616 = vpop.f32.mrb[0].mxu0
      %v1617 = vadd.f32 %v1408, %v1616
      %v1618 = vpop.f32.mrb[0].mxu0
      %v1619 = vpop.f32.mrb[0].mxu0
      %v1620 = vadd.f32 %v1411, %v1619
      %v1621 = vpop.f32.mrb[0].mxu0
      %1622 = vmatprep.mubr.bf16.mxu0 0
      %1623 = vmatmul.mubr.bf16.gmra.mrb[0].mxu0 %v767
      %v1624 = vpop.f32.mrb[0].mxu0
      %v1625 = vadd.f32 %v1416, %v1624
      %v1626 = vpop.f32.mrb[0].mxu0
      %v1627 = vpop.f32.mrb[0].mxu0
      %v1628 = vadd.f32 %v1419, %v1627
      %v1629 = vpop.f32.mrb[0].mxu0
      %1630 = vmatprep.mubr.bf16.mxu0 0
      %1631 = vmatmul.mubr.bf16.gmra.mrb[0].mxu0 %v768
      %v1632 = vpop.f32.mrb[0].mxu0
      %v1633 = vadd.f32 %v1424, %v1632
      %v1634 = vpop.f32.mrb[0].mxu0
      %v1635 = vpop.f32.mrb[0].mxu0
      %v1636 = vadd.f32 %v1427, %v1635
      %v1637 = vpop.f32.mrb[0].mxu0
      %1638 = vmatprep.mubr.bf16.mxu0 0
      %1639 = vmatmul.mubr.bf16.gmra.mrb[0].mxu0 %v769
      %v1640 = vpop.f32.mrb[0].mxu0
      %v1641 = vadd.f32 %v1432, %v1640
      %v1642 = vpop.f32.mrb[0].mxu0
      %v1643 = vpop.f32.mrb[0].mxu0
      %v1644 = vadd.f32 %v1435, %v1643
      %v1645 = vpop.f32.mrb[0].mxu0
      %1646 = vmatprep.mubr.bf16.mxu0 0
      %1647 = vmatmul.mubr.bf16.gmra.mrb[0].mxu0 %v770
      %v1648 = vpop.f32.mrb[0].mxu0
      %v1649 = vadd.f32 %v1440, %v1648
      %v1650 = vpop.f32.mrb[0].mxu0
      %v1651 = vpop.f32.mrb[0].mxu0
      %v1652 = vadd.f32 %v1443, %v1651
      %v1653 = vpop.f32.mrb[0].mxu0
      %1654 = vmatprep.mubr.bf16.mxu0 0
      %1655 = vmatmul.mubr.bf16.gmra.mrb[0].mxu0 %v771
      %v1656 = vpop.f32.mrb[0].mxu0
      %v1657 = vadd.f32 %v1448, %v1656
      %v1658 = vpop.f32.mrb[0].mxu0
      %v1659 = vpop.f32.mrb[0].mxu0
      %v1660 = vadd.f32 %v1451, %v1659
      %v1661 = vpop.f32.mrb[0].mxu0
      %1662 = vmatprep.mubr.bf16.mxu0 0
      %1663 = vmatmul.mubr.bf16.gmra.mrb[0].mxu0 %v772
      %v1664 = vpop.f32.mrb[0].mxu0
      %v1665 = vadd.f32 %v1456, %v1664
      %v1666 = vpop.f32.mrb[0].mxu0
      %v1667 = vpop.f32.mrb[0].mxu0
      %v1668 = vadd.f32 %v1459, %v1667
      %v1669 = vpop.f32.mrb[0].mxu0
      %1670 = vmatprep.mubr.bf16.mxu0 0
      %1671 = vmatmul.mubr.bf16.gmra.mrb[0].mxu0 %v773
      %v1672 = vpop.f32.mrb[0].mxu0
      %v1673 = vadd.f32 %v1464, %v1672
      %v1674 = vpop.f32.mrb[0].mxu0
      %v1675 = vpop.f32.mrb[0].mxu0
      %v1676 = vadd.f32 %v1467, %v1675
      %v1677 = vpop.f32.mrb[0].mxu0
      %1678 = vmatprep.mubr.bf16.mxu0 0
      %1679 = vmatmul.mubr.bf16.gmra.mrb[0].mxu0 %v774
      %v1680 = vpop.f32.mrb[0].mxu0
      %v1681 = vadd.f32 %v1472, %v1680
      %v1682 = vpop.f32.mrb[0].mxu0
      %v1683 = vpop.f32.mrb[0].mxu0
      %v1684 = vadd.f32 %v1475, %v1683
      %v1685 = vpop.f32.mrb[0].mxu0
      %1686 = vmatprep.mubr.bf16.mxu0 0
      %1687 = vmatmul.mubr.bf16.gmra.mrb[0].mxu0 %v775
      %v1688 = vpop.f32.mrb[0].mxu0
      %v1689 = vadd.f32 %v1480, %v1688
      %v1690 = vpop.f32.mrb[0].mxu0
      %v1691 = vpop.f32.mrb[0].mxu0
      %v1692 = vadd.f32 %v1483, %v1691
      %v1693 = vpop.f32.mrb[0].mxu0
      %1694 = vmatprep.mubr.bf16.mxu0 0
      %1695 = vmatmul.mubr.bf16.gmra.mrb[0].mxu0 %v776
      %v1696 = vpop.f32.mrb[0].mxu0
      %v1697 = vadd.f32 %v1488, %v1696
      %v1698 = vpop.f32.mrb[0].mxu0
      %v1699 = vpop.f32.mrb[0].mxu0
      %v1700 = vadd.f32 %v1491, %v1699
      %v1701 = vpop.f32.mrb[0].mxu0
      %1702 = vmatprep.mubr.bf16.mxu0 0
      %1703 = vmatmul.mubr.bf16.gmra.mrb[0].mxu0 %v777
      %v1704 = vpop.f32.mrb[0].mxu0
      %v1705 = vadd.f32 %v1496, %v1704
      %v1706 = vpop.f32.mrb[0].mxu0
      %v1707 = vpop.f32.mrb[0].mxu0
      %v1708 = vadd.f32 %v1499, %v1707
      %v1709 = vpop.f32.mrb[0].mxu0
      %1710 = vmatprep.mubr.bf16.mxu0 0
      %1711 = vmatmul.mubr.bf16.gmra.mrb[0].mxu0 %v778
      %v1712 = vpop.f32.mrb[0].mxu0
      %v1713 = vadd.f32 %v1504, %v1712
      %v1714 = vpop.f32.mrb[0].mxu0
      %v1715 = vpop.f32.mrb[0].mxu0
      %v1716 = vadd.f32 %v1507, %v1715
      %v1717 = vpop.f32.mrb[0].mxu0
      %1718 = vmatprep.mubr.bf16.mxu0 0
      %1719 = vmatmul.mubr.bf16.gmra.mrb[0].mxu0 %v779
      %v1720 = vpop.f32.mrb[0].mxu0
      %v1721 = vadd.f32 %v1512, %v1720
      %v1722 = vpop.f32.mrb[0].mxu0
      %v1723 = vpop.f32.mrb[0].mxu0
      %v1724 = vadd.f32 %v1515, %v1723
      %v1725 = vpop.f32.mrb[0].mxu0
      %1726 = vmatprep.mubr.bf16.mxu0 0
      %1727 = vmatmul.mubr.bf16.gmra.mrb[0].mxu0 %v780
      %v1728 = vpop.f32.mrb[0].mxu0
      %v1729 = vadd.f32 %v1520, %v1728
      %v1730 = vpop.f32.mrb[0].mxu0
      %v1731 = vpop.f32.mrb[0].mxu0
      %v1732 = vadd.f32 %v1523, %v1731
      %v1733 = vpop.f32.mrb[0].mxu0
      %1734 = vdwg.mxu0
      %v1735 = vld [vmem:[%s1 + $0x8] sm:$0xf]
      %v1736 = vld [vmem:[%s1 + $0x20] sm:$0xf]
      %v1737 = vld [vmem:[%s1 + $0x38] sm:$0xf]
      %v1738 = vld [vmem:[%s1 + $0x50] sm:$0xf]
      %v1739 = vld [vmem:[%s1 + $0x68] sm:$0xf]
      %v1740 = vld [vmem:[%s1 + $0x80] sm:$0xf]
      %v1741 = vld [vmem:[%s1 + $0x98] sm:$0xf]
      %v1742 = vld [vmem:[%s1 + $0xb0] sm:$0xf]
      %v1743 = vld [vmem:[%s1 + $0xc8] sm:$0xf]
      %v1744 = vld [vmem:[%s1 + $0xe0] sm:$0xf]
      %v1745 = vld [vmem:[%s1 + $0xf8] sm:$0xf]
      %v1746 = vld [vmem:[%s1 + $0x110] sm:$0xf]
      %v1747 = vld [vmem:[%s1 + $0x128] sm:$0xf]
      %v1748 = vld [vmem:[%s1 + $0x140] sm:$0xf]
      %v1749 = vld [vmem:[%s1 + $0x158] sm:$0xf]
      %v1750 = vld [vmem:[%s1 + $0x170] sm:$0xf]
      %v1751 = vld [vmem:[%s2 + $0x2] sm:$0x1]
      %v1753 = vlaneseq
      %v1754 = vshrl.u32 %v1753, 7
      %v1755 = vsub.s32 0, %v1754
      %v1756 = vrot.slane %v1751, %v1755
      %v1774 = vunpack.c.l.b16 %v1735
      %v1775 = vunpack.c.l.b16 %v1736
      %v1776 = vunpack.c.l.b16 %v1737
      %v1777 = vunpack.c.l.b16 %v1738
      %v1778 = vunpack.c.l.b16 %v1739
      %v1779 = vunpack.c.l.b16 %v1740
      %v1780 = vunpack.c.l.b16 %v1741
      %v1781 = vunpack.c.l.b16 %v1742
      %v1782 = vunpack.c.l.b16 %v1743
      %v1783 = vunpack.c.l.b16 %v1744
      %v1784 = vunpack.c.l.b16 %v1745
      %v1785 = vunpack.c.l.b16 %v1746
      %v1786 = vunpack.c.l.b16 %v1747
      %v1787 = vunpack.c.l.b16 %v1748
      %v1788 = vunpack.c.l.b16 %v1749
      %v1789 = vunpack.c.l.b16 %v1750
      %v1790 = vpack.c.b16 %v1775, %v1774
      %v1791 = vpack.c.b16 %v1777, %v1776
      %v1792 = vpack.c.b16 %v1779, %v1778
      %v1793 = vpack.c.b16 %v1781, %v1780
      %v1794 = vpack.c.b16 %v1783, %v1782
      %v1795 = vpack.c.b16 %v1785, %v1784
      %v1796 = vpack.c.b16 %v1787, %v1786
      %v1797 = vpack.c.b16 %v1789, %v1788
      %1806 = vmatprep.subr.bf16.mxu0 0
      %1807 = vmatpush1.bf16.msra.mxu0 %v1790
      %1808 = vmatprep.subr.bf16.mxu0 0
      %1809 = vmatpush1.bf16.msra.mxu0 %v1791
      %1810 = vmatprep.subr.bf16.mxu0 0
      %1811 = vmatpush1.bf16.msra.mxu0 %v1792
      %1812 = vmatprep.subr.bf16.mxu0 0
      %1813 = vmatpush1.bf16.msra.mxu0 %v1793
      %1814 = vmatprep.subr.bf16.mxu0 0
      %1815 = vmatpush1.bf16.msra.mxu0 %v1794
      %1816 = vmatprep.subr.bf16.mxu0 0
      %1817 = vmatpush1.bf16.msra.mxu0 %v1795
      %1818 = vmatprep.subr.bf16.mxu0 0
      %1819 = vmatpush1.bf16.msra.mxu0 %v1796
      %1820 = vmatprep.subr.bf16.mxu0 0
      %1821 = vmatpush1.bf16.msra.mxu0 %v1797
      %1822 = vmatprep.subr.bf16.mxu0 0
      %1823 = vmatpush1.bf16.msra.mxu0 0
      %1824 = vmatprep.subr.bf16.mxu0 0
      %1825 = vmatpush1.bf16.msra.mxu0 0
      %1826 = vmatprep.subr.bf16.mxu0 0
      %1827 = vmatpush1.bf16.msra.mxu0 0
      %1828 = vmatprep.subr.bf16.mxu0 0
      %1829 = vmatpush1.bf16.msra.mxu0 0
      %1830 = vmatprep.subr.bf16.mxu0 0
      %1831 = vmatpush1.bf16.msra.mxu0 0
      %1832 = vmatprep.subr.bf16.mxu0 0
      %1833 = vmatpush1.bf16.msra.mxu0 0
      %1834 = vmatprep.subr.bf16.mxu0 0
      %1835 = vmatpush1.bf16.msra.mxu0 0
      %1836 = vmatprep.subr.bf16.mxu0 0
      %1837 = vmatpush1.bf16.msra.mxu0 0
      %1838 = vmatprep.mubr.bf16.mxu0 0
      %1839 = vmatmul.mubr.bf16.gmra.mrb[0].mxu0 %v261
      %v1840 = vpop.f32.mrb[0].mxu0
      %v1841 = vadd.f32 %v1756, %v1840
      %v1842 = vpop.f32.mrb[0].mxu0
      %v1843 = vpop.f32.mrb[0].mxu0
      %v1844 = vadd.f32 %v1756, %v1843
      %v1845 = vpop.f32.mrb[0].mxu0
      %1846 = vmatprep.mubr.bf16.mxu0 0
      %1847 = vmatmul.mubr.bf16.gmra.mrb[0].mxu0 %v262
      %v1848 = vpop.f32.mrb[0].mxu0
      %v1849 = vadd.f32 %v1756, %v1848
      %v1850 = vpop.f32.mrb[0].mxu0
      %v1851 = vpop.f32.mrb[0].mxu0
      %v1852 = vadd.f32 %v1756, %v1851
      %v1853 = vpop.f32.mrb[0].mxu0
      %1854 = vmatprep.mubr.bf16.mxu0 0
      %1855 = vmatmul.mubr.bf16.gmra.mrb[0].mxu0 %v263
      %v1856 = vpop.f32.mrb[0].mxu0
      %v1857 = vadd.f32 %v1756, %v1856
      %v1858 = vpop.f32.mrb[0].mxu0
      %v1859 = vpop.f32.mrb[0].mxu0
      %v1860 = vadd.f32 %v1756, %v1859
      %v1861 = vpop.f32.mrb[0].mxu0
      %1862 = vmatprep.mubr.bf16.mxu0 0
      %1863 = vmatmul.mubr.bf16.gmra.mrb[0].mxu0 %v264
      %v1864 = vpop.f32.mrb[0].mxu0
      %v1865 = vadd.f32 %v1756, %v1864
      %v1866 = vpop.f32.mrb[0].mxu0
      %v1867 = vpop.f32.mrb[0].mxu0
      %v1868 = vadd.f32 %v1756, %v1867
      %v1869 = vpop.f32.mrb[0].mxu0
      %1870 = vmatprep.mubr.bf16.mxu0 0
      %1871 = vmatmul.mubr.bf16.gmra.mrb[0].mxu0 %v265
      %v1872 = vpop.f32.mrb[0].mxu0
      %v1873 = vadd.f32 %v1756, %v1872
      %v1874 = vpop.f32.mrb[0].mxu0
      %v1875 = vpop.f32.mrb[0].mxu0
      %v1876 = vadd.f32 %v1756, %v1875
      %v1877 = vpop.f32.mrb[0].mxu0
      %1878 = vmatprep.mubr.bf16.mxu0 0
      %1879 = vmatmul.mubr.bf16.gmra.mrb[0].mxu0 %v266
      %v1880 = vpop.f32.mrb[0].mxu0
      %v1881 = vadd.f32 %v1756, %v1880
      %v1882 = vpop.f32.mrb[0].mxu0
      %v1883 = vpop.f32.mrb[0].mxu0
      %v1884 = vadd.f32 %v1756, %v1883
      %v1885 = vpop.f32.mrb[0].mxu0
      %1886 = vmatprep.mubr.bf16.mxu0 0
      %1887 = vmatmul.mubr.bf16.gmra.mrb[0].mxu0 %v267
      %v1888 = vpop.f32.mrb[0].mxu0
      %v1889 = vadd.f32 %v1756, %v1888
      %v1890 = vpop.f32.mrb[0].mxu0
      %v1891 = vpop.f32.mrb[0].mxu0
      %v1892 = vadd.f32 %v1756, %v1891
      %v1893 = vpop.f32.mrb[0].mxu0
      %1894 = vmatprep.mubr.bf16.mxu0 0
      %1895 = vmatmul.mubr.bf16.gmra.mrb[0].mxu0 %v268
      %v1896 = vpop.f32.mrb[0].mxu0
      %v1897 = vadd.f32 %v1756, %v1896
      %v1898 = vpop.f32.mrb[0].mxu0
      %v1899 = vpop.f32.mrb[0].mxu0
      %v1900 = vadd.f32 %v1756, %v1899
      %v1901 = vpop.f32.mrb[0].mxu0
      %1902 = vmatprep.mubr.bf16.mxu0 0
      %1903 = vmatmul.mubr.bf16.gmra.mrb[0].mxu0 %v269
      %v1904 = vpop.f32.mrb[0].mxu0
      %v1905 = vadd.f32 %v1756, %v1904
      %v1906 = vpop.f32.mrb[0].mxu0
      %v1907 = vpop.f32.mrb[0].mxu0
      %v1908 = vadd.f32 %v1756, %v1907
      %v1909 = vpop.f32.mrb[0].mxu0
      %1910 = vmatprep.mubr.bf16.mxu0 0
      %1911 = vmatmul.mubr.bf16.gmra.mrb[0].mxu0 %v270
      %v1912 = vpop.f32.mrb[0].mxu0
      %v1913 = vadd.f32 %v1756, %v1912
      %v1914 = vpop.f32.mrb[0].mxu0
      %v1915 = vpop.f32.mrb[0].mxu0
      %v1916 = vadd.f32 %v1756, %v1915
      %v1917 = vpop.f32.mrb[0].mxu0
      %1918 = vmatprep.mubr.bf16.mxu0 0
      %1919 = vmatmul.mubr.bf16.gmra.mrb[0].mxu0 %v271
      %v1920 = vpop.f32.mrb[0].mxu0
      %v1921 = vadd.f32 %v1756, %v1920
      %v1922 = vpop.f32.mrb[0].mxu0
      %v1923 = vpop.f32.mrb[0].mxu0
      %v1924 = vadd.f32 %v1756, %v1923
      %v1925 = vpop.f32.mrb[0].mxu0
      %1926 = vmatprep.mubr.bf16.mxu0 0
      %1927 = vmatmul.mubr.bf16.gmra.mrb[0].mxu0 %v272
      %v1928 = vpop.f32.mrb[0].mxu0
      %v1929 = vadd.f32 %v1756, %v1928
      %v1930 = vpop.f32.mrb[0].mxu0
      %v1931 = vpop.f32.mrb[0].mxu0
      %v1932 = vadd.f32 %v1756, %v1931
      %v1933 = vpop.f32.mrb[0].mxu0
      %1934 = vmatprep.mubr.bf16.mxu0 0
      %1935 = vmatmul.mubr.bf16.gmra.mrb[0].mxu0 %v273
      %v1936 = vpop.f32.mrb[0].mxu0
      %v1937 = vadd.f32 %v1756, %v1936
      %v1938 = vpop.f32.mrb[0].mxu0
      %v1939 = vpop.f32.mrb[0].mxu0
      %v1940 = vadd.f32 %v1756, %v1939
      %v1941 = vpop.f32.mrb[0].mxu0
      %1942 = vmatprep.mubr.bf16.mxu0 0
      %1943 = vmatmul.mubr.bf16.gmra.mrb[0].mxu0 %v274
      %v1944 = vpop.f32.mrb[0].mxu0
      %v1945 = vadd.f32 %v1756, %v1944
      %v1946 = vpop.f32.mrb[0].mxu0
      %v1947 = vpop.f32.mrb[0].mxu0
      %v1948 = vadd.f32 %v1756, %v1947
      %v1949 = vpop.f32.mrb[0].mxu0
      %1950 = vmatprep.mubr.bf16.mxu0 0
      %1951 = vmatmul.mubr.bf16.gmra.mrb[0].mxu0 %v275
      %v1952 = vpop.f32.mrb[0].mxu0
      %v1953 = vadd.f32 %v1756, %v1952
      %v1954 = vpop.f32.mrb[0].mxu0
      %v1955 = vpop.f32.mrb[0].mxu0
      %v1956 = vadd.f32 %v1756, %v1955
      %v1957 = vpop.f32.mrb[0].mxu0
      %1958 = vmatprep.mubr.bf16.mxu0 0
      %1959 = vmatmul.mubr.bf16.gmra.mrb[0].mxu0 %v276
      %v1960 = vpop.f32.mrb[0].mxu0
      %v1961 = vadd.f32 %v1756, %v1960
      %v1962 = vpop.f32.mrb[0].mxu0
      %v1963 = vpop.f32.mrb[0].mxu0
      %v1964 = vadd.f32 %v1756, %v1963
      %v1965 = vpop.f32.mrb[0].mxu0
      %1966 = vdwg.mxu0
      %v1967 = vmul.f32 %v1841, 1.702
      %v1968 = vmul.f32 %v1844, 1.702
      %v1969 = vmul.f32 %v1849, 1.702
      %v1970 = vmul.f32 %v1852, 1.702
      %v1971 = vmul.f32 %v1857, 1.702
      %v1972 = vmul.f32 %v1860, 1.702
      %v1973 = vmul.f32 %v1865, 1.702
      %v1974 = vmul.f32 %v1868, 1.702
      %v1975 = vmul.f32 %v1873, 1.702
      %v1976 = vmul.f32 %v1876, 1.702
      %v1977 = vmul.f32 %v1881, 1.702
      %v1978 = vmul.f32 %v1884, 1.702
      %v1979 = vmul.f32 %v1889, 1.702
      %v1980 = vmul.f32 %v1892, 1.702
      %v1981 = vmul.f32 %v1897, 1.702
      %v1982 = vmul.f32 %v1900, 1.702
      %v1983 = vmul.f32 %v1905, 1.702
      %v1984 = vmul.f32 %v1908, 1.702
      %v1985 = vmul.f32 %v1913, 1.702
      %v1986 = vmul.f32 %v1916, 1.702
      %v1987 = vmul.f32 %v1921, 1.702
      %v1988 = vmul.f32 %v1924, 1.702
      %v1989 = vmul.f32 %v1929, 1.702
      %v1990 = vmul.f32 %v1932, 1.702
      %v1991 = vmul.f32 %v1937, 1.702
      %v1992 = vmul.f32 %v1940, 1.702
      %v1993 = vmul.f32 %v1945, 1.702
      %v1994 = vmul.f32 %v1948, 1.702
      %v1995 = vmul.f32 %v1953, 1.702
      %v1996 = vmul.f32 %v1956, 1.702
      %v1997 = vmul.f32 %v1961, 1.702
      %v1998 = vmul.f32 %v1964, 1.702
      %v1999 = vxor.u32 %v1967, 2147483648
      %v2000 = vxor.u32 %v1968, 2147483648
      %v2001 = vxor.u32 %v1969, 2147483648
      %v2002 = vxor.u32 %v1970, 2147483648
      %v2003 = vxor.u32 %v1971, 2147483648
      %v2004 = vxor.u32 %v1972, 2147483648
      %v2005 = vxor.u32 %v1973, 2147483648
      %v2006 = vxor.u32 %v1974, 2147483648
      %v2007 = vxor.u32 %v1975, 2147483648
      %v2008 = vxor.u32 %v1976, 2147483648
      %v2009 = vxor.u32 %v1977, 2147483648
      %v2010 = vxor.u32 %v1978, 2147483648
      %v2011 = vxor.u32 %v1979, 2147483648
      %v2012 = vxor.u32 %v1980, 2147483648
      %v2013 = vxor.u32 %v1981, 2147483648
      %v2014 = vxor.u32 %v1982, 2147483648
      %v2015 = vxor.u32 %v1983, 2147483648
      %v2016 = vxor.u32 %v1984, 2147483648
      %v2017 = vxor.u32 %v1985, 2147483648
      %v2018 = vxor.u32 %v1986, 2147483648
      %v2019 = vxor.u32 %v1987, 2147483648
      %v2020 = vxor.u32 %v1988, 2147483648
      %v2021 = vxor.u32 %v1989, 2147483648
      %v2022 = vxor.u32 %v1990, 2147483648
      %v2023 = vxor.u32 %v1991, 2147483648
      %v2024 = vxor.u32 %v1992, 2147483648
      %v2025 = vxor.u32 %v1993, 2147483648
      %v2026 = vxor.u32 %v1994, 2147483648
      %v2027 = vxor.u32 %v1995, 2147483648
      %v2028 = vxor.u32 %v1996, 2147483648
      %v2029 = vxor.u32 %v1997, 2147483648
      %v2030 = vxor.u32 %v1998, 2147483648
      %v2031 = vmul.f32 %v1999, 1.442695
      %v2032 = vpow.pop %v2031
      %v2033 = vmul.f32 %v2000, 1.442695
      %v2034 = vpow.pop %v2033
      %v2035 = vmul.f32 %v2001, 1.442695
      %v2036 = vpow.pop %v2035
      %v2037 = vmul.f32 %v2002, 1.442695
      %v2038 = vpow.pop %v2037
      %v2039 = vmul.f32 %v2003, 1.442695
      %v2040 = vpow.pop %v2039
      %v2041 = vmul.f32 %v2004, 1.442695
      %v2042 = vpow.pop %v2041
      %v2043 = vmul.f32 %v2005, 1.442695
      %v2044 = vpow.pop %v2043
      %v2045 = vmul.f32 %v2006, 1.442695
      %v2046 = vpow.pop %v2045
      %v2047 = vmul.f32 %v2007, 1.442695
      %v2048 = vpow.pop %v2047
      %v2049 = vmul.f32 %v2008, 1.442695
      %v2050 = vpow.pop %v2049
      %v2051 = vmul.f32 %v2009, 1.442695
      %v2052 = vpow.pop %v2051
      %v2053 = vmul.f32 %v2010, 1.442695
      %v2054 = vpow.pop %v2053
      %v2055 = vmul.f32 %v2011, 1.442695
      %v2056 = vpow.pop %v2055
      %v2057 = vmul.f32 %v2012, 1.442695
      %v2058 = vpow.pop %v2057
      %v2059 = vmul.f32 %v2013, 1.442695
      %v2060 = vpow.pop %v2059
      %v2061 = vmul.f32 %v2014, 1.442695
      %v2062 = vpow.pop %v2061
      %v2063 = vmul.f32 %v2015, 1.442695
      %v2064 = vpow.pop %v2063
      %v2065 = vmul.f32 %v2016, 1.442695
      %v2066 = vpow.pop %v2065
      %v2067 = vmul.f32 %v2017, 1.442695
      %v2068 = vpow.pop %v2067
      %v2069 = vmul.f32 %v2018, 1.442695
      %v2070 = vpow.pop %v2069
      %v2071 = vmul.f32 %v2019, 1.442695
      %v2072 = vpow.pop %v2071
      %v2073 = vmul.f32 %v2020, 1.442695
      %v2074 = vpow.pop %v2073
      %v2075 = vmul.f32 %v2021, 1.442695
      %v2076 = vpow.pop %v2075
      %v2077 = vmul.f32 %v2022, 1.442695
      %v2078 = vpow.pop %v2077
      %v2079 = vmul.f32 %v2023, 1.442695
      %v2080 = vpow.pop %v2079
      %v2081 = vmul.f32 %v2024, 1.442695
      %v2082 = vpow.pop %v2081
      %v2083 = vmul.f32 %v2025, 1.442695
      %v2084 = vpow.pop %v2083
      %v2085 = vmul.f32 %v2026, 1.442695
      %v2086 = vpow.pop %v2085
      %v2087 = vmul.f32 %v2027, 1.442695
      %v2088 = vpow.pop %v2087
      %v2089 = vmul.f32 %v2028, 1.442695
      %v2090 = vpow.pop %v2089
      %v2091 = vmul.f32 %v2029, 1.442695
      %v2092 = vpow.pop %v2091
      %v2093 = vmul.f32 %v2030, 1.442695
      %v2094 = vpow.pop %v2093
      %v2095 = vadd.f32 %v2032, 1.0
      %v2096 = vadd.f32 %v2034, 1.0
      %v2097 = vadd.f32 %v2036, 1.0
      %v2098 = vadd.f32 %v2038, 1.0
      %v2099 = vadd.f32 %v2040, 1.0
      %v2100 = vadd.f32 %v2042, 1.0
      %v2101 = vadd.f32 %v2044, 1.0
      %v2102 = vadd.f32 %v2046, 1.0
      %v2103 = vadd.f32 %v2048, 1.0
      %v2104 = vadd.f32 %v2050, 1.0
      %v2105 = vadd.f32 %v2052, 1.0
      %v2106 = vadd.f32 %v2054, 1.0
      %v2107 = vadd.f32 %v2056, 1.0
      %v2108 = vadd.f32 %v2058, 1.0
      %v2109 = vadd.f32 %v2060, 1.0
      %v2110 = vadd.f32 %v2062, 1.0
      %v2111 = vadd.f32 %v2064, 1.0
      %v2112 = vadd.f32 %v2066, 1.0
      %v2113 = vadd.f32 %v2068, 1.0
      %v2114 = vadd.f32 %v2070, 1.0
      %v2115 = vadd.f32 %v2072, 1.0
      %v2116 = vadd.f32 %v2074, 1.0
      %v2117 = vadd.f32 %v2076, 1.0
      %v2118 = vadd.f32 %v2078, 1.0
      %v2119 = vadd.f32 %v2080, 1.0
      %v2120 = vadd.f32 %v2082, 1.0
      %v2121 = vadd.f32 %v2084, 1.0
      %v2122 = vadd.f32 %v2086, 1.0
      %v2123 = vadd.f32 %v2088, 1.0
      %v2124 = vadd.f32 %v2090, 1.0
      %v2125 = vadd.f32 %v2092, 1.0
      %v2126 = vadd.f32 %v2094, 1.0
      %v2127 = vrcp.pop %v2095
      %v2128 = vmul.f32 1.0, %v2127
      %v2129 = vrcp.pop %v2096
      %v2130 = vmul.f32 1.0, %v2129
      %v2131 = vrcp.pop %v2097
      %v2132 = vmul.f32 1.0, %v2131
      %v2133 = vrcp.pop %v2098
      %v2134 = vmul.f32 1.0, %v2133
      %v2135 = vrcp.pop %v2099
      %v2136 = vmul.f32 1.0, %v2135
      %v2137 = vrcp.pop %v2100
      %v2138 = vmul.f32 1.0, %v2137
      %v2139 = vrcp.pop %v2101
      %v2140 = vmul.f32 1.0, %v2139
      %v2141 = vrcp.pop %v2102
      %v2142 = vmul.f32 1.0, %v2141
      %v2143 = vrcp.pop %v2103
      %v2144 = vmul.f32 1.0, %v2143
      %v2145 = vrcp.pop %v2104
      %v2146 = vmul.f32 1.0, %v2145
      %v2147 = vrcp.pop %v2105
      %v2148 = vmul.f32 1.0, %v2147
      %v2149 = vrcp.pop %v2106
      %v2150 = vmul.f32 1.0, %v2149
      %v2151 = vrcp.pop %v2107
      %v2152 = vmul.f32 1.0, %v2151
      %v2153 = vrcp.pop %v2108
      %v2154 = vmul.f32 1.0, %v2153
      %v2155 = vrcp.pop %v2109
      %v2156 = vmul.f32 1.0, %v2155
      %v2157 = vrcp.pop %v2110
      %v2158 = vmul.f32 1.0, %v2157
      %v2159 = vrcp.pop %v2111
      %v2160 = vmul.f32 1.0, %v2159
      %v2161 = vrcp.pop %v2112
      %v2162 = vmul.f32 1.0, %v2161
      %v2163 = vrcp.pop %v2113
      %v2164 = vmul.f32 1.0, %v2163
      %v2165 = vrcp.pop %v2114
      %v2166 = vmul.f32 1.0, %v2165
      %v2167 = vrcp.pop %v2115
      %v2168 = vmul.f32 1.0, %v2167
      %v2169 = vrcp.pop %v2116
      %v2170 = vmul.f32 1.0, %v2169
      %v2171 = vrcp.pop %v2117
      %v2172 = vmul.f32 1.0, %v2171
      %v2173 = vrcp.pop %v2118
      %v2174 = vmul.f32 1.0, %v2173
      %v2175 = vrcp.pop %v2119
      %v2176 = vmul.f32 1.0, %v2175
      %v2177 = vrcp.pop %v2120
      %v2178 = vmul.f32 1.0, %v2177
      %v2179 = vrcp.pop %v2121
      %v2180 = vmul.f32 1.0, %v2179
      %v2181 = vrcp.pop %v2122
      %v2182 = vmul.f32 1.0, %v2181
      %v2183 = vrcp.pop %v2123
      %v2184 = vmul.f32 1.0, %v2183
      %v2185 = vrcp.pop %v2124
      %v2186 = vmul.f32 1.0, %v2185
      %v2187 = vrcp.pop %v2125
      %v2188 = vmul.f32 1.0, %v2187
      %v2189 = vrcp.pop %v2126
      %v2190 = vmul.f32 1.0, %v2189
      %v2191 = vmul.f32 %v1841, %v2128
      %v2192 = vmul.f32 %v1844, %v2130
      %v2193 = vmul.f32 %v1849, %v2132
      %v2194 = vmul.f32 %v1852, %v2134
      %v2195 = vmul.f32 %v1857, %v2136
      %v2196 = vmul.f32 %v1860, %v2138
      %v2197 = vmul.f32 %v1865, %v2140
      %v2198 = vmul.f32 %v1868, %v2142
      %v2199 = vmul.f32 %v1873, %v2144
      %v2200 = vmul.f32 %v1876, %v2146
      %v2201 = vmul.f32 %v1881, %v2148
      %v2202 = vmul.f32 %v1884, %v2150
      %v2203 = vmul.f32 %v1889, %v2152
      %v2204 = vmul.f32 %v1892, %v2154
      %v2205 = vmul.f32 %v1897, %v2156
      %v2206 = vmul.f32 %v1900, %v2158
      %v2207 = vmul.f32 %v1905, %v2160
      %v2208 = vmul.f32 %v1908, %v2162
      %v2209 = vmul.f32 %v1913, %v2164
      %v2210 = vmul.f32 %v1916, %v2166
      %v2211 = vmul.f32 %v1921, %v2168
      %v2212 = vmul.f32 %v1924, %v2170
      %v2213 = vmul.f32 %v1929, %v2172
      %v2214 = vmul.f32 %v1932, %v2174
      %v2215 = vmul.f32 %v1937, %v2176
      %v2216 = vmul.f32 %v1940, %v2178
      %v2217 = vmul.f32 %v1945, %v2180
      %v2218 = vmul.f32 %v1948, %v2182
      %v2219 = vmul.f32 %v1953, %v2184
      %v2220 = vmul.f32 %v1956, %v2186
      %v2221 = vmul.f32 %v1961, %v2188
      %v2222 = vmul.f32 %v1964, %v2190
      %v2223 = vpack.c.bf16 %v2192, %v2191
      %v2224 = vpack.c.bf16 %v2194, %v2193
      %v2225 = vpack.c.bf16 %v2196, %v2195
      %v2226 = vpack.c.bf16 %v2198, %v2197
      %v2227 = vpack.c.bf16 %v2200, %v2199
      %v2228 = vpack.c.bf16 %v2202, %v2201
      %v2229 = vpack.c.bf16 %v2204, %v2203
      %v2230 = vpack.c.bf16 %v2206, %v2205
      %v2231 = vpack.c.bf16 %v2208, %v2207
      %v2232 = vpack.c.bf16 %v2210, %v2209
      %v2233 = vpack.c.bf16 %v2212, %v2211
      %v2234 = vpack.c.bf16 %v2214, %v2213
      %v2235 = vpack.c.bf16 %v2216, %v2215
      %v2236 = vpack.c.bf16 %v2218, %v2217
      %v2237 = vpack.c.bf16 %v2220, %v2219
      %v2238 = vpack.c.bf16 %v2222, %v2221
      %v2239 = vld [vmem:[%s3 + $0x80] sm:$0xf]
      %v2240 = vld [vmem:[%s3 + $0x84] sm:$0xf]
      %v2241 = vld [vmem:[%s3 + $0x88] sm:$0xf]
      %v2242 = vld [vmem:[%s3 + $0x8c] sm:$0xf]
      %v2243 = vld [vmem:[%s3 + $0x90] sm:$0xf]
      %v2244 = vld [vmem:[%s3 + $0x94] sm:$0xf]
      %v2245 = vld [vmem:[%s3 + $0x98] sm:$0xf]
      %v2246 = vld [vmem:[%s3 + $0x9c] sm:$0xf]
      %v2247 = vld [vmem:[%s3 + $0xa0] sm:$0xf]
      %v2248 = vld [vmem:[%s3 + $0xa4] sm:$0xf]
      %v2249 = vld [vmem:[%s3 + $0xa8] sm:$0xf]
      %v2250 = vld [vmem:[%s3 + $0xac] sm:$0xf]
      %v2251 = vld [vmem:[%s3 + $0xb0] sm:$0xf]
      %v2252 = vld [vmem:[%s3 + $0xb4] sm:$0xf]
      %v2253 = vld [vmem:[%s3 + $0xb8] sm:$0xf]
      %v2254 = vld [vmem:[%s3 + $0xbc] sm:$0xf]
      %v2271 = vunpack.c.l.b16 %v2239
      %v2272 = vunpack.c.l.b16 %v2240
      %v2273 = vunpack.c.l.b16 %v2241
      %v2274 = vunpack.c.l.b16 %v2242
      %v2275 = vunpack.c.l.b16 %v2243
      %v2276 = vunpack.c.l.b16 %v2244
      %v2277 = vunpack.c.l.b16 %v2245
      %v2278 = vunpack.c.l.b16 %v2246
      %v2279 = vunpack.c.l.b16 %v2247
      %v2280 = vunpack.c.l.b16 %v2248
      %v2281 = vunpack.c.l.b16 %v2249
      %v2282 = vunpack.c.l.b16 %v2250
      %v2283 = vunpack.c.l.b16 %v2251
      %v2284 = vunpack.c.l.b16 %v2252
      %v2285 = vunpack.c.l.b16 %v2253
      %v2286 = vunpack.c.l.b16 %v2254
      %v2287 = vpack.c.b16 %v2272, %v2271
      %v2288 = vpack.c.b16 %v2274, %v2273
      %v2289 = vpack.c.b16 %v2276, %v2275
      %v2290 = vpack.c.b16 %v2278, %v2277
      %v2291 = vpack.c.b16 %v2280, %v2279
      %v2292 = vpack.c.b16 %v2282, %v2281
      %v2293 = vpack.c.b16 %v2284, %v2283
      %v2294 = vpack.c.b16 %v2286, %v2285
      %2303 = vmatprep.subr.bf16.mxu0 0
      %2304 = vmatpush1.bf16.msra.mxu0 %v2287
      %2305 = vmatprep.subr.bf16.mxu0 0
      %2306 = vmatpush1.bf16.msra.mxu0 %v2288
      %2307 = vmatprep.subr.bf16.mxu0 0
      %2308 = vmatpush1.bf16.msra.mxu0 %v2289
      %2309 = vmatprep.subr.bf16.mxu0 0
      %2310 = vmatpush1.bf16.msra.mxu0 %v2290
      %2311 = vmatprep.subr.bf16.mxu0 0
      %2312 = vmatpush1.bf16.msra.mxu0 %v2291
      %2313 = vmatprep.subr.bf16.mxu0 0
      %2314 = vmatpush1.bf16.msra.mxu0 %v2292
      %2315 = vmatprep.subr.bf16.mxu0 0
      %2316 = vmatpush1.bf16.msra.mxu0 %v2293
      %2317 = vmatprep.subr.bf16.mxu0 0
      %2318 = vmatpush1.bf16.msra.mxu0 %v2294
      %2319 = vmatprep.subr.bf16.mxu0 0
      %2320 = vmatpush1.bf16.msra.mxu0 0
      %2321 = vmatprep.subr.bf16.mxu0 0
      %2322 = vmatpush1.bf16.msra.mxu0 0
      %2323 = vmatprep.subr.bf16.mxu0 0
      %2324 = vmatpush1.bf16.msra.mxu0 0
      %2325 = vmatprep.subr.bf16.mxu0 0
      %2326 = vmatpush1.bf16.msra.mxu0 0
      %2327 = vmatprep.subr.bf16.mxu0 0
      %2328 = vmatpush1.bf16.msra.mxu0 0
      %2329 = vmatprep.subr.bf16.mxu0 0
      %2330 = vmatpush1.bf16.msra.mxu0 0
      %2331 = vmatprep.subr.bf16.mxu0 0
      %2332 = vmatpush1.bf16.msra.mxu0 0
      %2333 = vmatprep.subr.bf16.mxu0 0
      %2334 = vmatpush1.bf16.msra.mxu0 0
      %2335 = vmatprep.mubr.bf16.mxu0 0
      %2336 = vmatmul.mubr.bf16.gmra.mrb[0].mxu0 %v2223
      %v2337 = vpop.f32.mrb[0].mxu0
      %v2338 = vadd.f32 0.0, %v2337
      %v2339 = vpop.f32.mrb[0].mxu0
      %v2340 = vpop.f32.mrb[0].mxu0
      %v2341 = vadd.f32 0.0, %v2340
      %v2342 = vpop.f32.mrb[0].mxu0
      %2343 = vmatprep.mubr.bf16.mxu0 0
      %2344 = vmatmul.mubr.bf16.gmra.mrb[0].mxu0 %v2224
      %v2345 = vpop.f32.mrb[0].mxu0
      %v2346 = vadd.f32 0.0, %v2345
      %v2347 = vpop.f32.mrb[0].mxu0
      %v2348 = vpop.f32.mrb[0].mxu0
      %v2349 = vadd.f32 0.0, %v2348
      %v2350 = vpop.f32.mrb[0].mxu0
      %2351 = vmatprep.mubr.bf16.mxu0 0
      %2352 = vmatmul.mubr.bf16.gmra.mrb[0].mxu0 %v2225
      %v2353 = vpop.f32.mrb[0].mxu0
      %v2354 = vadd.f32 0.0, %v2353
      %v2355 = vpop.f32.mrb[0].mxu0
      %v2356 = vpop.f32.mrb[0].mxu0
      %v2357 = vadd.f32 0.0, %v2356
      %v2358 = vpop.f32.mrb[0].mxu0
      %2359 = vmatprep.mubr.bf16.mxu0 0
      %2360 = vmatmul.mubr.bf16.gmra.mrb[0].mxu0 %v2226
      %v2361 = vpop.f32.mrb[0].mxu0
      %v2362 = vadd.f32 0.0, %v2361
      %v2363 = vpop.f32.mrb[0].mxu0
      %v2364 = vpop.f32.mrb[0].mxu0
      %v2365 = vadd.f32 0.0, %v2364
      %v2366 = vpop.f32.mrb[0].mxu0
      %2367 = vmatprep.mubr.bf16.mxu0 0
      %2368 = vmatmul.mubr.bf16.gmra.mrb[0].mxu0 %v2227
      %v2369 = vpop.f32.mrb[0].mxu0
      %v2370 = vadd.f32 0.0, %v2369
      %v2371 = vpop.f32.mrb[0].mxu0
      %v2372 = vpop.f32.mrb[0].mxu0
      %v2373 = vadd.f32 0.0, %v2372
      %v2374 = vpop.f32.mrb[0].mxu0
      %2375 = vmatprep.mubr.bf16.mxu0 0
      %2376 = vmatmul.mubr.bf16.gmra.mrb[0].mxu0 %v2228
      %v2377 = vpop.f32.mrb[0].mxu0
      %v2378 = vadd.f32 0.0, %v2377
      %v2379 = vpop.f32.mrb[0].mxu0
      %v2380 = vpop.f32.mrb[0].mxu0
      %v2381 = vadd.f32 0.0, %v2380
      %v2382 = vpop.f32.mrb[0].mxu0
      %2383 = vmatprep.mubr.bf16.mxu0 0
      %2384 = vmatmul.mubr.bf16.gmra.mrb[0].mxu0 %v2229
      %v2385 = vpop.f32.mrb[0].mxu0
      %v2386 = vadd.f32 0.0, %v2385
      %v2387 = vpop.f32.mrb[0].mxu0
      %v2388 = vpop.f32.mrb[0].mxu0
      %v2389 = vadd.f32 0.0, %v2388
      %v2390 = vpop.f32.mrb[0].mxu0
      %2391 = vmatprep.mubr.bf16.mxu0 0
      %2392 = vmatmul.mubr.bf16.gmra.mrb[0].mxu0 %v2230
      %v2393 = vpop.f32.mrb[0].mxu0
      %v2394 = vadd.f32 0.0, %v2393
      %v2395 = vpop.f32.mrb[0].mxu0
      %v2396 = vpop.f32.mrb[0].mxu0
      %v2397 = vadd.f32 0.0, %v2396
      %v2398 = vpop.f32.mrb[0].mxu0
      %2399 = vmatprep.mubr.bf16.mxu0 0
      %2400 = vmatmul.mubr.bf16.gmra.mrb[0].mxu0 %v2231
      %v2401 = vpop.f32.mrb[0].mxu0
      %v2402 = vadd.f32 0.0, %v2401
      %v2403 = vpop.f32.mrb[0].mxu0
      %v2404 = vpop.f32.mrb[0].mxu0
      %v2405 = vadd.f32 0.0, %v2404
      %v2406 = vpop.f32.mrb[0].mxu0
      %2407 = vmatprep.mubr.bf16.mxu0 0
      %2408 = vmatmul.mubr.bf16.gmra.mrb[0].mxu0 %v2232
      %v2409 = vpop.f32.mrb[0].mxu0
      %v2410 = vadd.f32 0.0, %v2409
      %v2411 = vpop.f32.mrb[0].mxu0
      %v2412 = vpop.f32.mrb[0].mxu0
      %v2413 = vadd.f32 0.0, %v2412
      %v2414 = vpop.f32.mrb[0].mxu0
      %2415 = vmatprep.mubr.bf16.mxu0 0
      %2416 = vmatmul.mubr.bf16.gmra.mrb[0].mxu0 %v2233
      %v2417 = vpop.f32.mrb[0].mxu0
      %v2418 = vadd.f32 0.0, %v2417
      %v2419 = vpop.f32.mrb[0].mxu0
      %v2420 = vpop.f32.mrb[0].mxu0
      %v2421 = vadd.f32 0.0, %v2420
      %v2422 = vpop.f32.mrb[0].mxu0
      %2423 = vmatprep.mubr.bf16.mxu0 0
      %2424 = vmatmul.mubr.bf16.gmra.mrb[0].mxu0 %v2234
      %v2425 = vpop.f32.mrb[0].mxu0
      %v2426 = vadd.f32 0.0, %v2425
      %v2427 = vpop.f32.mrb[0].mxu0
      %v2428 = vpop.f32.mrb[0].mxu0
      %v2429 = vadd.f32 0.0, %v2428
      %v2430 = vpop.f32.mrb[0].mxu0
      %2431 = vmatprep.mubr.bf16.mxu0 0
      %2432 = vmatmul.mubr.bf16.gmra.mrb[0].mxu0 %v2235
      %v2433 = vpop.f32.mrb[0].mxu0
      %v2434 = vadd.f32 0.0, %v2433
      %v2435 = vpop.f32.mrb[0].mxu0
      %v2436 = vpop.f32.mrb[0].mxu0
      %v2437 = vadd.f32 0.0, %v2436
      %v2438 = vpop.f32.mrb[0].mxu0
      %2439 = vmatprep.mubr.bf16.mxu0 0
      %2440 = vmatmul.mubr.bf16.gmra.mrb[0].mxu0 %v2236
      %v2441 = vpop.f32.mrb[0].mxu0
      %v2442 = vadd.f32 0.0, %v2441
      %v2443 = vpop.f32.mrb[0].mxu0
      %v2444 = vpop.f32.mrb[0].mxu0
      %v2445 = vadd.f32 0.0, %v2444
      %v2446 = vpop.f32.mrb[0].mxu0
      %2447 = vmatprep.mubr.bf16.mxu0 0
      %2448 = vmatmul.mubr.bf16.gmra.mrb[0].mxu0 %v2237
      %v2449 = vpop.f32.mrb[0].mxu0
      %v2450 = vadd.f32 0.0, %v2449
      %v2451 = vpop.f32.mrb[0].mxu0
      %v2452 = vpop.f32.mrb[0].mxu0
      %v2453 = vadd.f32 0.0, %v2452
      %v2454 = vpop.f32.mrb[0].mxu0
      %2455 = vmatprep.mubr.bf16.mxu0 0
      %2456 = vmatmul.mubr.bf16.gmra.mrb[0].mxu0 %v2238
      %v2457 = vpop.f32.mrb[0].mxu0
      %v2458 = vadd.f32 0.0, %v2457
      %v2459 = vpop.f32.mrb[0].mxu0
      %v2460 = vpop.f32.mrb[0].mxu0
      %v2461 = vadd.f32 0.0, %v2460
      %v2462 = vpop.f32.mrb[0].mxu0
      %2463 = vdwg.mxu0
      %v2464 = vadd.f32 %v1609, %v2338
      %v2465 = vadd.f32 %v1612, %v2341
      %v2466 = vadd.f32 %v1617, %v2346
      %v2467 = vadd.f32 %v1620, %v2349
      %v2468 = vadd.f32 %v1625, %v2354
      %v2469 = vadd.f32 %v1628, %v2357
      %v2470 = vadd.f32 %v1633, %v2362
      %v2471 = vadd.f32 %v1636, %v2365
      %v2472 = vadd.f32 %v1641, %v2370
      %v2473 = vadd.f32 %v1644, %v2373
      %v2474 = vadd.f32 %v1649, %v2378
      %v2475 = vadd.f32 %v1652, %v2381
      %v2476 = vadd.f32 %v1657, %v2386
      %v2477 = vadd.f32 %v1660, %v2389
      %v2478 = vadd.f32 %v1665, %v2394
      %v2479 = vadd.f32 %v1668, %v2397
      %v2480 = vadd.f32 %v1673, %v2402
      %v2481 = vadd.f32 %v1676, %v2405
      %v2482 = vadd.f32 %v1681, %v2410
      %v2483 = vadd.f32 %v1684, %v2413
      %v2484 = vadd.f32 %v1689, %v2418
      %v2485 = vadd.f32 %v1692, %v2421
      %v2486 = vadd.f32 %v1697, %v2426
      %v2487 = vadd.f32 %v1700, %v2429
      %v2488 = vadd.f32 %v1705, %v2434
      %v2489 = vadd.f32 %v1708, %v2437
      %v2490 = vadd.f32 %v1713, %v2442
      %v2491 = vadd.f32 %v1716, %v2445
      %v2492 = vadd.f32 %v1721, %v2450
      %v2493 = vadd.f32 %v1724, %v2453
      %v2494 = vadd.f32 %v1729, %v2458
      %v2495 = vadd.f32 %v1732, %v2461
      %v2496 = vld [vmem:[%s1 + $0xc] sm:$0xf]
      %v2497 = vld [vmem:[%s1 + $0x24] sm:$0xf]
      %v2498 = vld [vmem:[%s1 + $0x3c] sm:$0xf]
      %v2499 = vld [vmem:[%s1 + $0x54] sm:$0xf]
      %v2500 = vld [vmem:[%s1 + $0x6c] sm:$0xf]
      %v2501 = vld [vmem:[%s1 + $0x84] sm:$0xf]
      %v2502 = vld [vmem:[%s1 + $0x9c] sm:$0xf]
      %v2503 = vld [vmem:[%s1 + $0xb4] sm:$0xf]
      %v2504 = vld [vmem:[%s1 + $0xcc] sm:$0xf]
      %v2505 = vld [vmem:[%s1 + $0xe4] sm:$0xf]
      %v2506 = vld [vmem:[%s1 + $0xfc] sm:$0xf]
      %v2507 = vld [vmem:[%s1 + $0x114] sm:$0xf]
      %v2508 = vld [vmem:[%s1 + $0x12c] sm:$0xf]
      %v2509 = vld [vmem:[%s1 + $0x144] sm:$0xf]
      %v2510 = vld [vmem:[%s1 + $0x15c] sm:$0xf]
      %v2511 = vld [vmem:[%s1 + $0x174] sm:$0xf]
      %v2512 = vld [vmem:[%s2 + $0x3] sm:$0x1]
      %v2514 = vlaneseq
      %v2515 = vshrl.u32 %v2514, 7
      %v2516 = vsub.s32 0, %v2515
      %v2517 = vrot.slane %v2512, %v2516
      %v2535 = vunpack.c.l.b16 %v2496
      %v2536 = vunpack.c.l.b16 %v2497
      %v2537 = vunpack.c.l.b16 %v2498
      %v2538 = vunpack.c.l.b16 %v2499
      %v2539 = vunpack.c.l.b16 %v2500
      %v2540 = vunpack.c.l.b16 %v2501
      %v2541 = vunpack.c.l.b16 %v2502
      %v2542 = vunpack.c.l.b16 %v2503
      %v2543 = vunpack.c.l.b16 %v2504
      %v2544 = vunpack.c.l.b16 %v2505
      %v2545 = vunpack.c.l.b16 %v2506
      %v2546 = vunpack.c.l.b16 %v2507
      %v2547 = vunpack.c.l.b16 %v2508
      %v2548 = vunpack.c.l.b16 %v2509
      %v2549 = vunpack.c.l.b16 %v2510
      %v2550 = vunpack.c.l.b16 %v2511
      %v2551 = vpack.c.b16 %v2536, %v2535
      %v2552 = vpack.c.b16 %v2538, %v2537
      %v2553 = vpack.c.b16 %v2540, %v2539
      %v2554 = vpack.c.b16 %v2542, %v2541
      %v2555 = vpack.c.b16 %v2544, %v2543
      %v2556 = vpack.c.b16 %v2546, %v2545
      %v2557 = vpack.c.b16 %v2548, %v2547
      %v2558 = vpack.c.b16 %v2550, %v2549
      %2567 = vmatprep.subr.bf16.mxu0 0
      %2568 = vmatpush1.bf16.msra.mxu0 %v2551
      %2569 = vmatprep.subr.bf16.mxu0 0
      %2570 = vmatpush1.bf16.msra.mxu0 %v2552
      %2571 = vmatprep.subr.bf16.mxu0 0
      %2572 = vmatpush1.bf16.msra.mxu0 %v2553
      %2573 = vmatprep.subr.bf16.mxu0 0
      %2574 = vmatpush1.bf16.msra.mxu0 %v2554
      %2575 = vmatprep.subr.bf16.mxu0 0
      %2576 = vmatpush1.bf16.msra.mxu0 %v2555
      %2577 = vmatprep.subr.bf16.mxu0 0
      %2578 = vmatpush1.bf16.msra.mxu0 %v2556
      %2579 = vmatprep.subr.bf16.mxu0 0
      %2580 = vmatpush1.bf16.msra.mxu0 %v2557
      %2581 = vmatprep.subr.bf16.mxu0 0
      %2582 = vmatpush1.bf16.msra.mxu0 %v2558
      %2583 = vmatprep.subr.bf16.mxu0 0
      %2584 = vmatpush1.bf16.msra.mxu0 0
      %2585 = vmatprep.subr.bf16.mxu0 0
      %2586 = vmatpush1.bf16.msra.mxu0 0
      %2587 = vmatprep.subr.bf16.mxu0 0
      %2588 = vmatpush1.bf16.msra.mxu0 0
      %2589 = vmatprep.subr.bf16.mxu0 0
      %2590 = vmatpush1.bf16.msra.mxu0 0
      %2591 = vmatprep.subr.bf16.mxu0 0
      %2592 = vmatpush1.bf16.msra.mxu0 0
      %2593 = vmatprep.subr.bf16.mxu0 0
      %2594 = vmatpush1.bf16.msra.mxu0 0
      %2595 = vmatprep.subr.bf16.mxu0 0
      %2596 = vmatpush1.bf16.msra.mxu0 0
      %2597 = vmatprep.subr.bf16.mxu0 0
      %2598 = vmatpush1.bf16.msra.mxu0 0
      %2599 = vmatprep.mubr.bf16.mxu0 0
      %2600 = vmatmul.mubr.bf16.gmra.mrb[0].mxu0 %v261
      %v2601 = vpop.f32.mrb[0].mxu0
      %v2602 = vadd.f32 %v2517, %v2601
      %v2603 = vpop.f32.mrb[0].mxu0
      %v2604 = vpop.f32.mrb[0].mxu0
      %v2605 = vadd.f32 %v2517, %v2604
      %v2606 = vpop.f32.mrb[0].mxu0
      %2607 = vmatprep.mubr.bf16.mxu0 0
      %2608 = vmatmul.mubr.bf16.gmra.mrb[0].mxu0 %v262
      %v2609 = vpop.f32.mrb[0].mxu0
      %v2610 = vadd.f32 %v2517, %v2609
      %v2611 = vpop.f32.mrb[0].mxu0
      %v2612 = vpop.f32.mrb[0].mxu0
      %v2613 = vadd.f32 %v2517, %v2612
      %v2614 = vpop.f32.mrb[0].mxu0
      %2615 = vmatprep.mubr.bf16.mxu0 0
      %2616 = vmatmul.mubr.bf16.gmra.mrb[0].mxu0 %v263
      %v2617 = vpop.f32.mrb[0].mxu0
      %v2618 = vadd.f32 %v2517, %v2617
      %v2619 = vpop.f32.mrb[0].mxu0
      %v2620 = vpop.f32.mrb[0].mxu0
      %v2621 = vadd.f32 %v2517, %v2620
      %v2622 = vpop.f32.mrb[0].mxu0
      %2623 = vmatprep.mubr.bf16.mxu0 0
      %2624 = vmatmul.mubr.bf16.gmra.mrb[0].mxu0 %v264
      %v2625 = vpop.f32.mrb[0].mxu0
      %v2626 = vadd.f32 %v2517, %v2625
      %v2627 = vpop.f32.mrb[0].mxu0
      %v2628 = vpop.f32.mrb[0].mxu0
      %v2629 = vadd.f32 %v2517, %v2628
      %v2630 = vpop.f32.mrb[0].mxu0
      %2631 = vmatprep.mubr.bf16.mxu0 0
      %2632 = vmatmul.mubr.bf16.gmra.mrb[0].mxu0 %v265
      %v2633 = vpop.f32.mrb[0].mxu0
      %v2634 = vadd.f32 %v2517, %v2633
      %v2635 = vpop.f32.mrb[0].mxu0
      %v2636 = vpop.f32.mrb[0].mxu0
      %v2637 = vadd.f32 %v2517, %v2636
      %v2638 = vpop.f32.mrb[0].mxu0
      %2639 = vmatprep.mubr.bf16.mxu0 0
      %2640 = vmatmul.mubr.bf16.gmra.mrb[0].mxu0 %v266
      %v2641 = vpop.f32.mrb[0].mxu0
      %v2642 = vadd.f32 %v2517, %v2641
      %v2643 = vpop.f32.mrb[0].mxu0
      %v2644 = vpop.f32.mrb[0].mxu0
      %v2645 = vadd.f32 %v2517, %v2644
      %v2646 = vpop.f32.mrb[0].mxu0
      %2647 = vmatprep.mubr.bf16.mxu0 0
      %2648 = vmatmul.mubr.bf16.gmra.mrb[0].mxu0 %v267
      %v2649 = vpop.f32.mrb[0].mxu0
      %v2650 = vadd.f32 %v2517, %v2649
      %v2651 = vpop.f32.mrb[0].mxu0
      %v2652 = vpop.f32.mrb[0].mxu0
      %v2653 = vadd.f32 %v2517, %v2652
      %v2654 = vpop.f32.mrb[0].mxu0
      %2655 = vmatprep.mubr.bf16.mxu0 0
      %2656 = vmatmul.mubr.bf16.gmra.mrb[0].mxu0 %v268
      %v2657 = vpop.f32.mrb[0].mxu0
      %v2658 = vadd.f32 %v2517, %v2657
      %v2659 = vpop.f32.mrb[0].mxu0
      %v2660 = vpop.f32.mrb[0].mxu0
      %v2661 = vadd.f32 %v2517, %v2660
      %v2662 = vpop.f32.mrb[0].mxu0
      %2663 = vmatprep.mubr.bf16.mxu0 0
      %2664 = vmatmul.mubr.bf16.gmra.mrb[0].mxu0 %v269
      %v2665 = vpop.f32.mrb[0].mxu0
      %v2666 = vadd.f32 %v2517, %v2665
      %v2667 = vpop.f32.mrb[0].mxu0
      %v2668 = vpop.f32.mrb[0].mxu0
      %v2669 = vadd.f32 %v2517, %v2668
      %v2670 = vpop.f32.mrb[0].mxu0
      %2671 = vmatprep.mubr.bf16.mxu0 0
      %2672 = vmatmul.mubr.bf16.gmra.mrb[0].mxu0 %v270
      %v2673 = vpop.f32.mrb[0].mxu0
      %v2674 = vadd.f32 %v2517, %v2673
      %v2675 = vpop.f32.mrb[0].mxu0
      %v2676 = vpop.f32.mrb[0].mxu0
      %v2677 = vadd.f32 %v2517, %v2676
      %v2678 = vpop.f32.mrb[0].mxu0
      %2679 = vmatprep.mubr.bf16.mxu0 0
      %2680 = vmatmul.mubr.bf16.gmra.mrb[0].mxu0 %v271
      %v2681 = vpop.f32.mrb[0].mxu0
      %v2682 = vadd.f32 %v2517, %v2681
      %v2683 = vpop.f32.mrb[0].mxu0
      %v2684 = vpop.f32.mrb[0].mxu0
      %v2685 = vadd.f32 %v2517, %v2684
      %v2686 = vpop.f32.mrb[0].mxu0
      %2687 = vmatprep.mubr.bf16.mxu0 0
      %2688 = vmatmul.mubr.bf16.gmra.mrb[0].mxu0 %v272
      %v2689 = vpop.f32.mrb[0].mxu0
      %v2690 = vadd.f32 %v2517, %v2689
      %v2691 = vpop.f32.mrb[0].mxu0
      %v2692 = vpop.f32.mrb[0].mxu0
      %v2693 = vadd.f32 %v2517, %v2692
      %v2694 = vpop.f32.mrb[0].mxu0
      %2695 = vmatprep.mubr.bf16.mxu0 0
      %2696 = vmatmul.mubr.bf16.gmra.mrb[0].mxu0 %v273
      %v2697 = vpop.f32.mrb[0].mxu0
      %v2698 = vadd.f32 %v2517, %v2697
      %v2699 = vpop.f32.mrb[0].mxu0
      %v2700 = vpop.f32.mrb[0].mxu0
      %v2701 = vadd.f32 %v2517, %v2700
      %v2702 = vpop.f32.mrb[0].mxu0
      %2703 = vmatprep.mubr.bf16.mxu0 0
      %2704 = vmatmul.mubr.bf16.gmra.mrb[0].mxu0 %v274
      %v2705 = vpop.f32.mrb[0].mxu0
      %v2706 = vadd.f32 %v2517, %v2705
      %v2707 = vpop.f32.mrb[0].mxu0
      %v2708 = vpop.f32.mrb[0].mxu0
      %v2709 = vadd.f32 %v2517, %v2708
      %v2710 = vpop.f32.mrb[0].mxu0
      %2711 = vmatprep.mubr.bf16.mxu0 0
      %2712 = vmatmul.mubr.bf16.gmra.mrb[0].mxu0 %v275
      %v2713 = vpop.f32.mrb[0].mxu0
      %v2714 = vadd.f32 %v2517, %v2713
      %v2715 = vpop.f32.mrb[0].mxu0
      %v2716 = vpop.f32.mrb[0].mxu0
      %v2717 = vadd.f32 %v2517, %v2716
      %v2718 = vpop.f32.mrb[0].mxu0
      %2719 = vmatprep.mubr.bf16.mxu0 0
      %2720 = vmatmul.mubr.bf16.gmra.mrb[0].mxu0 %v276
      %v2721 = vpop.f32.mrb[0].mxu0
      %v2722 = vadd.f32 %v2517, %v2721
      %v2723 = vpop.f32.mrb[0].mxu0
      %v2724 = vpop.f32.mrb[0].mxu0
      %v2725 = vadd.f32 %v2517, %v2724
      %v2726 = vpop.f32.mrb[0].mxu0
      %2727 = vdwg.mxu0
      %v2728 = vmul.f32 %v2602, 1.702
      %v2729 = vmul.f32 %v2605, 1.702
      %v2730 = vmul.f32 %v2610, 1.702
      %v2731 = vmul.f32 %v2613, 1.702
      %v2732 = vmul.f32 %v2618, 1.702
      %v2733 = vmul.f32 %v2621, 1.702
      %v2734 = vmul.f32 %v2626, 1.702
      %v2735 = vmul.f32 %v2629, 1.702
      %v2736 = vmul.f32 %v2634, 1.702
      %v2737 = vmul.f32 %v2637, 1.702
      %v2738 = vmul.f32 %v2642, 1.702
      %v2739 = vmul.f32 %v2645, 1.702
      %v2740 = vmul.f32 %v2650, 1.702
      %v2741 = vmul.f32 %v2653, 1.702
      %v2742 = vmul.f32 %v2658, 1.702
      %v2743 = vmul.f32 %v2661, 1.702
      %v2744 = vmul.f32 %v2666, 1.702
      %v2745 = vmul.f32 %v2669, 1.702
      %v2746 = vmul.f32 %v2674, 1.702
      %v2747 = vmul.f32 %v2677, 1.702
      %v2748 = vmul.f32 %v2682, 1.702
      %v2749 = vmul.f32 %v2685, 1.702
      %v2750 = vmul.f32 %v2690, 1.702
      %v2751 = vmul.f32 %v2693, 1.702
      %v2752 = vmul.f32 %v2698, 1.702
      %v2753 = vmul.f32 %v2701, 1.702
      %v2754 = vmul.f32 %v2706, 1.702
      %v2755 = vmul.f32 %v2709, 1.702
      %v2756 = vmul.f32 %v2714, 1.702
      %v2757 = vmul.f32 %v2717, 1.702
      %v2758 = vmul.f32 %v2722, 1.702
      %v2759 = vmul.f32 %v2725, 1.702
      %v2760 = vxor.u32 %v2728, 2147483648
      %v2761 = vxor.u32 %v2729, 2147483648
      %v2762 = vxor.u32 %v2730, 2147483648
      %v2763 = vxor.u32 %v2731, 2147483648
      %v2764 = vxor.u32 %v2732, 2147483648
      %v2765 = vxor.u32 %v2733, 2147483648
      %v2766 = vxor.u32 %v2734, 2147483648
      %v2767 = vxor.u32 %v2735, 2147483648
      %v2768 = vxor.u32 %v2736, 2147483648
      %v2769 = vxor.u32 %v2737, 2147483648
      %v2770 = vxor.u32 %v2738, 2147483648
      %v2771 = vxor.u32 %v2739, 2147483648
      %v2772 = vxor.u32 %v2740, 2147483648
      %v2773 = vxor.u32 %v2741, 2147483648
      %v2774 = vxor.u32 %v2742, 2147483648
      %v2775 = vxor.u32 %v2743, 2147483648
      %v2776 = vxor.u32 %v2744, 2147483648
      %v2777 = vxor.u32 %v2745, 2147483648
      %v2778 = vxor.u32 %v2746, 2147483648
      %v2779 = vxor.u32 %v2747, 2147483648
      %v2780 = vxor.u32 %v2748, 2147483648
      %v2781 = vxor.u32 %v2749, 2147483648
      %v2782 = vxor.u32 %v2750, 2147483648
      %v2783 = vxor.u32 %v2751, 2147483648
      %v2784 = vxor.u32 %v2752, 2147483648
      %v2785 = vxor.u32 %v2753, 2147483648
      %v2786 = vxor.u32 %v2754, 2147483648
      %v2787 = vxor.u32 %v2755, 2147483648
      %v2788 = vxor.u32 %v2756, 2147483648
      %v2789 = vxor.u32 %v2757, 2147483648
      %v2790 = vxor.u32 %v2758, 2147483648
      %v2791 = vxor.u32 %v2759, 2147483648
      %v2792 = vmul.f32 %v2760, 1.442695
      %v2793 = vpow.pop %v2792
      %v2794 = vmul.f32 %v2761, 1.442695
      %v2795 = vpow.pop %v2794
      %v2796 = vmul.f32 %v2762, 1.442695
      %v2797 = vpow.pop %v2796
      %v2798 = vmul.f32 %v2763, 1.442695
      %v2799 = vpow.pop %v2798
      %v2800 = vmul.f32 %v2764, 1.442695
      %v2801 = vpow.pop %v2800
      %v2802 = vmul.f32 %v2765, 1.442695
      %v2803 = vpow.pop %v2802
      %v2804 = vmul.f32 %v2766, 1.442695
      %v2805 = vpow.pop %v2804
      %v2806 = vmul.f32 %v2767, 1.442695
      %v2807 = vpow.pop %v2806
      %v2808 = vmul.f32 %v2768, 1.442695
      %v2809 = vpow.pop %v2808
      %v2810 = vmul.f32 %v2769, 1.442695
      %v2811 = vpow.pop %v2810
      %v2812 = vmul.f32 %v2770, 1.442695
      %v2813 = vpow.pop %v2812
      %v2814 = vmul.f32 %v2771, 1.442695
      %v2815 = vpow.pop %v2814
      %v2816 = vmul.f32 %v2772, 1.442695
      %v2817 = vpow.pop %v2816
      %v2818 = vmul.f32 %v2773, 1.442695
      %v2819 = vpow.pop %v2818
      %v2820 = vmul.f32 %v2774, 1.442695
      %v2821 = vpow.pop %v2820
      %v2822 = vmul.f32 %v2775, 1.442695
      %v2823 = vpow.pop %v2822
      %v2824 = vmul.f32 %v2776, 1.442695
      %v2825 = vpow.pop %v2824
      %v2826 = vmul.f32 %v2777, 1.442695
      %v2827 = vpow.pop %v2826
      %v2828 = vmul.f32 %v2778, 1.442695
      %v2829 = vpow.pop %v2828
      %v2830 = vmul.f32 %v2779, 1.442695
      %v2831 = vpow.pop %v2830
      %v2832 = vmul.f32 %v2780, 1.442695
      %v2833 = vpow.pop %v2832
      %v2834 = vmul.f32 %v2781, 1.442695
      %v2835 = vpow.pop %v2834
      %v2836 = vmul.f32 %v2782, 1.442695
      %v2837 = vpow.pop %v2836
      %v2838 = vmul.f32 %v2783, 1.442695
      %v2839 = vpow.pop %v2838
      %v2840 = vmul.f32 %v2784, 1.442695
      %v2841 = vpow.pop %v2840
      %v2842 = vmul.f32 %v2785, 1.442695
      %v2843 = vpow.pop %v2842
      %v2844 = vmul.f32 %v2786, 1.442695
      %v2845 = vpow.pop %v2844
      %v2846 = vmul.f32 %v2787, 1.442695
      %v2847 = vpow.pop %v2846
      %v2848 = vmul.f32 %v2788, 1.442695
      %v2849 = vpow.pop %v2848
      %v2850 = vmul.f32 %v2789, 1.442695
      %v2851 = vpow.pop %v2850
      %v2852 = vmul.f32 %v2790, 1.442695
      %v2853 = vpow.pop %v2852
      %v2854 = vmul.f32 %v2791, 1.442695
      %v2855 = vpow.pop %v2854
      %v2856 = vadd.f32 %v2793, 1.0
      %v2857 = vadd.f32 %v2795, 1.0
      %v2858 = vadd.f32 %v2797, 1.0
      %v2859 = vadd.f32 %v2799, 1.0
      %v2860 = vadd.f32 %v2801, 1.0
      %v2861 = vadd.f32 %v2803, 1.0
      %v2862 = vadd.f32 %v2805, 1.0
      %v2863 = vadd.f32 %v2807, 1.0
      %v2864 = vadd.f32 %v2809, 1.0
      %v2865 = vadd.f32 %v2811, 1.0
      %v2866 = vadd.f32 %v2813, 1.0
      %v2867 = vadd.f32 %v2815, 1.0
      %v2868 = vadd.f32 %v2817, 1.0
      %v2869 = vadd.f32 %v2819, 1.0
      %v2870 = vadd.f32 %v2821, 1.0
      %v2871 = vadd.f32 %v2823, 1.0
      %v2872 = vadd.f32 %v2825, 1.0
      %v2873 = vadd.f32 %v2827, 1.0
      %v2874 = vadd.f32 %v2829, 1.0
      %v2875 = vadd.f32 %v2831, 1.0
      %v2876 = vadd.f32 %v2833, 1.0
      %v2877 = vadd.f32 %v2835, 1.0
      %v2878 = vadd.f32 %v2837, 1.0
      %v2879 = vadd.f32 %v2839, 1.0
      %v2880 = vadd.f32 %v2841, 1.0
      %v2881 = vadd.f32 %v2843, 1.0
      %v2882 = vadd.f32 %v2845, 1.0
      %v2883 = vadd.f32 %v2847, 1.0
      %v2884 = vadd.f32 %v2849, 1.0
      %v2885 = vadd.f32 %v2851, 1.0
      %v2886 = vadd.f32 %v2853, 1.0
      %v2887 = vadd.f32 %v2855, 1.0
      %v2888 = vrcp.pop %v2856
      %v2889 = vmul.f32 1.0, %v2888
      %v2890 = vrcp.pop %v2857
      %v2891 = vmul.f32 1.0, %v2890
      %v2892 = vrcp.pop %v2858
      %v2893 = vmul.f32 1.0, %v2892
      %v2894 = vrcp.pop %v2859
      %v2895 = vmul.f32 1.0, %v2894
      %v2896 = vrcp.pop %v2860
      %v2897 = vmul.f32 1.0, %v2896
      %v2898 = vrcp.pop %v2861
      %v2899 = vmul.f32 1.0, %v2898
      %v2900 = vrcp.pop %v2862
      %v2901 = vmul.f32 1.0, %v2900
      %v2902 = vrcp.pop %v2863
      %v2903 = vmul.f32 1.0, %v2902
      %v2904 = vrcp.pop %v2864
      %v2905 = vmul.f32 1.0, %v2904
      %v2906 = vrcp.pop %v2865
      %v2907 = vmul.f32 1.0, %v2906
      %v2908 = vrcp.pop %v2866
      %v2909 = vmul.f32 1.0, %v2908
      %v2910 = vrcp.pop %v2867
      %v2911 = vmul.f32 1.0, %v2910
      %v2912 = vrcp.pop %v2868
      %v2913 = vmul.f32 1.0, %v2912
      %v2914 = vrcp.pop %v2869
      %v2915 = vmul.f32 1.0, %v2914
      %v2916 = vrcp.pop %v2870
      %v2917 = vmul.f32 1.0, %v2916
      %v2918 = vrcp.pop %v2871
      %v2919 = vmul.f32 1.0, %v2918
      %v2920 = vrcp.pop %v2872
      %v2921 = vmul.f32 1.0, %v2920
      %v2922 = vrcp.pop %v2873
      %v2923 = vmul.f32 1.0, %v2922
      %v2924 = vrcp.pop %v2874
      %v2925 = vmul.f32 1.0, %v2924
      %v2926 = vrcp.pop %v2875
      %v2927 = vmul.f32 1.0, %v2926
      %v2928 = vrcp.pop %v2876
      %v2929 = vmul.f32 1.0, %v2928
      %v2930 = vrcp.pop %v2877
      %v2931 = vmul.f32 1.0, %v2930
      %v2932 = vrcp.pop %v2878
      %v2933 = vmul.f32 1.0, %v2932
      %v2934 = vrcp.pop %v2879
      %v2935 = vmul.f32 1.0, %v2934
      %v2936 = vrcp.pop %v2880
      %v2937 = vmul.f32 1.0, %v2936
      %v2938 = vrcp.pop %v2881
      %v2939 = vmul.f32 1.0, %v2938
      %v2940 = vrcp.pop %v2882
      %v2941 = vmul.f32 1.0, %v2940
      %v2942 = vrcp.pop %v2883
      %v2943 = vmul.f32 1.0, %v2942
      %v2944 = vrcp.pop %v2884
      %v2945 = vmul.f32 1.0, %v2944
      %v2946 = vrcp.pop %v2885
      %v2947 = vmul.f32 1.0, %v2946
      %v2948 = vrcp.pop %v2886
      %v2949 = vmul.f32 1.0, %v2948
      %v2950 = vrcp.pop %v2887
      %v2951 = vmul.f32 1.0, %v2950
      %v2952 = vmul.f32 %v2602, %v2889
      %v2953 = vmul.f32 %v2605, %v2891
      %v2954 = vmul.f32 %v2610, %v2893
      %v2955 = vmul.f32 %v2613, %v2895
      %v2956 = vmul.f32 %v2618, %v2897
      %v2957 = vmul.f32 %v2621, %v2899
      %v2958 = vmul.f32 %v2626, %v2901
      %v2959 = vmul.f32 %v2629, %v2903
      %v2960 = vmul.f32 %v2634, %v2905
      %v2961 = vmul.f32 %v2637, %v2907
      %v2962 = vmul.f32 %v2642, %v2909
      %v2963 = vmul.f32 %v2645, %v2911
      %v2964 = vmul.f32 %v2650, %v2913
      %v2965 = vmul.f32 %v2653, %v2915
      %v2966 = vmul.f32 %v2658, %v2917
      %v2967 = vmul.f32 %v2661, %v2919
      %v2968 = vmul.f32 %v2666, %v2921
      %v2969 = vmul.f32 %v2669, %v2923
      %v2970 = vmul.f32 %v2674, %v2925
      %v2971 = vmul.f32 %v2677, %v2927
      %v2972 = vmul.f32 %v2682, %v2929
      %v2973 = vmul.f32 %v2685, %v2931
      %v2974 = vmul.f32 %v2690, %v2933
      %v2975 = vmul.f32 %v2693, %v2935
      %v2976 = vmul.f32 %v2698, %v2937
      %v2977 = vmul.f32 %v2701, %v2939
      %v2978 = vmul.f32 %v2706, %v2941
      %v2979 = vmul.f32 %v2709, %v2943
      %v2980 = vmul.f32 %v2714, %v2945
      %v2981 = vmul.f32 %v2717, %v2947
      %v2982 = vmul.f32 %v2722, %v2949
      %v2983 = vmul.f32 %v2725, %v2951
      %v2984 = vpack.c.bf16 %v2953, %v2952
      %v2985 = vpack.c.bf16 %v2955, %v2954
      %v2986 = vpack.c.bf16 %v2957, %v2956
      %v2987 = vpack.c.bf16 %v2959, %v2958
      %v2988 = vpack.c.bf16 %v2961, %v2960
      %v2989 = vpack.c.bf16 %v2963, %v2962
      %v2990 = vpack.c.bf16 %v2965, %v2964
      %v2991 = vpack.c.bf16 %v2967, %v2966
      %v2992 = vpack.c.bf16 %v2969, %v2968
      %v2993 = vpack.c.bf16 %v2971, %v2970
      %v2994 = vpack.c.bf16 %v2973, %v2972
      %v2995 = vpack.c.bf16 %v2975, %v2974
      %v2996 = vpack.c.bf16 %v2977, %v2976
      %v2997 = vpack.c.bf16 %v2979, %v2978
      %v2998 = vpack.c.bf16 %v2981, %v2980
      %v2999 = vpack.c.bf16 %v2983, %v2982
      %v3000 = vld [vmem:[%s3 + $0xc0] sm:$0xf]
      %v3001 = vld [vmem:[%s3 + $0xc4] sm:$0xf]
      %v3002 = vld [vmem:[%s3 + $0xc8] sm:$0xf]
      %v3003 = vld [vmem:[%s3 + $0xcc] sm:$0xf]
      %v3004 = vld [vmem:[%s3 + $0xd0] sm:$0xf]
      %v3005 = vld [vmem:[%s3 + $0xd4] sm:$0xf]
      %v3006 = vld [vmem:[%s3 + $0xd8] sm:$0xf]
      %v3007 = vld [vmem:[%s3 + $0xdc] sm:$0xf]
      %v3008 = vld [vmem:[%s3 + $0xe0] sm:$0xf]
      %v3009 = vld [vmem:[%s3 + $0xe4] sm:$0xf]
      %v3010 = vld [vmem:[%s3 + $0xe8] sm:$0xf]
      %v3011 = vld [vmem:[%s3 + $0xec] sm:$0xf]
      %v3012 = vld [vmem:[%s3 + $0xf0] sm:$0xf]
      %v3013 = vld [vmem:[%s3 + $0xf4] sm:$0xf]
      %v3014 = vld [vmem:[%s3 + $0xf8] sm:$0xf]
      %v3015 = vld [vmem:[%s3 + $0xfc] sm:$0xf]
      %v3032 = vunpack.c.l.b16 %v3000
      %v3033 = vunpack.c.l.b16 %v3001
      %v3034 = vunpack.c.l.b16 %v3002
      %v3035 = vunpack.c.l.b16 %v3003
      %v3036 = vunpack.c.l.b16 %v3004
      %v3037 = vunpack.c.l.b16 %v3005
      %v3038 = vunpack.c.l.b16 %v3006
      %v3039 = vunpack.c.l.b16 %v3007
      %v3040 = vunpack.c.l.b16 %v3008
      %v3041 = vunpack.c.l.b16 %v3009
      %v3042 = vunpack.c.l.b16 %v3010
      %v3043 = vunpack.c.l.b16 %v3011
      %v3044 = vunpack.c.l.b16 %v3012
      %v3045 = vunpack.c.l.b16 %v3013
      %v3046 = vunpack.c.l.b16 %v3014
      %v3047 = vunpack.c.l.b16 %v3015
      %v3048 = vpack.c.b16 %v3033, %v3032
      %v3049 = vpack.c.b16 %v3035, %v3034
      %v3050 = vpack.c.b16 %v3037, %v3036
      %v3051 = vpack.c.b16 %v3039, %v3038
      %v3052 = vpack.c.b16 %v3041, %v3040
      %v3053 = vpack.c.b16 %v3043, %v3042
      %v3054 = vpack.c.b16 %v3045, %v3044
      %v3055 = vpack.c.b16 %v3047, %v3046
      %3064 = vmatprep.subr.bf16.mxu0 0
      %3065 = vmatpush1.bf16.msra.mxu0 %v3048
      %3066 = vmatprep.subr.bf16.mxu0 0
      %3067 = vmatpush1.bf16.msra.mxu0 %v3049
      %3068 = vmatprep.subr.bf16.mxu0 0
      %3069 = vmatpush1.bf16.msra.mxu0 %v3050
      %3070 = vmatprep.subr.bf16.mxu0 0
      %3071 = vmatpush1.bf16.msra.mxu0 %v3051
      %3072 = vmatprep.subr.bf16.mxu0 0
      %3073 = vmatpush1.bf16.msra.mxu0 %v3052
      %3074 = vmatprep.subr.bf16.mxu0 0
      %3075 = vmatpush1.bf16.msra.mxu0 %v3053
      %3076 = vmatprep.subr.bf16.mxu0 0
      %3077 = vmatpush1.bf16.msra.mxu0 %v3054
      %3078 = vmatprep.subr.bf16.mxu0 0
      %3079 = vmatpush1.bf16.msra.mxu0 %v3055
      %3080 = vmatprep.subr.bf16.mxu0 0
      %3081 = vmatpush1.bf16.msra.mxu0 0
      %3082 = vmatprep.subr.bf16.mxu0 0
      %3083 = vmatpush1.bf16.msra.mxu0 0
      %3084 = vmatprep.subr.bf16.mxu0 0
      %3085 = vmatpush1.bf16.msra.mxu0 0
      %3086 = vmatprep.subr.bf16.mxu0 0
      %3087 = vmatpush1.bf16.msra.mxu0 0
      %3088 = vmatprep.subr.bf16.mxu0 0
      %3089 = vmatpush1.bf16.msra.mxu0 0
      %3090 = vmatprep.subr.bf16.mxu0 0
      %3091 = vmatpush1.bf16.msra.mxu0 0
      %3092 = vmatprep.subr.bf16.mxu0 0
      %3093 = vmatpush1.bf16.msra.mxu0 0
      %3094 = vmatprep.subr.bf16.mxu0 0
      %3095 = vmatpush1.bf16.msra.mxu0 0
      %3096 = vmatprep.mubr.bf16.mxu0 0
      %3097 = vmatmul.mubr.bf16.gmra.mrb[0].mxu0 %v2984
      %v3098 = vpop.f32.mrb[0].mxu0
      %v3099 = vadd.f32 0.0, %v3098
      %v3100 = vpop.f32.mrb[0].mxu0
      %v3101 = vpop.f32.mrb[0].mxu0
      %v3102 = vadd.f32 0.0, %v3101
      %v3103 = vpop.f32.mrb[0].mxu0
      %3104 = vmatprep.mubr.bf16.mxu0 0
      %3105 = vmatmul.mubr.bf16.gmra.mrb[0].mxu0 %v2985
      %v3106 = vpop.f32.mrb[0].mxu0
      %v3107 = vadd.f32 0.0, %v3106
      %v3108 = vpop.f32.mrb[0].mxu0
      %v3109 = vpop.f32.mrb[0].mxu0
      %v3110 = vadd.f32 0.0, %v3109
      %v3111 = vpop.f32.mrb[0].mxu0
      %3112 = vmatprep.mubr.bf16.mxu0 0
      %3113 = vmatmul.mubr.bf16.gmra.mrb[0].mxu0 %v2986
      %v3114 = vpop.f32.mrb[0].mxu0
      %v3115 = vadd.f32 0.0, %v3114
      %v3116 = vpop.f32.mrb[0].mxu0
      %v3117 = vpop.f32.mrb[0].mxu0
      %v3118 = vadd.f32 0.0, %v3117
      %v3119 = vpop.f32.mrb[0].mxu0
      %3120 = vmatprep.mubr.bf16.mxu0 0
      %3121 = vmatmul.mubr.bf16.gmra.mrb[0].mxu0 %v2987
      %v3122 = vpop.f32.mrb[0].mxu0
      %v3123 = vadd.f32 0.0, %v3122
      %v3124 = vpop.f32.mrb[0].mxu0
      %v3125 = vpop.f32.mrb[0].mxu0
      %v3126 = vadd.f32 0.0, %v3125
      %v3127 = vpop.f32.mrb[0].mxu0
      %3128 = vmatprep.mubr.bf16.mxu0 0
      %3129 = vmatmul.mubr.bf16.gmra.mrb[0].mxu0 %v2988
      %v3130 = vpop.f32.mrb[0].mxu0
      %v3131 = vadd.f32 0.0, %v3130
      %v3132 = vpop.f32.mrb[0].mxu0
      %v3133 = vpop.f32.mrb[0].mxu0
      %v3134 = vadd.f32 0.0, %v3133
      %v3135 = vpop.f32.mrb[0].mxu0
      %3136 = vmatprep.mubr.bf16.mxu0 0
      %3137 = vmatmul.mubr.bf16.gmra.mrb[0].mxu0 %v2989
      %v3138 = vpop.f32.mrb[0].mxu0
      %v3139 = vadd.f32 0.0, %v3138
      %v3140 = vpop.f32.mrb[0].mxu0
      %v3141 = vpop.f32.mrb[0].mxu0
      %v3142 = vadd.f32 0.0, %v3141
      %v3143 = vpop.f32.mrb[0].mxu0
      %3144 = vmatprep.mubr.bf16.mxu0 0
      %3145 = vmatmul.mubr.bf16.gmra.mrb[0].mxu0 %v2990
      %v3146 = vpop.f32.mrb[0].mxu0
      %v3147 = vadd.f32 0.0, %v3146
      %v3148 = vpop.f32.mrb[0].mxu0
      %v3149 = vpop.f32.mrb[0].mxu0
      %v3150 = vadd.f32 0.0, %v3149
      %v3151 = vpop.f32.mrb[0].mxu0
      %3152 = vmatprep.mubr.bf16.mxu0 0
      %3153 = vmatmul.mubr.bf16.gmra.mrb[0].mxu0 %v2991
      %v3154 = vpop.f32.mrb[0].mxu0
      %v3155 = vadd.f32 0.0, %v3154
      %v3156 = vpop.f32.mrb[0].mxu0
      %v3157 = vpop.f32.mrb[0].mxu0
      %v3158 = vadd.f32 0.0, %v3157
      %v3159 = vpop.f32.mrb[0].mxu0
      %3160 = vmatprep.mubr.bf16.mxu0 0
      %3161 = vmatmul.mubr.bf16.gmra.mrb[0].mxu0 %v2992
      %v3162 = vpop.f32.mrb[0].mxu0
      %v3163 = vadd.f32 0.0, %v3162
      %v3164 = vpop.f32.mrb[0].mxu0
      %v3165 = vpop.f32.mrb[0].mxu0
      %v3166 = vadd.f32 0.0, %v3165
      %v3167 = vpop.f32.mrb[0].mxu0
      %3168 = vmatprep.mubr.bf16.mxu0 0
      %3169 = vmatmul.mubr.bf16.gmra.mrb[0].mxu0 %v2993
      %v3170 = vpop.f32.mrb[0].mxu0
      %v3171 = vadd.f32 0.0, %v3170
      %v3172 = vpop.f32.mrb[0].mxu0
      %v3173 = vpop.f32.mrb[0].mxu0
      %v3174 = vadd.f32 0.0, %v3173
      %v3175 = vpop.f32.mrb[0].mxu0
      %3176 = vmatprep.mubr.bf16.mxu0 0
      %3177 = vmatmul.mubr.bf16.gmra.mrb[0].mxu0 %v2994
      %v3178 = vpop.f32.mrb[0].mxu0
      %v3179 = vadd.f32 0.0, %v3178
      %v3180 = vpop.f32.mrb[0].mxu0
      %v3181 = vpop.f32.mrb[0].mxu0
      %v3182 = vadd.f32 0.0, %v3181
      %v3183 = vpop.f32.mrb[0].mxu0
      %3184 = vmatprep.mubr.bf16.mxu0 0
      %3185 = vmatmul.mubr.bf16.gmra.mrb[0].mxu0 %v2995
      %v3186 = vpop.f32.mrb[0].mxu0
      %v3187 = vadd.f32 0.0, %v3186
      %v3188 = vpop.f32.mrb[0].mxu0
      %v3189 = vpop.f32.mrb[0].mxu0
      %v3190 = vadd.f32 0.0, %v3189
      %v3191 = vpop.f32.mrb[0].mxu0
      %3192 = vmatprep.mubr.bf16.mxu0 0
      %3193 = vmatmul.mubr.bf16.gmra.mrb[0].mxu0 %v2996
      %v3194 = vpop.f32.mrb[0].mxu0
      %v3195 = vadd.f32 0.0, %v3194
      %v3196 = vpop.f32.mrb[0].mxu0
      %v3197 = vpop.f32.mrb[0].mxu0
      %v3198 = vadd.f32 0.0, %v3197
      %v3199 = vpop.f32.mrb[0].mxu0
      %3200 = vmatprep.mubr.bf16.mxu0 0
      %3201 = vmatmul.mubr.bf16.gmra.mrb[0].mxu0 %v2997
      %v3202 = vpop.f32.mrb[0].mxu0
      %v3203 = vadd.f32 0.0, %v3202
      %v3204 = vpop.f32.mrb[0].mxu0
      %v3205 = vpop.f32.mrb[0].mxu0
      %v3206 = vadd.f32 0.0, %v3205
      %v3207 = vpop.f32.mrb[0].mxu0
      %3208 = vmatprep.mubr.bf16.mxu0 0
      %3209 = vmatmul.mubr.bf16.gmra.mrb[0].mxu0 %v2998
      %v3210 = vpop.f32.mrb[0].mxu0
      %v3211 = vadd.f32 0.0, %v3210
      %v3212 = vpop.f32.mrb[0].mxu0
      %v3213 = vpop.f32.mrb[0].mxu0
      %v3214 = vadd.f32 0.0, %v3213
      %v3215 = vpop.f32.mrb[0].mxu0
      %3216 = vmatprep.mubr.bf16.mxu0 0
      %3217 = vmatmul.mubr.bf16.gmra.mrb[0].mxu0 %v2999
      %v3218 = vpop.f32.mrb[0].mxu0
      %v3219 = vadd.f32 0.0, %v3218
      %v3220 = vpop.f32.mrb[0].mxu0
      %v3221 = vpop.f32.mrb[0].mxu0
      %v3222 = vadd.f32 0.0, %v3221
      %v3223 = vpop.f32.mrb[0].mxu0
      %3224 = vdwg.mxu0
      %v3225 = vadd.f32 %v2464, %v3099
      %v3226 = vadd.f32 %v2465, %v3102
      %v3227 = vadd.f32 %v2466, %v3107
      %v3228 = vadd.f32 %v2467, %v3110
      %v3229 = vadd.f32 %v2468, %v3115
      %v3230 = vadd.f32 %v2469, %v3118
      %v3231 = vadd.f32 %v2470, %v3123
      %v3232 = vadd.f32 %v2471, %v3126
      %v3233 = vadd.f32 %v2472, %v3131
      %v3234 = vadd.f32 %v2473, %v3134
      %v3235 = vadd.f32 %v2474, %v3139
      %v3236 = vadd.f32 %v2475, %v3142
      %v3237 = vadd.f32 %v2476, %v3147
      %v3238 = vadd.f32 %v2477, %v3150
      %v3239 = vadd.f32 %v2478, %v3155
      %v3240 = vadd.f32 %v2479, %v3158
      %v3241 = vadd.f32 %v2480, %v3163
      %v3242 = vadd.f32 %v2481, %v3166
      %v3243 = vadd.f32 %v2482, %v3171
      %v3244 = vadd.f32 %v2483, %v3174
      %v3245 = vadd.f32 %v2484, %v3179
      %v3246 = vadd.f32 %v2485, %v3182
      %v3247 = vadd.f32 %v2486, %v3187
      %v3248 = vadd.f32 %v2487, %v3190
      %v3249 = vadd.f32 %v2488, %v3195
      %v3250 = vadd.f32 %v2489, %v3198
      %v3251 = vadd.f32 %v2490, %v3203
      %v3252 = vadd.f32 %v2491, %v3206
      %v3253 = vadd.f32 %v2492, %v3211
      %v3254 = vadd.f32 %v2493, %v3214
      %v3255 = vadd.f32 %v2494, %v3219
      %v3256 = vadd.f32 %v2495, %v3222
      %v3257 = vld [vmem:[%s1 + $0x10] sm:$0xf]
      %v3258 = vld [vmem:[%s1 + $0x28] sm:$0xf]
      %v3259 = vld [vmem:[%s1 + $0x40] sm:$0xf]
      %v3260 = vld [vmem:[%s1 + $0x58] sm:$0xf]
      %v3261 = vld [vmem:[%s1 + $0x70] sm:$0xf]
      %v3262 = vld [vmem:[%s1 + $0x88] sm:$0xf]
      %v3263 = vld [vmem:[%s1 + $0xa0] sm:$0xf]
      %v3264 = vld [vmem:[%s1 + $0xb8] sm:$0xf]
      %v3265 = vld [vmem:[%s1 + $0xd0] sm:$0xf]
      %v3266 = vld [vmem:[%s1 + $0xe8] sm:$0xf]
      %v3267 = vld [vmem:[%s1 + $0x100] sm:$0xf]
      %v3268 = vld [vmem:[%s1 + $0x118] sm:$0xf]
      %v3269 = vld [vmem:[%s1 + $0x130] sm:$0xf]
      %v3270 = vld [vmem:[%s1 + $0x148] sm:$0xf]
      %v3271 = vld [vmem:[%s1 + $0x160] sm:$0xf]
      %v3272 = vld [vmem:[%s1 + $0x178] sm:$0xf]
      %v3273 = vld [vmem:[%s2 + $0x4] sm:$0x1]
      %v3275 = vlaneseq
      %v3276 = vshrl.u32 %v3275, 7
      %v3277 = vsub.s32 0, %v3276
      %v3278 = vrot.slane %v3273, %v3277
      %v3296 = vunpack.c.l.b16 %v3257
      %v3297 = vunpack.c.l.b16 %v3258
      %v3298 = vunpack.c.l.b16 %v3259
      %v3299 = vunpack.c.l.b16 %v3260
      %v3300 = vunpack.c.l.b16 %v3261
      %v3301 = vunpack.c.l.b16 %v3262
      %v3302 = vunpack.c.l.b16 %v3263
      %v3303 = vunpack.c.l.b16 %v3264
      %v3304 = vunpack.c.l.b16 %v3265
      %v3305 = vunpack.c.l.b16 %v3266
      %v3306 = vunpack.c.l.b16 %v3267
      %v3307 = vunpack.c.l.b16 %v3268
      %v3308 = vunpack.c.l.b16 %v3269
      %v3309 = vunpack.c.l.b16 %v3270
      %v3310 = vunpack.c.l.b16 %v3271
      %v3311 = vunpack.c.l.b16 %v3272
      %v3312 = vpack.c.b16 %v3297, %v3296
      %v3313 = vpack.c.b16 %v3299, %v3298
      %v3314 = vpack.c.b16 %v3301, %v3300
      %v3315 = vpack.c.b16 %v3303, %v3302
      %v3316 = vpack.c.b16 %v3305, %v3304
      %v3317 = vpack.c.b16 %v3307, %v3306
      %v3318 = vpack.c.b16 %v3309, %v3308
      %v3319 = vpack.c.b16 %v3311, %v3310
      %3328 = vmatprep.subr.bf16.mxu0 0
      %3329 = vmatpush1.bf16.msra.mxu0 %v3312
      %3330 = vmatprep.subr.bf16.mxu0 0
      %3331 = vmatpush1.bf16.msra.mxu0 %v3313
      %3332 = vmatprep.subr.bf16.mxu0 0
      %3333 = vmatpush1.bf16.msra.mxu0 %v3314
      %3334 = vmatprep.subr.bf16.mxu0 0
      %3335 = vmatpush1.bf16.msra.mxu0 %v3315
      %3336 = vmatprep.subr.bf16.mxu0 0
      %3337 = vmatpush1.bf16.msra.mxu0 %v3316
      %3338 = vmatprep.subr.bf16.mxu0 0
      %3339 = vmatpush1.bf16.msra.mxu0 %v3317
      %3340 = vmatprep.subr.bf16.mxu0 0
      %3341 = vmatpush1.bf16.msra.mxu0 %v3318
      %3342 = vmatprep.subr.bf16.mxu0 0
      %3343 = vmatpush1.bf16.msra.mxu0 %v3319
      %3344 = vmatprep.subr.bf16.mxu0 0
      %3345 = vmatpush1.bf16.msra.mxu0 0
      %3346 = vmatprep.subr.bf16.mxu0 0
      %3347 = vmatpush1.bf16.msra.mxu0 0
      %3348 = vmatprep.subr.bf16.mxu0 0
      %3349 = vmatpush1.bf16.msra.mxu0 0
      %3350 = vmatprep.subr.bf16.mxu0 0
      %3351 = vmatpush1.bf16.msra.mxu0 0
      %3352 = vmatprep.subr.bf16.mxu0 0
      %3353 = vmatpush1.bf16.msra.mxu0 0
      %3354 = vmatprep.subr.bf16.mxu0 0
      %3355 = vmatpush1.bf16.msra.mxu0 0
      %3356 = vmatprep.subr.bf16.mxu0 0
      %3357 = vmatpush1.bf16.msra.mxu0 0
      %3358 = vmatprep.subr.bf16.mxu0 0
      %3359 = vmatpush1.bf16.msra.mxu0 0
      %3360 = vmatprep.mubr.bf16.mxu0 0
      %3361 = vmatmul.mubr.bf16.gmra.mrb[0].mxu0 %v261
      %v3362 = vpop.f32.mrb[0].mxu0
      %v3363 = vadd.f32 %v3278, %v3362
      %v3364 = vpop.f32.mrb[0].mxu0
      %v3365 = vpop.f32.mrb[0].mxu0
      %v3366 = vadd.f32 %v3278, %v3365
      %v3367 = vpop.f32.mrb[0].mxu0
      %3368 = vmatprep.mubr.bf16.mxu0 0
      %3369 = vmatmul.mubr.bf16.gmra.mrb[0].mxu0 %v262
      %v3370 = vpop.f32.mrb[0].mxu0
      %v3371 = vadd.f32 %v3278, %v3370
      %v3372 = vpop.f32.mrb[0].mxu0
      %v3373 = vpop.f32.mrb[0].mxu0
      %v3374 = vadd.f32 %v3278, %v3373
      %v3375 = vpop.f32.mrb[0].mxu0
      %3376 = vmatprep.mubr.bf16.mxu0 0
      %3377 = vmatmul.mubr.bf16.gmra.mrb[0].mxu0 %v263
      %v3378 = vpop.f32.mrb[0].mxu0
      %v3379 = vadd.f32 %v3278, %v3378
      %v3380 = vpop.f32.mrb[0].mxu0
      %v3381 = vpop.f32.mrb[0].mxu0
      %v3382 = vadd.f32 %v3278, %v3381
      %v3383 = vpop.f32.mrb[0].mxu0
      %3384 = vmatprep.mubr.bf16.mxu0 0
      %3385 = vmatmul.mubr.bf16.gmra.mrb[0].mxu0 %v264
      %v3386 = vpop.f32.mrb[0].mxu0
      %v3387 = vadd.f32 %v3278, %v3386
      %v3388 = vpop.f32.mrb[0].mxu0
      %v3389 = vpop.f32.mrb[0].mxu0
      %v3390 = vadd.f32 %v3278, %v3389
      %v3391 = vpop.f32.mrb[0].mxu0
      %3392 = vmatprep.mubr.bf16.mxu0 0
      %3393 = vmatmul.mubr.bf16.gmra.mrb[0].mxu0 %v265
      %v3394 = vpop.f32.mrb[0].mxu0
      %v3395 = vadd.f32 %v3278, %v3394
      %v3396 = vpop.f32.mrb[0].mxu0
      %v3397 = vpop.f32.mrb[0].mxu0
      %v3398 = vadd.f32 %v3278, %v3397
      %v3399 = vpop.f32.mrb[0].mxu0
      %3400 = vmatprep.mubr.bf16.mxu0 0
      %3401 = vmatmul.mubr.bf16.gmra.mrb[0].mxu0 %v266
      %v3402 = vpop.f32.mrb[0].mxu0
      %v3403 = vadd.f32 %v3278, %v3402
      %v3404 = vpop.f32.mrb[0].mxu0
      %v3405 = vpop.f32.mrb[0].mxu0
      %v3406 = vadd.f32 %v3278, %v3405
      %v3407 = vpop.f32.mrb[0].mxu0
      %3408 = vmatprep.mubr.bf16.mxu0 0
      %3409 = vmatmul.mubr.bf16.gmra.mrb[0].mxu0 %v267
      %v3410 = vpop.f32.mrb[0].mxu0
      %v3411 = vadd.f32 %v3278, %v3410
      %v3412 = vpop.f32.mrb[0].mxu0
      %v3413 = vpop.f32.mrb[0].mxu0
      %v3414 = vadd.f32 %v3278, %v3413
      %v3415 = vpop.f32.mrb[0].mxu0
      %3416 = vmatprep.mubr.bf16.mxu0 0
      %3417 = vmatmul.mubr.bf16.gmra.mrb[0].mxu0 %v268
      %v3418 = vpop.f32.mrb[0].mxu0
      %v3419 = vadd.f32 %v3278, %v3418
      %v3420 = vpop.f32.mrb[0].mxu0
      %v3421 = vpop.f32.mrb[0].mxu0
      %v3422 = vadd.f32 %v3278, %v3421
      %v3423 = vpop.f32.mrb[0].mxu0
      %3424 = vmatprep.mubr.bf16.mxu0 0
      %3425 = vmatmul.mubr.bf16.gmra.mrb[0].mxu0 %v269
      %v3426 = vpop.f32.mrb[0].mxu0
      %v3427 = vadd.f32 %v3278, %v3426
      %v3428 = vpop.f32.mrb[0].mxu0
      %v3429 = vpop.f32.mrb[0].mxu0
      %v3430 = vadd.f32 %v3278, %v3429
      %v3431 = vpop.f32.mrb[0].mxu0
      %3432 = vmatprep.mubr.bf16.mxu0 0
      %3433 = vmatmul.mubr.bf16.gmra.mrb[0].mxu0 %v270
      %v3434 = vpop.f32.mrb[0].mxu0
      %v3435 = vadd.f32 %v3278, %v3434
      %v3436 = vpop.f32.mrb[0].mxu0
      %v3437 = vpop.f32.mrb[0].mxu0
      %v3438 = vadd.f32 %v3278, %v3437
      %v3439 = vpop.f32.mrb[0].mxu0
      %3440 = vmatprep.mubr.bf16.mxu0 0
      %3441 = vmatmul.mubr.bf16.gmra.mrb[0].mxu0 %v271
      %v3442 = vpop.f32.mrb[0].mxu0
      %v3443 = vadd.f32 %v3278, %v3442
      %v3444 = vpop.f32.mrb[0].mxu0
      %v3445 = vpop.f32.mrb[0].mxu0
      %v3446 = vadd.f32 %v3278, %v3445
      %v3447 = vpop.f32.mrb[0].mxu0
      %3448 = vmatprep.mubr.bf16.mxu0 0
      %3449 = vmatmul.mubr.bf16.gmra.mrb[0].mxu0 %v272
      %v3450 = vpop.f32.mrb[0].mxu0
      %v3451 = vadd.f32 %v3278, %v3450
      %v3452 = vpop.f32.mrb[0].mxu0
      %v3453 = vpop.f32.mrb[0].mxu0
      %v3454 = vadd.f32 %v3278, %v3453
      %v3455 = vpop.f32.mrb[0].mxu0
      %3456 = vmatprep.mubr.bf16.mxu0 0
      %3457 = vmatmul.mubr.bf16.gmra.mrb[0].mxu0 %v273
      %v3458 = vpop.f32.mrb[0].mxu0
      %v3459 = vadd.f32 %v3278, %v3458
      %v3460 = vpop.f32.mrb[0].mxu0
      %v3461 = vpop.f32.mrb[0].mxu0
      %v3462 = vadd.f32 %v3278, %v3461
      %v3463 = vpop.f32.mrb[0].mxu0
      %3464 = vmatprep.mubr.bf16.mxu0 0
      %3465 = vmatmul.mubr.bf16.gmra.mrb[0].mxu0 %v274
      %v3466 = vpop.f32.mrb[0].mxu0
      %v3467 = vadd.f32 %v3278, %v3466
      %v3468 = vpop.f32.mrb[0].mxu0
      %v3469 = vpop.f32.mrb[0].mxu0
      %v3470 = vadd.f32 %v3278, %v3469
      %v3471 = vpop.f32.mrb[0].mxu0
      %3472 = vmatprep.mubr.bf16.mxu0 0
      %3473 = vmatmul.mubr.bf16.gmra.mrb[0].mxu0 %v275
      %v3474 = vpop.f32.mrb[0].mxu0
      %v3475 = vadd.f32 %v3278, %v3474
      %v3476 = vpop.f32.mrb[0].mxu0
      %v3477 = vpop.f32.mrb[0].mxu0
      %v3478 = vadd.f32 %v3278, %v3477
      %v3479 = vpop.f32.mrb[0].mxu0
      %3480 = vmatprep.mubr.bf16.mxu0 0
      %3481 = vmatmul.mubr.bf16.gmra.mrb[0].mxu0 %v276
      %v3482 = vpop.f32.mrb[0].mxu0
      %v3483 = vadd.f32 %v3278, %v3482
      %v3484 = vpop.f32.mrb[0].mxu0
      %v3485 = vpop.f32.mrb[0].mxu0
      %v3486 = vadd.f32 %v3278, %v3485
      %v3487 = vpop.f32.mrb[0].mxu0
      %3488 = vdwg.mxu0
      %v3489 = vmul.f32 %v3363, 1.702
      %v3490 = vmul.f32 %v3366, 1.702
      %v3491 = vmul.f32 %v3371, 1.702
      %v3492 = vmul.f32 %v3374, 1.702
      %v3493 = vmul.f32 %v3379, 1.702
      %v3494 = vmul.f32 %v3382, 1.702
      %v3495 = vmul.f32 %v3387, 1.702
      %v3496 = vmul.f32 %v3390, 1.702
      %v3497 = vmul.f32 %v3395, 1.702
      %v3498 = vmul.f32 %v3398, 1.702
      %v3499 = vmul.f32 %v3403, 1.702
      %v3500 = vmul.f32 %v3406, 1.702
      %v3501 = vmul.f32 %v3411, 1.702
      %v3502 = vmul.f32 %v3414, 1.702
      %v3503 = vmul.f32 %v3419, 1.702
      %v3504 = vmul.f32 %v3422, 1.702
      %v3505 = vmul.f32 %v3427, 1.702
      %v3506 = vmul.f32 %v3430, 1.702
      %v3507 = vmul.f32 %v3435, 1.702
      %v3508 = vmul.f32 %v3438, 1.702
      %v3509 = vmul.f32 %v3443, 1.702
      %v3510 = vmul.f32 %v3446, 1.702
      %v3511 = vmul.f32 %v3451, 1.702
      %v3512 = vmul.f32 %v3454, 1.702
      %v3513 = vmul.f32 %v3459, 1.702
      %v3514 = vmul.f32 %v3462, 1.702
      %v3515 = vmul.f32 %v3467, 1.702
      %v3516 = vmul.f32 %v3470, 1.702
      %v3517 = vmul.f32 %v3475, 1.702
      %v3518 = vmul.f32 %v3478, 1.702
      %v3519 = vmul.f32 %v3483, 1.702
      %v3520 = vmul.f32 %v3486, 1.702
      %v3521 = vxor.u32 %v3489, 2147483648
      %v3522 = vxor.u32 %v3490, 2147483648
      %v3523 = vxor.u32 %v3491, 2147483648
      %v3524 = vxor.u32 %v3492, 2147483648
      %v3525 = vxor.u32 %v3493, 2147483648
      %v3526 = vxor.u32 %v3494, 2147483648
      %v3527 = vxor.u32 %v3495, 2147483648
      %v3528 = vxor.u32 %v3496, 2147483648
      %v3529 = vxor.u32 %v3497, 2147483648
      %v3530 = vxor.u32 %v3498, 2147483648
      %v3531 = vxor.u32 %v3499, 2147483648
      %v3532 = vxor.u32 %v3500, 2147483648
      %v3533 = vxor.u32 %v3501, 2147483648
      %v3534 = vxor.u32 %v3502, 2147483648
      %v3535 = vxor.u32 %v3503, 2147483648
      %v3536 = vxor.u32 %v3504, 2147483648
      %v3537 = vxor.u32 %v3505, 2147483648
      %v3538 = vxor.u32 %v3506, 2147483648
      %v3539 = vxor.u32 %v3507, 2147483648
      %v3540 = vxor.u32 %v3508, 2147483648
      %v3541 = vxor.u32 %v3509, 2147483648
      %v3542 = vxor.u32 %v3510, 2147483648
      %v3543 = vxor.u32 %v3511, 2147483648
      %v3544 = vxor.u32 %v3512, 2147483648
      %v3545 = vxor.u32 %v3513, 2147483648
      %v3546 = vxor.u32 %v3514, 2147483648
      %v3547 = vxor.u32 %v3515, 2147483648
      %v3548 = vxor.u32 %v3516, 2147483648
      %v3549 = vxor.u32 %v3517, 2147483648
      %v3550 = vxor.u32 %v3518, 2147483648
      %v3551 = vxor.u32 %v3519, 2147483648
      %v3552 = vxor.u32 %v3520, 2147483648
      %v3553 = vmul.f32 %v3521, 1.442695
      %v3554 = vpow.pop %v3553
      %v3555 = vmul.f32 %v3522, 1.442695
      %v3556 = vpow.pop %v3555
      %v3557 = vmul.f32 %v3523, 1.442695
      %v3558 = vpow.pop %v3557
      %v3559 = vmul.f32 %v3524, 1.442695
      %v3560 = vpow.pop %v3559
      %v3561 = vmul.f32 %v3525, 1.442695
      %v3562 = vpow.pop %v3561
      %v3563 = vmul.f32 %v3526, 1.442695
      %v3564 = vpow.pop %v3563
      %v3565 = vmul.f32 %v3527, 1.442695
      %v3566 = vpow.pop %v3565
      %v3567 = vmul.f32 %v3528, 1.442695
      %v3568 = vpow.pop %v3567
      %v3569 = vmul.f32 %v3529, 1.442695
      %v3570 = vpow.pop %v3569
      %v3571 = vmul.f32 %v3530, 1.442695
      %v3572 = vpow.pop %v3571
      %v3573 = vmul.f32 %v3531, 1.442695
      %v3574 = vpow.pop %v3573
      %v3575 = vmul.f32 %v3532, 1.442695
      %v3576 = vpow.pop %v3575
      %v3577 = vmul.f32 %v3533, 1.442695
      %v3578 = vpow.pop %v3577
      %v3579 = vmul.f32 %v3534, 1.442695
      %v3580 = vpow.pop %v3579
      %v3581 = vmul.f32 %v3535, 1.442695
      %v3582 = vpow.pop %v3581
      %v3583 = vmul.f32 %v3536, 1.442695
      %v3584 = vpow.pop %v3583
      %v3585 = vmul.f32 %v3537, 1.442695
      %v3586 = vpow.pop %v3585
      %v3587 = vmul.f32 %v3538, 1.442695
      %v3588 = vpow.pop %v3587
      %v3589 = vmul.f32 %v3539, 1.442695
      %v3590 = vpow.pop %v3589
      %v3591 = vmul.f32 %v3540, 1.442695
      %v3592 = vpow.pop %v3591
      %v3593 = vmul.f32 %v3541, 1.442695
      %v3594 = vpow.pop %v3593
      %v3595 = vmul.f32 %v3542, 1.442695
      %v3596 = vpow.pop %v3595
      %v3597 = vmul.f32 %v3543, 1.442695
      %v3598 = vpow.pop %v3597
      %v3599 = vmul.f32 %v3544, 1.442695
      %v3600 = vpow.pop %v3599
      %v3601 = vmul.f32 %v3545, 1.442695
      %v3602 = vpow.pop %v3601
      %v3603 = vmul.f32 %v3546, 1.442695
      %v3604 = vpow.pop %v3603
      %v3605 = vmul.f32 %v3547, 1.442695
      %v3606 = vpow.pop %v3605
      %v3607 = vmul.f32 %v3548, 1.442695
      %v3608 = vpow.pop %v3607
      %v3609 = vmul.f32 %v3549, 1.442695
      %v3610 = vpow.pop %v3609
      %v3611 = vmul.f32 %v3550, 1.442695
      %v3612 = vpow.pop %v3611
      %v3613 = vmul.f32 %v3551, 1.442695
      %v3614 = vpow.pop %v3613
      %v3615 = vmul.f32 %v3552, 1.442695
      %v3616 = vpow.pop %v3615
      %v3617 = vadd.f32 %v3554, 1.0
      %v3618 = vadd.f32 %v3556, 1.0
      %v3619 = vadd.f32 %v3558, 1.0
      %v3620 = vadd.f32 %v3560, 1.0
      %v3621 = vadd.f32 %v3562, 1.0
      %v3622 = vadd.f32 %v3564, 1.0
      %v3623 = vadd.f32 %v3566, 1.0
      %v3624 = vadd.f32 %v3568, 1.0
      %v3625 = vadd.f32 %v3570, 1.0
      %v3626 = vadd.f32 %v3572, 1.0
      %v3627 = vadd.f32 %v3574, 1.0
      %v3628 = vadd.f32 %v3576, 1.0
      %v3629 = vadd.f32 %v3578, 1.0
      %v3630 = vadd.f32 %v3580, 1.0
      %v3631 = vadd.f32 %v3582, 1.0
      %v3632 = vadd.f32 %v3584, 1.0
      %v3633 = vadd.f32 %v3586, 1.0
      %v3634 = vadd.f32 %v3588, 1.0
      %v3635 = vadd.f32 %v3590, 1.0
      %v3636 = vadd.f32 %v3592, 1.0
      %v3637 = vadd.f32 %v3594, 1.0
      %v3638 = vadd.f32 %v3596, 1.0
      %v3639 = vadd.f32 %v3598, 1.0
      %v3640 = vadd.f32 %v3600, 1.0
      %v3641 = vadd.f32 %v3602, 1.0
      %v3642 = vadd.f32 %v3604, 1.0
      %v3643 = vadd.f32 %v3606, 1.0
      %v3644 = vadd.f32 %v3608, 1.0
      %v3645 = vadd.f32 %v3610, 1.0
      %v3646 = vadd.f32 %v3612, 1.0
      %v3647 = vadd.f32 %v3614, 1.0
      %v3648 = vadd.f32 %v3616, 1.0
      %v3649 = vrcp.pop %v3617
      %v3650 = vmul.f32 1.0, %v3649
      %v3651 = vrcp.pop %v3618
      %v3652 = vmul.f32 1.0, %v3651
      %v3653 = vrcp.pop %v3619
      %v3654 = vmul.f32 1.0, %v3653
      %v3655 = vrcp.pop %v3620
      %v3656 = vmul.f32 1.0, %v3655
      %v3657 = vrcp.pop %v3621
      %v3658 = vmul.f32 1.0, %v3657
      %v3659 = vrcp.pop %v3622
      %v3660 = vmul.f32 1.0, %v3659
      %v3661 = vrcp.pop %v3623
      %v3662 = vmul.f32 1.0, %v3661
      %v3663 = vrcp.pop %v3624
      %v3664 = vmul.f32 1.0, %v3663
      %v3665 = vrcp.pop %v3625
      %v3666 = vmul.f32 1.0, %v3665
      %v3667 = vrcp.pop %v3626
      %v3668 = vmul.f32 1.0, %v3667
      %v3669 = vrcp.pop %v3627
      %v3670 = vmul.f32 1.0, %v3669
      %v3671 = vrcp.pop %v3628
      %v3672 = vmul.f32 1.0, %v3671
      %v3673 = vrcp.pop %v3629
      %v3674 = vmul.f32 1.0, %v3673
      %v3675 = vrcp.pop %v3630
      %v3676 = vmul.f32 1.0, %v3675
      %v3677 = vrcp.pop %v3631
      %v3678 = vmul.f32 1.0, %v3677
      %v3679 = vrcp.pop %v3632
      %v3680 = vmul.f32 1.0, %v3679
      %v3681 = vrcp.pop %v3633
      %v3682 = vmul.f32 1.0, %v3681
      %v3683 = vrcp.pop %v3634
      %v3684 = vmul.f32 1.0, %v3683
      %v3685 = vrcp.pop %v3635
      %v3686 = vmul.f32 1.0, %v3685
      %v3687 = vrcp.pop %v3636
      %v3688 = vmul.f32 1.0, %v3687
      %v3689 = vrcp.pop %v3637
      %v3690 = vmul.f32 1.0, %v3689
      %v3691 = vrcp.pop %v3638
      %v3692 = vmul.f32 1.0, %v3691
      %v3693 = vrcp.pop %v3639
      %v3694 = vmul.f32 1.0, %v3693
      %v3695 = vrcp.pop %v3640
      %v3696 = vmul.f32 1.0, %v3695
      %v3697 = vrcp.pop %v3641
      %v3698 = vmul.f32 1.0, %v3697
      %v3699 = vrcp.pop %v3642
      %v3700 = vmul.f32 1.0, %v3699
      %v3701 = vrcp.pop %v3643
      %v3702 = vmul.f32 1.0, %v3701
      %v3703 = vrcp.pop %v3644
      %v3704 = vmul.f32 1.0, %v3703
      %v3705 = vrcp.pop %v3645
      %v3706 = vmul.f32 1.0, %v3705
      %v3707 = vrcp.pop %v3646
      %v3708 = vmul.f32 1.0, %v3707
      %v3709 = vrcp.pop %v3647
      %v3710 = vmul.f32 1.0, %v3709
      %v3711 = vrcp.pop %v3648
      %v3712 = vmul.f32 1.0, %v3711
      %v3713 = vmul.f32 %v3363, %v3650
      %v3714 = vmul.f32 %v3366, %v3652
      %v3715 = vmul.f32 %v3371, %v3654
      %v3716 = vmul.f32 %v3374, %v3656
      %v3717 = vmul.f32 %v3379, %v3658
      %v3718 = vmul.f32 %v3382, %v3660
      %v3719 = vmul.f32 %v3387, %v3662
      %v3720 = vmul.f32 %v3390, %v3664
      %v3721 = vmul.f32 %v3395, %v3666
      %v3722 = vmul.f32 %v3398, %v3668
      %v3723 = vmul.f32 %v3403, %v3670
      %v3724 = vmul.f32 %v3406, %v3672
      %v3725 = vmul.f32 %v3411, %v3674
      %v3726 = vmul.f32 %v3414, %v3676
      %v3727 = vmul.f32 %v3419, %v3678
      %v3728 = vmul.f32 %v3422, %v3680
      %v3729 = vmul.f32 %v3427, %v3682
      %v3730 = vmul.f32 %v3430, %v3684
      %v3731 = vmul.f32 %v3435, %v3686
      %v3732 = vmul.f32 %v3438, %v3688
      %v3733 = vmul.f32 %v3443, %v3690
      %v3734 = vmul.f32 %v3446, %v3692
      %v3735 = vmul.f32 %v3451, %v3694
      %v3736 = vmul.f32 %v3454, %v3696
      %v3737 = vmul.f32 %v3459, %v3698
      %v3738 = vmul.f32 %v3462, %v3700
      %v3739 = vmul.f32 %v3467, %v3702
      %v3740 = vmul.f32 %v3470, %v3704
      %v3741 = vmul.f32 %v3475, %v3706
      %v3742 = vmul.f32 %v3478, %v3708
      %v3743 = vmul.f32 %v3483, %v3710
      %v3744 = vmul.f32 %v3486, %v3712
      %v3745 = vpack.c.bf16 %v3714, %v3713
      %v3746 = vpack.c.bf16 %v3716, %v3715
      %v3747 = vpack.c.bf16 %v3718, %v3717
      %v3748 = vpack.c.bf16 %v3720, %v3719
      %v3749 = vpack.c.bf16 %v3722, %v3721
      %v3750 = vpack.c.bf16 %v3724, %v3723
      %v3751 = vpack.c.bf16 %v3726, %v3725
      %v3752 = vpack.c.bf16 %v3728, %v3727
      %v3753 = vpack.c.bf16 %v3730, %v3729
      %v3754 = vpack.c.bf16 %v3732, %v3731
      %v3755 = vpack.c.bf16 %v3734, %v3733
      %v3756 = vpack.c.bf16 %v3736, %v3735
      %v3757 = vpack.c.bf16 %v3738, %v3737
      %v3758 = vpack.c.bf16 %v3740, %v3739
      %v3759 = vpack.c.bf16 %v3742, %v3741
      %v3760 = vpack.c.bf16 %v3744, %v3743
      %v3761 = vld [vmem:[%s3 + $0x100] sm:$0xf]
      %v3762 = vld [vmem:[%s3 + $0x104] sm:$0xf]
      %v3763 = vld [vmem:[%s3 + $0x108] sm:$0xf]
      %v3764 = vld [vmem:[%s3 + $0x10c] sm:$0xf]
      %v3765 = vld [vmem:[%s3 + $0x110] sm:$0xf]
      %v3766 = vld [vmem:[%s3 + $0x114] sm:$0xf]
      %v3767 = vld [vmem:[%s3 + $0x118] sm:$0xf]
      %v3768 = vld [vmem:[%s3 + $0x11c] sm:$0xf]
      %v3769 = vld [vmem:[%s3 + $0x120] sm:$0xf]
      %v3770 = vld [vmem:[%s3 + $0x124] sm:$0xf]
      %v3771 = vld [vmem:[%s3 + $0x128] sm:$0xf]
      %v3772 = vld [vmem:[%s3 + $0x12c] sm:$0xf]
      %v3773 = vld [vmem:[%s3 + $0x130] sm:$0xf]
      %v3774 = vld [vmem:[%s3 + $0x134] sm:$0xf]
      %v3775 = vld [vmem:[%s3 + $0x138] sm:$0xf]
      %v3776 = vld [vmem:[%s3 + $0x13c] sm:$0xf]
      %v3793 = vunpack.c.l.b16 %v3761
      %v3794 = vunpack.c.l.b16 %v3762
      %v3795 = vunpack.c.l.b16 %v3763
      %v3796 = vunpack.c.l.b16 %v3764
      %v3797 = vunpack.c.l.b16 %v3765
      %v3798 = vunpack.c.l.b16 %v3766
      %v3799 = vunpack.c.l.b16 %v3767
      %v3800 = vunpack.c.l.b16 %v3768
      %v3801 = vunpack.c.l.b16 %v3769
      %v3802 = vunpack.c.l.b16 %v3770
      %v3803 = vunpack.c.l.b16 %v3771
      %v3804 = vunpack.c.l.b16 %v3772
      %v3805 = vunpack.c.l.b16 %v3773
      %v3806 = vunpack.c.l.b16 %v3774
      %v3807 = vunpack.c.l.b16 %v3775
      %v3808 = vunpack.c.l.b16 %v3776
      %v3809 = vpack.c.b16 %v3794, %v3793
      %v3810 = vpack.c.b16 %v3796, %v3795
      %v3811 = vpack.c.b16 %v3798, %v3797
      %v3812 = vpack.c.b16 %v3800, %v3799
      %v3813 = vpack.c.b16 %v3802, %v3801
      %v3814 = vpack.c.b16 %v3804, %v3803
      %v3815 = vpack.c.b16 %v3806, %v3805
      %v3816 = vpack.c.b16 %v3808, %v3807
      %3825 = vmatprep.subr.bf16.mxu0 0
      %3826 = vmatpush1.bf16.msra.mxu0 %v3809
      %3827 = vmatprep.subr.bf16.mxu0 0
      %3828 = vmatpush1.bf16.msra.mxu0 %v3810
      %3829 = vmatprep.subr.bf16.mxu0 0
      %3830 = vmatpush1.bf16.msra.mxu0 %v3811
      %3831 = vmatprep.subr.bf16.mxu0 0
      %3832 = vmatpush1.bf16.msra.mxu0 %v3812
      %3833 = vmatprep.subr.bf16.mxu0 0
      %3834 = vmatpush1.bf16.msra.mxu0 %v3813
      %3835 = vmatprep.subr.bf16.mxu0 0
      %3836 = vmatpush1.bf16.msra.mxu0 %v3814
      %3837 = vmatprep.subr.bf16.mxu0 0
      %3838 = vmatpush1.bf16.msra.mxu0 %v3815
      %3839 = vmatprep.subr.bf16.mxu0 0
      %3840 = vmatpush1.bf16.msra.mxu0 %v3816
      %3841 = vmatprep.subr.bf16.mxu0 0
      %3842 = vmatpush1.bf16.msra.mxu0 0
      %3843 = vmatprep.subr.bf16.mxu0 0
      %3844 = vmatpush1.bf16.msra.mxu0 0
      %3845 = vmatprep.subr.bf16.mxu0 0
      %3846 = vmatpush1.bf16.msra.mxu0 0
      %3847 = vmatprep.subr.bf16.mxu0 0
      %3848 = vmatpush1.bf16.msra.mxu0 0
      %3849 = vmatprep.subr.bf16.mxu0 0
      %3850 = vmatpush1.bf16.msra.mxu0 0
      %3851 = vmatprep.subr.bf16.mxu0 0
      %3852 = vmatpush1.bf16.msra.mxu0 0
      %3853 = vmatprep.subr.bf16.mxu0 0
      %3854 = vmatpush1.bf16.msra.mxu0 0
      %3855 = vmatprep.subr.bf16.mxu0 0
      %3856 = vmatpush1.bf16.msra.mxu0 0
      %3857 = vmatprep.mubr.bf16.mxu0 0
      %3858 = vmatmul.mubr.bf16.gmra.mrb[0].mxu0 %v3745
      %v3859 = vpop.f32.mrb[0].mxu0
      %v3860 = vadd.f32 0.0, %v3859
      %v3861 = vpop.f32.mrb[0].mxu0
      %v3862 = vpop.f32.mrb[0].mxu0
      %v3863 = vadd.f32 0.0, %v3862
      %v3864 = vpop.f32.mrb[0].mxu0
      %3865 = vmatprep.mubr.bf16.mxu0 0
      %3866 = vmatmul.mubr.bf16.gmra.mrb[0].mxu0 %v3746
      %v3867 = vpop.f32.mrb[0].mxu0
      %v3868 = vadd.f32 0.0, %v3867
      %v3869 = vpop.f32.mrb[0].mxu0
      %v3870 = vpop.f32.mrb[0].mxu0
      %v3871 = vadd.f32 0.0, %v3870
      %v3872 = vpop.f32.mrb[0].mxu0
      %3873 = vmatprep.mubr.bf16.mxu0 0
      %3874 = vmatmul.mubr.bf16.gmra.mrb[0].mxu0 %v3747
      %v3875 = vpop.f32.mrb[0].mxu0
      %v3876 = vadd.f32 0.0, %v3875
      %v3877 = vpop.f32.mrb[0].mxu0
      %v3878 = vpop.f32.mrb[0].mxu0
      %v3879 = vadd.f32 0.0, %v3878
      %v3880 = vpop.f32.mrb[0].mxu0
      %3881 = vmatprep.mubr.bf16.mxu0 0
      %3882 = vmatmul.mubr.bf16.gmra.mrb[0].mxu0 %v3748
      %v3883 = vpop.f32.mrb[0].mxu0
      %v3884 = vadd.f32 0.0, %v3883
      %v3885 = vpop.f32.mrb[0].mxu0
      %v3886 = vpop.f32.mrb[0].mxu0
      %v3887 = vadd.f32 0.0, %v3886
      %v3888 = vpop.f32.mrb[0].mxu0
      %3889 = vmatprep.mubr.bf16.mxu0 0
      %3890 = vmatmul.mubr.bf16.gmra.mrb[0].mxu0 %v3749
      %v3891 = vpop.f32.mrb[0].mxu0
      %v3892 = vadd.f32 0.0, %v3891
      %v3893 = vpop.f32.mrb[0].mxu0
      %v3894 = vpop.f32.mrb[0].mxu0
      %v3895 = vadd.f32 0.0, %v3894
      %v3896 = vpop.f32.mrb[0].mxu0
      %3897 = vmatprep.mubr.bf16.mxu0 0
      %3898 = vmatmul.mubr.bf16.gmra.mrb[0].mxu0 %v3750
      %v3899 = vpop.f32.mrb[0].mxu0
      %v3900 = vadd.f32 0.0, %v3899
      %v3901 = vpop.f32.mrb[0].mxu0
      %v3902 = vpop.f32.mrb[0].mxu0
      %v3903 = vadd.f32 0.0, %v3902
      %v3904 = vpop.f32.mrb[0].mxu0
      %3905 = vmatprep.mubr.bf16.mxu0 0
      %3906 = vmatmul.mubr.bf16.gmra.mrb[0].mxu0 %v3751
      %v3907 = vpop.f32.mrb[0].mxu0
      %v3908 = vadd.f32 0.0, %v3907
      %v3909 = vpop.f32.mrb[0].mxu0
      %v3910 = vpop.f32.mrb[0].mxu0
      %v3911 = vadd.f32 0.0, %v3910
      %v3912 = vpop.f32.mrb[0].mxu0
      %3913 = vmatprep.mubr.bf16.mxu0 0
      %3914 = vmatmul.mubr.bf16.gmra.mrb[0].mxu0 %v3752
      %v3915 = vpop.f32.mrb[0].mxu0
      %v3916 = vadd.f32 0.0, %v3915
      %v3917 = vpop.f32.mrb[0].mxu0
      %v3918 = vpop.f32.mrb[0].mxu0
      %v3919 = vadd.f32 0.0, %v3918
      %v3920 = vpop.f32.mrb[0].mxu0
      %3921 = vmatprep.mubr.bf16.mxu0 0
      %3922 = vmatmul.mubr.bf16.gmra.mrb[0].mxu0 %v3753
      %v3923 = vpop.f32.mrb[0].mxu0
      %v3924 = vadd.f32 0.0, %v3923
      %v3925 = vpop.f32.mrb[0].mxu0
      %v3926 = vpop.f32.mrb[0].mxu0
      %v3927 = vadd.f32 0.0, %v3926
      %v3928 = vpop.f32.mrb[0].mxu0
      %3929 = vmatprep.mubr.bf16.mxu0 0
      %3930 = vmatmul.mubr.bf16.gmra.mrb[0].mxu0 %v3754
      %v3931 = vpop.f32.mrb[0].mxu0
      %v3932 = vadd.f32 0.0, %v3931
      %v3933 = vpop.f32.mrb[0].mxu0
      %v3934 = vpop.f32.mrb[0].mxu0
      %v3935 = vadd.f32 0.0, %v3934
      %v3936 = vpop.f32.mrb[0].mxu0
      %3937 = vmatprep.mubr.bf16.mxu0 0
      %3938 = vmatmul.mubr.bf16.gmra.mrb[0].mxu0 %v3755
      %v3939 = vpop.f32.mrb[0].mxu0
      %v3940 = vadd.f32 0.0, %v3939
      %v3941 = vpop.f32.mrb[0].mxu0
      %v3942 = vpop.f32.mrb[0].mxu0
      %v3943 = vadd.f32 0.0, %v3942
      %v3944 = vpop.f32.mrb[0].mxu0
      %3945 = vmatprep.mubr.bf16.mxu0 0
      %3946 = vmatmul.mubr.bf16.gmra.mrb[0].mxu0 %v3756
      %v3947 = vpop.f32.mrb[0].mxu0
      %v3948 = vadd.f32 0.0, %v3947
      %v3949 = vpop.f32.mrb[0].mxu0
      %v3950 = vpop.f32.mrb[0].mxu0
      %v3951 = vadd.f32 0.0, %v3950
      %v3952 = vpop.f32.mrb[0].mxu0
      %3953 = vmatprep.mubr.bf16.mxu0 0
      %3954 = vmatmul.mubr.bf16.gmra.mrb[0].mxu0 %v3757
      %v3955 = vpop.f32.mrb[0].mxu0
      %v3956 = vadd.f32 0.0, %v3955
      %v3957 = vpop.f32.mrb[0].mxu0
      %v3958 = vpop.f32.mrb[0].mxu0
      %v3959 = vadd.f32 0.0, %v3958
      %v3960 = vpop.f32.mrb[0].mxu0
      %3961 = vmatprep.mubr.bf16.mxu0 0
      %3962 = vmatmul.mubr.bf16.gmra.mrb[0].mxu0 %v3758
      %v3963 = vpop.f32.mrb[0].mxu0
      %v3964 = vadd.f32 0.0, %v3963
      %v3965 = vpop.f32.mrb[0].mxu0
      %v3966 = vpop.f32.mrb[0].mxu0
      %v3967 = vadd.f32 0.0, %v3966
      %v3968 = vpop.f32.mrb[0].mxu0
      %3969 = vmatprep.mubr.bf16.mxu0 0
      %3970 = vmatmul.mubr.bf16.gmra.mrb[0].mxu0 %v3759
      %v3971 = vpop.f32.mrb[0].mxu0
      %v3972 = vadd.f32 0.0, %v3971
      %v3973 = vpop.f32.mrb[0].mxu0
      %v3974 = vpop.f32.mrb[0].mxu0
      %v3975 = vadd.f32 0.0, %v3974
      %v3976 = vpop.f32.mrb[0].mxu0
      %3977 = vmatprep.mubr.bf16.mxu0 0
      %3978 = vmatmul.mubr.bf16.gmra.mrb[0].mxu0 %v3760
      %v3979 = vpop.f32.mrb[0].mxu0
      %v3980 = vadd.f32 0.0, %v3979
      %v3981 = vpop.f32.mrb[0].mxu0
      %v3982 = vpop.f32.mrb[0].mxu0
      %v3983 = vadd.f32 0.0, %v3982
      %v3984 = vpop.f32.mrb[0].mxu0
      %3985 = vdwg.mxu0
      %v3986 = vadd.f32 %v3225, %v3860
      %v3987 = vadd.f32 %v3226, %v3863
      %v3988 = vadd.f32 %v3227, %v3868
      %v3989 = vadd.f32 %v3228, %v3871
      %v3990 = vadd.f32 %v3229, %v3876
      %v3991 = vadd.f32 %v3230, %v3879
      %v3992 = vadd.f32 %v3231, %v3884
      %v3993 = vadd.f32 %v3232, %v3887
      %v3994 = vadd.f32 %v3233, %v3892
      %v3995 = vadd.f32 %v3234, %v3895
      %v3996 = vadd.f32 %v3235, %v3900
      %v3997 = vadd.f32 %v3236, %v3903
      %v3998 = vadd.f32 %v3237, %v3908
      %v3999 = vadd.f32 %v3238, %v3911
      %v4000 = vadd.f32 %v3239, %v3916
      %v4001 = vadd.f32 %v3240, %v3919
      %v4002 = vadd.f32 %v3241, %v3924
      %v4003 = vadd.f32 %v3242, %v3927
      %v4004 = vadd.f32 %v3243, %v3932
      %v4005 = vadd.f32 %v3244, %v3935
      %v4006 = vadd.f32 %v3245, %v3940
      %v4007 = vadd.f32 %v3246, %v3943
      %v4008 = vadd.f32 %v3247, %v3948
      %v4009 = vadd.f32 %v3248, %v3951
      %v4010 = vadd.f32 %v3249, %v3956
      %v4011 = vadd.f32 %v3250, %v3959
      %v4012 = vadd.f32 %v3251, %v3964
      %v4013 = vadd.f32 %v3252, %v3967
      %v4014 = vadd.f32 %v3253, %v3972
      %v4015 = vadd.f32 %v3254, %v3975
      %v4016 = vadd.f32 %v3255, %v3980
      %v4017 = vadd.f32 %v3256, %v3983
      %v4018 = vld [vmem:[%s1 + $0x14] sm:$0xf]
      %v4019 = vld [vmem:[%s1 + $0x2c] sm:$0xf]
      %v4020 = vld [vmem:[%s1 + $0x44] sm:$0xf]
      %v4021 = vld [vmem:[%s1 + $0x5c] sm:$0xf]
      %v4022 = vld [vmem:[%s1 + $0x74] sm:$0xf]
      %v4023 = vld [vmem:[%s1 + $0x8c] sm:$0xf]
      %v4024 = vld [vmem:[%s1 + $0xa4] sm:$0xf]
      %v4025 = vld [vmem:[%s1 + $0xbc] sm:$0xf]
      %v4026 = vld [vmem:[%s1 + $0xd4] sm:$0xf]
      %v4027 = vld [vmem:[%s1 + $0xec] sm:$0xf]
      %v4028 = vld [vmem:[%s1 + $0x104] sm:$0xf]
      %v4029 = vld [vmem:[%s1 + $0x11c] sm:$0xf]
      %v4030 = vld [vmem:[%s1 + $0x134] sm:$0xf]
      %v4031 = vld [vmem:[%s1 + $0x14c] sm:$0xf]
      %v4032 = vld [vmem:[%s1 + $0x164] sm:$0xf]
      %v4033 = vld [vmem:[%s1 + $0x17c] sm:$0xf]
      %v4034 = vld [vmem:[%s2 + $0x5] sm:$0x1]
      %v4036 = vlaneseq
      %v4037 = vshrl.u32 %v4036, 7
      %v4038 = vsub.s32 0, %v4037
      %v4039 = vrot.slane %v4034, %v4038
      %v4057 = vunpack.c.l.b16 %v4018
      %v4058 = vunpack.c.l.b16 %v4019
      %v4059 = vunpack.c.l.b16 %v4020
      %v4060 = vunpack.c.l.b16 %v4021
      %v4061 = vunpack.c.l.b16 %v4022
      %v4062 = vunpack.c.l.b16 %v4023
      %v4063 = vunpack.c.l.b16 %v4024
      %v4064 = vunpack.c.l.b16 %v4025
      %v4065 = vunpack.c.l.b16 %v4026
      %v4066 = vunpack.c.l.b16 %v4027
      %v4067 = vunpack.c.l.b16 %v4028
      %v4068 = vunpack.c.l.b16 %v4029
      %v4069 = vunpack.c.l.b16 %v4030
      %v4070 = vunpack.c.l.b16 %v4031
      %v4071 = vunpack.c.l.b16 %v4032
      %v4072 = vunpack.c.l.b16 %v4033
      %v4073 = vpack.c.b16 %v4058, %v4057
      %v4074 = vpack.c.b16 %v4060, %v4059
      %v4075 = vpack.c.b16 %v4062, %v4061
      %v4076 = vpack.c.b16 %v4064, %v4063
      %v4077 = vpack.c.b16 %v4066, %v4065
      %v4078 = vpack.c.b16 %v4068, %v4067
      %v4079 = vpack.c.b16 %v4070, %v4069
      %v4080 = vpack.c.b16 %v4072, %v4071
      %4089 = vmatprep.subr.bf16.mxu0 0
      %4090 = vmatpush1.bf16.msra.mxu0 %v4073
      %4091 = vmatprep.subr.bf16.mxu0 0
      %4092 = vmatpush1.bf16.msra.mxu0 %v4074
      %4093 = vmatprep.subr.bf16.mxu0 0
      %4094 = vmatpush1.bf16.msra.mxu0 %v4075
      %4095 = vmatprep.subr.bf16.mxu0 0
      %4096 = vmatpush1.bf16.msra.mxu0 %v4076
      %4097 = vmatprep.subr.bf16.mxu0 0
      %4098 = vmatpush1.bf16.msra.mxu0 %v4077
      %4099 = vmatprep.subr.bf16.mxu0 0
      %4100 = vmatpush1.bf16.msra.mxu0 %v4078
      %4101 = vmatprep.subr.bf16.mxu0 0
      %4102 = vmatpush1.bf16.msra.mxu0 %v4079
      %4103 = vmatprep.subr.bf16.mxu0 0
      %4104 = vmatpush1.bf16.msra.mxu0 %v4080
      %4105 = vmatprep.subr.bf16.mxu0 0
      %4106 = vmatpush1.bf16.msra.mxu0 0
      %4107 = vmatprep.subr.bf16.mxu0 0
      %4108 = vmatpush1.bf16.msra.mxu0 0
      %4109 = vmatprep.subr.bf16.mxu0 0
      %4110 = vmatpush1.bf16.msra.mxu0 0
      %4111 = vmatprep.subr.bf16.mxu0 0
      %4112 = vmatpush1.bf16.msra.mxu0 0
      %4113 = vmatprep.subr.bf16.mxu0 0
      %4114 = vmatpush1.bf16.msra.mxu0 0
      %4115 = vmatprep.subr.bf16.mxu0 0
      %4116 = vmatpush1.bf16.msra.mxu0 0
      %4117 = vmatprep.subr.bf16.mxu0 0
      %4118 = vmatpush1.bf16.msra.mxu0 0
      %4119 = vmatprep.subr.bf16.mxu0 0
      %4120 = vmatpush1.bf16.msra.mxu0 0
      %4121 = vmatprep.mubr.bf16.mxu0 0
      %4122 = vmatmul.mubr.bf16.gmra.mrb[0].mxu0 %v261
      %v4123 = vpop.f32.mrb[0].mxu0
      %v4124 = vadd.f32 %v4039, %v4123
      %v4125 = vpop.f32.mrb[0].mxu0
      %v4126 = vpop.f32.mrb[0].mxu0
      %v4127 = vadd.f32 %v4039, %v4126
      %v4128 = vpop.f32.mrb[0].mxu0
      %4129 = vmatprep.mubr.bf16.mxu0 0
      %4130 = vmatmul.mubr.bf16.gmra.mrb[0].mxu0 %v262
      %v4131 = vpop.f32.mrb[0].mxu0
      %v4132 = vadd.f32 %v4039, %v4131
      %v4133 = vpop.f32.mrb[0].mxu0
      %v4134 = vpop.f32.mrb[0].mxu0
      %v4135 = vadd.f32 %v4039, %v4134
      %v4136 = vpop.f32.mrb[0].mxu0
      %4137 = vmatprep.mubr.bf16.mxu0 0
      %4138 = vmatmul.mubr.bf16.gmra.mrb[0].mxu0 %v263
      %v4139 = vpop.f32.mrb[0].mxu0
      %v4140 = vadd.f32 %v4039, %v4139
      %v4141 = vpop.f32.mrb[0].mxu0
      %v4142 = vpop.f32.mrb[0].mxu0
      %v4143 = vadd.f32 %v4039, %v4142
      %v4144 = vpop.f32.mrb[0].mxu0
      %4145 = vmatprep.mubr.bf16.mxu0 0
      %4146 = vmatmul.mubr.bf16.gmra.mrb[0].mxu0 %v264
      %v4147 = vpop.f32.mrb[0].mxu0
      %v4148 = vadd.f32 %v4039, %v4147
      %v4149 = vpop.f32.mrb[0].mxu0
      %v4150 = vpop.f32.mrb[0].mxu0
      %v4151 = vadd.f32 %v4039, %v4150
      %v4152 = vpop.f32.mrb[0].mxu0
      %4153 = vmatprep.mubr.bf16.mxu0 0
      %4154 = vmatmul.mubr.bf16.gmra.mrb[0].mxu0 %v265
      %v4155 = vpop.f32.mrb[0].mxu0
      %v4156 = vadd.f32 %v4039, %v4155
      %v4157 = vpop.f32.mrb[0].mxu0
      %v4158 = vpop.f32.mrb[0].mxu0
      %v4159 = vadd.f32 %v4039, %v4158
      %v4160 = vpop.f32.mrb[0].mxu0
      %4161 = vmatprep.mubr.bf16.mxu0 0
      %4162 = vmatmul.mubr.bf16.gmra.mrb[0].mxu0 %v266
      %v4163 = vpop.f32.mrb[0].mxu0
      %v4164 = vadd.f32 %v4039, %v4163
      %v4165 = vpop.f32.mrb[0].mxu0
      %v4166 = vpop.f32.mrb[0].mxu0
      %v4167 = vadd.f32 %v4039, %v4166
      %v4168 = vpop.f32.mrb[0].mxu0
      %4169 = vmatprep.mubr.bf16.mxu0 0
      %4170 = vmatmul.mubr.bf16.gmra.mrb[0].mxu0 %v267
      %v4171 = vpop.f32.mrb[0].mxu0
      %v4172 = vadd.f32 %v4039, %v4171
      %v4173 = vpop.f32.mrb[0].mxu0
      %v4174 = vpop.f32.mrb[0].mxu0
      %v4175 = vadd.f32 %v4039, %v4174
      %v4176 = vpop.f32.mrb[0].mxu0
      %4177 = vmatprep.mubr.bf16.mxu0 0
      %4178 = vmatmul.mubr.bf16.gmra.mrb[0].mxu0 %v268
      %v4179 = vpop.f32.mrb[0].mxu0
      %v4180 = vadd.f32 %v4039, %v4179
      %v4181 = vpop.f32.mrb[0].mxu0
      %v4182 = vpop.f32.mrb[0].mxu0
      %v4183 = vadd.f32 %v4039, %v4182
      %v4184 = vpop.f32.mrb[0].mxu0
      %4185 = vmatprep.mubr.bf16.mxu0 0
      %4186 = vmatmul.mubr.bf16.gmra.mrb[0].mxu0 %v269
      %v4187 = vpop.f32.mrb[0].mxu0
      %v4188 = vadd.f32 %v4039, %v4187
      %v4189 = vpop.f32.mrb[0].mxu0
      %v4190 = vpop.f32.mrb[0].mxu0
      %v4191 = vadd.f32 %v4039, %v4190
      %v4192 = vpop.f32.mrb[0].mxu0
      %4193 = vmatprep.mubr.bf16.mxu0 0
      %4194 = vmatmul.mubr.bf16.gmra.mrb[0].mxu0 %v270
      %v4195 = vpop.f32.mrb[0].mxu0
      %v4196 = vadd.f32 %v4039, %v4195
      %v4197 = vpop.f32.mrb[0].mxu0
      %v4198 = vpop.f32.mrb[0].mxu0
      %v4199 = vadd.f32 %v4039, %v4198
      %v4200 = vpop.f32.mrb[0].mxu0
      %4201 = vmatprep.mubr.bf16.mxu0 0
      %4202 = vmatmul.mubr.bf16.gmra.mrb[0].mxu0 %v271
      %v4203 = vpop.f32.mrb[0].mxu0
      %v4204 = vadd.f32 %v4039, %v4203
      %v4205 = vpop.f32.mrb[0].mxu0
      %v4206 = vpop.f32.mrb[0].mxu0
      %v4207 = vadd.f32 %v4039, %v4206
      %v4208 = vpop.f32.mrb[0].mxu0
      %4209 = vmatprep.mubr.bf16.mxu0 0
      %4210 = vmatmul.mubr.bf16.gmra.mrb[0].mxu0 %v272
      %v4211 = vpop.f32.mrb[0].mxu0
      %v4212 = vadd.f32 %v4039, %v4211
      %v4213 = vpop.f32.mrb[0].mxu0
      %v4214 = vpop.f32.mrb[0].mxu0
      %v4215 = vadd.f32 %v4039, %v4214
      %v4216 = vpop.f32.mrb[0].mxu0
      %4217 = vmatprep.mubr.bf16.mxu0 0
      %4218 = vmatmul.mubr.bf16.gmra.mrb[0].mxu0 %v273
      %v4219 = vpop.f32.mrb[0].mxu0
      %v4220 = vadd.f32 %v4039, %v4219
      %v4221 = vpop.f32.mrb[0].mxu0
      %v4222 = vpop.f32.mrb[0].mxu0
      %v4223 = vadd.f32 %v4039, %v4222
      %v4224 = vpop.f32.mrb[0].mxu0
      %4225 = vmatprep.mubr.bf16.mxu0 0
      %4226 = vmatmul.mubr.bf16.gmra.mrb[0].mxu0 %v274
      %v4227 = vpop.f32.mrb[0].mxu0
      %v4228 = vadd.f32 %v4039, %v4227
      %v4229 = vpop.f32.mrb[0].mxu0
      %v4230 = vpop.f32.mrb[0].mxu0
      %v4231 = vadd.f32 %v4039, %v4230
      %v4232 = vpop.f32.mrb[0].mxu0
      %4233 = vmatprep.mubr.bf16.mxu0 0
      %4234 = vmatmul.mubr.bf16.gmra.mrb[0].mxu0 %v275
      %v4235 = vpop.f32.mrb[0].mxu0
      %v4236 = vadd.f32 %v4039, %v4235
      %v4237 = vpop.f32.mrb[0].mxu0
      %v4238 = vpop.f32.mrb[0].mxu0
      %v4239 = vadd.f32 %v4039, %v4238
      %v4240 = vpop.f32.mrb[0].mxu0
      %4241 = vmatprep.mubr.bf16.mxu0 0
      %4242 = vmatmul.mubr.bf16.gmra.mrb[0].mxu0 %v276
      %v4243 = vpop.f32.mrb[0].mxu0
      %v4244 = vadd.f32 %v4039, %v4243
      %v4245 = vpop.f32.mrb[0].mxu0
      %v4246 = vpop.f32.mrb[0].mxu0
      %v4247 = vadd.f32 %v4039, %v4246
      %v4248 = vpop.f32.mrb[0].mxu0
      %4249 = vdwg.mxu0
      %v4250 = vmul.f32 %v4124, 1.702
      %v4251 = vmul.f32 %v4127, 1.702
      %v4252 = vmul.f32 %v4132, 1.702
      %v4253 = vmul.f32 %v4135, 1.702
      %v4254 = vmul.f32 %v4140, 1.702
      %v4255 = vmul.f32 %v4143, 1.702
      %v4256 = vmul.f32 %v4148, 1.702
      %v4257 = vmul.f32 %v4151, 1.702
      %v4258 = vmul.f32 %v4156, 1.702
      %v4259 = vmul.f32 %v4159, 1.702
      %v4260 = vmul.f32 %v4164, 1.702
      %v4261 = vmul.f32 %v4167, 1.702
      %v4262 = vmul.f32 %v4172, 1.702
      %v4263 = vmul.f32 %v4175, 1.702
      %v4264 = vmul.f32 %v4180, 1.702
      %v4265 = vmul.f32 %v4183, 1.702
      %v4266 = vmul.f32 %v4188, 1.702
      %v4267 = vmul.f32 %v4191, 1.702
      %v4268 = vmul.f32 %v4196, 1.702
      %v4269 = vmul.f32 %v4199, 1.702
      %v4270 = vmul.f32 %v4204, 1.702
      %v4271 = vmul.f32 %v4207, 1.702
      %v4272 = vmul.f32 %v4212, 1.702
      %v4273 = vmul.f32 %v4215, 1.702
      %v4274 = vmul.f32 %v4220, 1.702
      %v4275 = vmul.f32 %v4223, 1.702
      %v4276 = vmul.f32 %v4228, 1.702
      %v4277 = vmul.f32 %v4231, 1.702
      %v4278 = vmul.f32 %v4236, 1.702
      %v4279 = vmul.f32 %v4239, 1.702
      %v4280 = vmul.f32 %v4244, 1.702
      %v4281 = vmul.f32 %v4247, 1.702
      %v4282 = vxor.u32 %v4250, 2147483648
      %v4283 = vxor.u32 %v4251, 2147483648
      %v4284 = vxor.u32 %v4252, 2147483648
      %v4285 = vxor.u32 %v4253, 2147483648
      %v4286 = vxor.u32 %v4254, 2147483648
      %v4287 = vxor.u32 %v4255, 2147483648
      %v4288 = vxor.u32 %v4256, 2147483648
      %v4289 = vxor.u32 %v4257, 2147483648
      %v4290 = vxor.u32 %v4258, 2147483648
      %v4291 = vxor.u32 %v4259, 2147483648
      %v4292 = vxor.u32 %v4260, 2147483648
      %v4293 = vxor.u32 %v4261, 2147483648
      %v4294 = vxor.u32 %v4262, 2147483648
      %v4295 = vxor.u32 %v4263, 2147483648
      %v4296 = vxor.u32 %v4264, 2147483648
      %v4297 = vxor.u32 %v4265, 2147483648
      %v4298 = vxor.u32 %v4266, 2147483648
      %v4299 = vxor.u32 %v4267, 2147483648
      %v4300 = vxor.u32 %v4268, 2147483648
      %v4301 = vxor.u32 %v4269, 2147483648
      %v4302 = vxor.u32 %v4270, 2147483648
      %v4303 = vxor.u32 %v4271, 2147483648
      %v4304 = vxor.u32 %v4272, 2147483648
      %v4305 = vxor.u32 %v4273, 2147483648
      %v4306 = vxor.u32 %v4274, 2147483648
      %v4307 = vxor.u32 %v4275, 2147483648
      %v4308 = vxor.u32 %v4276, 2147483648
      %v4309 = vxor.u32 %v4277, 2147483648
      %v4310 = vxor.u32 %v4278, 2147483648
      %v4311 = vxor.u32 %v4279, 2147483648
      %v4312 = vxor.u32 %v4280, 2147483648
      %v4313 = vxor.u32 %v4281, 2147483648
      %v4314 = vmul.f32 %v4282, 1.442695
      %v4315 = vpow.pop %v4314
      %v4316 = vmul.f32 %v4283, 1.442695
      %v4317 = vpow.pop %v4316
      %v4318 = vmul.f32 %v4284, 1.442695
      %v4319 = vpow.pop %v4318
      %v4320 = vmul.f32 %v4285, 1.442695
      %v4321 = vpow.pop %v4320
      %v4322 = vmul.f32 %v4286, 1.442695
      %v4323 = vpow.pop %v4322
      %v4324 = vmul.f32 %v4287, 1.442695
      %v4325 = vpow.pop %v4324
      %v4326 = vmul.f32 %v4288, 1.442695
      %v4327 = vpow.pop %v4326
      %v4328 = vmul.f32 %v4289, 1.442695
      %v4329 = vpow.pop %v4328
      %v4330 = vmul.f32 %v4290, 1.442695
      %v4331 = vpow.pop %v4330
      %v4332 = vmul.f32 %v4291, 1.442695
      %v4333 = vpow.pop %v4332
      %v4334 = vmul.f32 %v4292, 1.442695
      %v4335 = vpow.pop %v4334
      %v4336 = vmul.f32 %v4293, 1.442695
      %v4337 = vpow.pop %v4336
      %v4338 = vmul.f32 %v4294, 1.442695
      %v4339 = vpow.pop %v4338
      %v4340 = vmul.f32 %v4295, 1.442695
      %v4341 = vpow.pop %v4340
      %v4342 = vmul.f32 %v4296, 1.442695
      %v4343 = vpow.pop %v4342
      %v4344 = vmul.f32 %v4297, 1.442695
      %v4345 = vpow.pop %v4344
      %v4346 = vmul.f32 %v4298, 1.442695
      %v4347 = vpow.pop %v4346
      %v4348 = vmul.f32 %v4299, 1.442695
      %v4349 = vpow.pop %v4348
      %v4350 = vmul.f32 %v4300, 1.442695
      %v4351 = vpow.pop %v4350
      %v4352 = vmul.f32 %v4301, 1.442695
      %v4353 = vpow.pop %v4352
      %v4354 = vmul.f32 %v4302, 1.442695
      %v4355 = vpow.pop %v4354
      %v4356 = vmul.f32 %v4303, 1.442695
      %v4357 = vpow.pop %v4356
      %v4358 = vmul.f32 %v4304, 1.442695
      %v4359 = vpow.pop %v4358
      %v4360 = vmul.f32 %v4305, 1.442695
      %v4361 = vpow.pop %v4360
      %v4362 = vmul.f32 %v4306, 1.442695
      %v4363 = vpow.pop %v4362
      %v4364 = vmul.f32 %v4307, 1.442695
      %v4365 = vpow.pop %v4364
      %v4366 = vmul.f32 %v4308, 1.442695
      %v4367 = vpow.pop %v4366
      %v4368 = vmul.f32 %v4309, 1.442695
      %v4369 = vpow.pop %v4368
      %v4370 = vmul.f32 %v4310, 1.442695
      %v4371 = vpow.pop %v4370
      %v4372 = vmul.f32 %v4311, 1.442695
      %v4373 = vpow.pop %v4372
      %v4374 = vmul.f32 %v4312, 1.442695
      %v4375 = vpow.pop %v4374
      %v4376 = vmul.f32 %v4313, 1.442695
      %v4377 = vpow.pop %v4376
      %v4378 = vadd.f32 %v4315, 1.0
      %v4379 = vadd.f32 %v4317, 1.0
      %v4380 = vadd.f32 %v4319, 1.0
      %v4381 = vadd.f32 %v4321, 1.0
      %v4382 = vadd.f32 %v4323, 1.0
      %v4383 = vadd.f32 %v4325, 1.0
      %v4384 = vadd.f32 %v4327, 1.0
      %v4385 = vadd.f32 %v4329, 1.0
      %v4386 = vadd.f32 %v4331, 1.0
      %v4387 = vadd.f32 %v4333, 1.0
      %v4388 = vadd.f32 %v4335, 1.0
      %v4389 = vadd.f32 %v4337, 1.0
      %v4390 = vadd.f32 %v4339, 1.0
      %v4391 = vadd.f32 %v4341, 1.0
      %v4392 = vadd.f32 %v4343, 1.0
      %v4393 = vadd.f32 %v4345, 1.0
      %v4394 = vadd.f32 %v4347, 1.0
      %v4395 = vadd.f32 %v4349, 1.0
      %v4396 = vadd.f32 %v4351, 1.0
      %v4397 = vadd.f32 %v4353, 1.0
      %v4398 = vadd.f32 %v4355, 1.0
      %v4399 = vadd.f32 %v4357, 1.0
      %v4400 = vadd.f32 %v4359, 1.0
      %v4401 = vadd.f32 %v4361, 1.0
      %v4402 = vadd.f32 %v4363, 1.0
      %v4403 = vadd.f32 %v4365, 1.0
      %v4404 = vadd.f32 %v4367, 1.0
      %v4405 = vadd.f32 %v4369, 1.0
      %v4406 = vadd.f32 %v4371, 1.0
      %v4407 = vadd.f32 %v4373, 1.0
      %v4408 = vadd.f32 %v4375, 1.0
      %v4409 = vadd.f32 %v4377, 1.0
      %v4410 = vrcp.pop %v4378
      %v4411 = vmul.f32 1.0, %v4410
      %v4412 = vrcp.pop %v4379
      %v4413 = vmul.f32 1.0, %v4412
      %v4414 = vrcp.pop %v4380
      %v4415 = vmul.f32 1.0, %v4414
      %v4416 = vrcp.pop %v4381
      %v4417 = vmul.f32 1.0, %v4416
      %v4418 = vrcp.pop %v4382
      %v4419 = vmul.f32 1.0, %v4418
      %v4420 = vrcp.pop %v4383
      %v4421 = vmul.f32 1.0, %v4420
      %v4422 = vrcp.pop %v4384
      %v4423 = vmul.f32 1.0, %v4422
      %v4424 = vrcp.pop %v4385
      %v4425 = vmul.f32 1.0, %v4424
      %v4426 = vrcp.pop %v4386
      %v4427 = vmul.f32 1.0, %v4426
      %v4428 = vrcp.pop %v4387
      %v4429 = vmul.f32 1.0, %v4428
      %v4430 = vrcp.pop %v4388
      %v4431 = vmul.f32 1.0, %v4430
      %v4432 = vrcp.pop %v4389
      %v4433 = vmul.f32 1.0, %v4432
      %v4434 = vrcp.pop %v4390
      %v4435 = vmul.f32 1.0, %v4434
      %v4436 = vrcp.pop %v4391
      %v4437 = vmul.f32 1.0, %v4436
      %v4438 = vrcp.pop %v4392
      %v4439 = vmul.f32 1.0, %v4438
      %v4440 = vrcp.pop %v4393
      %v4441 = vmul.f32 1.0, %v4440
      %v4442 = vrcp.pop %v4394
      %v4443 = vmul.f32 1.0, %v4442
      %v4444 = vrcp.pop %v4395
      %v4445 = vmul.f32 1.0, %v4444
      %v4446 = vrcp.pop %v4396
      %v4447 = vmul.f32 1.0, %v4446
      %v4448 = vrcp.pop %v4397
      %v4449 = vmul.f32 1.0, %v4448
      %v4450 = vrcp.pop %v4398
      %v4451 = vmul.f32 1.0, %v4450
      %v4452 = vrcp.pop %v4399
      %v4453 = vmul.f32 1.0, %v4452
      %v4454 = vrcp.pop %v4400
      %v4455 = vmul.f32 1.0, %v4454
      %v4456 = vrcp.pop %v4401
      %v4457 = vmul.f32 1.0, %v4456
      %v4458 = vrcp.pop %v4402
      %v4459 = vmul.f32 1.0, %v4458
      %v4460 = vrcp.pop %v4403
      %v4461 = vmul.f32 1.0, %v4460
      %v4462 = vrcp.pop %v4404
      %v4463 = vmul.f32 1.0, %v4462
      %v4464 = vrcp.pop %v4405
      %v4465 = vmul.f32 1.0, %v4464
      %v4466 = vrcp.pop %v4406
      %v4467 = vmul.f32 1.0, %v4466
      %v4468 = vrcp.pop %v4407
      %v4469 = vmul.f32 1.0, %v4468
      %v4470 = vrcp.pop %v4408
      %v4471 = vmul.f32 1.0, %v4470
      %v4472 = vrcp.pop %v4409
      %v4473 = vmul.f32 1.0, %v4472
      %v4474 = vmul.f32 %v4124, %v4411
      %v4475 = vmul.f32 %v4127, %v4413
      %v4476 = vmul.f32 %v4132, %v4415
      %v4477 = vmul.f32 %v4135, %v4417
      %v4478 = vmul.f32 %v4140, %v4419
      %v4479 = vmul.f32 %v4143, %v4421
      %v4480 = vmul.f32 %v4148, %v4423
      %v4481 = vmul.f32 %v4151, %v4425
      %v4482 = vmul.f32 %v4156, %v4427
      %v4483 = vmul.f32 %v4159, %v4429
      %v4484 = vmul.f32 %v4164, %v4431
      %v4485 = vmul.f32 %v4167, %v4433
      %v4486 = vmul.f32 %v4172, %v4435
      %v4487 = vmul.f32 %v4175, %v4437
      %v4488 = vmul.f32 %v4180, %v4439
      %v4489 = vmul.f32 %v4183, %v4441
      %v4490 = vmul.f32 %v4188, %v4443
      %v4491 = vmul.f32 %v4191, %v4445
      %v4492 = vmul.f32 %v4196, %v4447
      %v4493 = vmul.f32 %v4199, %v4449
      %v4494 = vmul.f32 %v4204, %v4451
      %v4495 = vmul.f32 %v4207, %v4453
      %v4496 = vmul.f32 %v4212, %v4455
      %v4497 = vmul.f32 %v4215, %v4457
      %v4498 = vmul.f32 %v4220, %v4459
      %v4499 = vmul.f32 %v4223, %v4461
      %v4500 = vmul.f32 %v4228, %v4463
      %v4501 = vmul.f32 %v4231, %v4465
      %v4502 = vmul.f32 %v4236, %v4467
      %v4503 = vmul.f32 %v4239, %v4469
      %v4504 = vmul.f32 %v4244, %v4471
      %v4505 = vmul.f32 %v4247, %v4473
      %v4506 = vpack.c.bf16 %v4475, %v4474
      %v4507 = vpack.c.bf16 %v4477, %v4476
      %v4508 = vpack.c.bf16 %v4479, %v4478
      %v4509 = vpack.c.bf16 %v4481, %v4480
      %v4510 = vpack.c.bf16 %v4483, %v4482
      %v4511 = vpack.c.bf16 %v4485, %v4484
      %v4512 = vpack.c.bf16 %v4487, %v4486
      %v4513 = vpack.c.bf16 %v4489, %v4488
      %v4514 = vpack.c.bf16 %v4491, %v4490
      %v4515 = vpack.c.bf16 %v4493, %v4492
      %v4516 = vpack.c.bf16 %v4495, %v4494
      %v4517 = vpack.c.bf16 %v4497, %v4496
      %v4518 = vpack.c.bf16 %v4499, %v4498
      %v4519 = vpack.c.bf16 %v4501, %v4500
      %v4520 = vpack.c.bf16 %v4503, %v4502
      %v4521 = vpack.c.bf16 %v4505, %v4504
      %v4522 = vld [vmem:[%s3 + $0x140] sm:$0xf]
      %v4523 = vld [vmem:[%s3 + $0x144] sm:$0xf]
      %v4524 = vld [vmem:[%s3 + $0x148] sm:$0xf]
      %v4525 = vld [vmem:[%s3 + $0x14c] sm:$0xf]
      %v4526 = vld [vmem:[%s3 + $0x150] sm:$0xf]
      %v4527 = vld [vmem:[%s3 + $0x154] sm:$0xf]
      %v4528 = vld [vmem:[%s3 + $0x158] sm:$0xf]
      %v4529 = vld [vmem:[%s3 + $0x15c] sm:$0xf]
      %v4530 = vld [vmem:[%s3 + $0x160] sm:$0xf]
      %v4531 = vld [vmem:[%s3 + $0x164] sm:$0xf]
      %v4532 = vld [vmem:[%s3 + $0x168] sm:$0xf]
      %v4533 = vld [vmem:[%s3 + $0x16c] sm:$0xf]
      %v4534 = vld [vmem:[%s3 + $0x170] sm:$0xf]
      %v4535 = vld [vmem:[%s3 + $0x174] sm:$0xf]
      %v4536 = vld [vmem:[%s3 + $0x178] sm:$0xf]
      %v4537 = vld [vmem:[%s3 + $0x17c] sm:$0xf]
      %v4554 = vunpack.c.l.b16 %v4522
      %v4555 = vunpack.c.l.b16 %v4523
      %v4556 = vunpack.c.l.b16 %v4524
      %v4557 = vunpack.c.l.b16 %v4525
      %v4558 = vunpack.c.l.b16 %v4526
      %v4559 = vunpack.c.l.b16 %v4527
      %v4560 = vunpack.c.l.b16 %v4528
      %v4561 = vunpack.c.l.b16 %v4529
      %v4562 = vunpack.c.l.b16 %v4530
      %v4563 = vunpack.c.l.b16 %v4531
      %v4564 = vunpack.c.l.b16 %v4532
      %v4565 = vunpack.c.l.b16 %v4533
      %v4566 = vunpack.c.l.b16 %v4534
      %v4567 = vunpack.c.l.b16 %v4535
      %v4568 = vunpack.c.l.b16 %v4536
      %v4569 = vunpack.c.l.b16 %v4537
      %v4570 = vpack.c.b16 %v4555, %v4554
      %v4571 = vpack.c.b16 %v4557, %v4556
      %v4572 = vpack.c.b16 %v4559, %v4558
      %v4573 = vpack.c.b16 %v4561, %v4560
      %v4574 = vpack.c.b16 %v4563, %v4562
      %v4575 = vpack.c.b16 %v4565, %v4564
      %v4576 = vpack.c.b16 %v4567, %v4566
      %v4577 = vpack.c.b16 %v4569, %v4568
      %4586 = vmatprep.subr.bf16.mxu0 0
      %4587 = vmatpush1.bf16.msra.mxu0 %v4570
      %4588 = vmatprep.subr.bf16.mxu0 0
      %4589 = vmatpush1.bf16.msra.mxu0 %v4571
      %4590 = vmatprep.subr.bf16.mxu0 0
      %4591 = vmatpush1.bf16.msra.mxu0 %v4572
      %4592 = vmatprep.subr.bf16.mxu0 0
      %4593 = vmatpush1.bf16.msra.mxu0 %v4573
      %4594 = vmatprep.subr.bf16.mxu0 0
      %4595 = vmatpush1.bf16.msra.mxu0 %v4574
      %4596 = vmatprep.subr.bf16.mxu0 0
      %4597 = vmatpush1.bf16.msra.mxu0 %v4575
      %4598 = vmatprep.subr.bf16.mxu0 0
      %4599 = vmatpush1.bf16.msra.mxu0 %v4576
      %4600 = vmatprep.subr.bf16.mxu0 0
      %4601 = vmatpush1.bf16.msra.mxu0 %v4577
      %4602 = vmatprep.subr.bf16.mxu0 0
      %4603 = vmatpush1.bf16.msra.mxu0 0
      %4604 = vmatprep.subr.bf16.mxu0 0
      %4605 = vmatpush1.bf16.msra.mxu0 0
      %4606 = vmatprep.subr.bf16.mxu0 0
      %4607 = vmatpush1.bf16.msra.mxu0 0
      %4608 = vmatprep.subr.bf16.mxu0 0
      %4609 = vmatpush1.bf16.msra.mxu0 0
      %4610 = vmatprep.subr.bf16.mxu0 0
      %4611 = vmatpush1.bf16.msra.mxu0 0
      %4612 = vmatprep.subr.bf16.mxu0 0
      %4613 = vmatpush1.bf16.msra.mxu0 0
      %4614 = vmatprep.subr.bf16.mxu0 0
      %4615 = vmatpush1.bf16.msra.mxu0 0
      %4616 = vmatprep.subr.bf16.mxu0 0
      %4617 = vmatpush1.bf16.msra.mxu0 0
      %4618 = vmatprep.mubr.bf16.mxu0 0
      %4619 = vmatmul.mubr.bf16.gmra.mrb[0].mxu0 %v4506
      %v4620 = vpop.f32.mrb[0].mxu0
      %v4621 = vadd.f32 0.0, %v4620
      %v4622 = vpop.f32.mrb[0].mxu0
      %v4623 = vpop.f32.mrb[0].mxu0
      %v4624 = vadd.f32 0.0, %v4623
      %v4625 = vpop.f32.mrb[0].mxu0
      %4626 = vmatprep.mubr.bf16.mxu0 0
      %4627 = vmatmul.mubr.bf16.gmra.mrb[0].mxu0 %v4507
      %v4628 = vpop.f32.mrb[0].mxu0
      %v4629 = vadd.f32 0.0, %v4628
      %v4630 = vpop.f32.mrb[0].mxu0
      %v4631 = vpop.f32.mrb[0].mxu0
      %v4632 = vadd.f32 0.0, %v4631
      %v4633 = vpop.f32.mrb[0].mxu0
      %4634 = vmatprep.mubr.bf16.mxu0 0
      %4635 = vmatmul.mubr.bf16.gmra.mrb[0].mxu0 %v4508
      %v4636 = vpop.f32.mrb[0].mxu0
      %v4637 = vadd.f32 0.0, %v4636
      %v4638 = vpop.f32.mrb[0].mxu0
      %v4639 = vpop.f32.mrb[0].mxu0
      %v4640 = vadd.f32 0.0, %v4639
      %v4641 = vpop.f32.mrb[0].mxu0
      %4642 = vmatprep.mubr.bf16.mxu0 0
      %4643 = vmatmul.mubr.bf16.gmra.mrb[0].mxu0 %v4509
      %v4644 = vpop.f32.mrb[0].mxu0
      %v4645 = vadd.f32 0.0, %v4644
      %v4646 = vpop.f32.mrb[0].mxu0
      %v4647 = vpop.f32.mrb[0].mxu0
      %v4648 = vadd.f32 0.0, %v4647
      %v4649 = vpop.f32.mrb[0].mxu0
      %4650 = vmatprep.mubr.bf16.mxu0 0
      %4651 = vmatmul.mubr.bf16.gmra.mrb[0].mxu0 %v4510
      %v4652 = vpop.f32.mrb[0].mxu0
      %v4653 = vadd.f32 0.0, %v4652
      %v4654 = vpop.f32.mrb[0].mxu0
      %v4655 = vpop.f32.mrb[0].mxu0
      %v4656 = vadd.f32 0.0, %v4655
      %v4657 = vpop.f32.mrb[0].mxu0
      %4658 = vmatprep.mubr.bf16.mxu0 0
      %4659 = vmatmul.mubr.bf16.gmra.mrb[0].mxu0 %v4511
      %v4660 = vpop.f32.mrb[0].mxu0
      %v4661 = vadd.f32 0.0, %v4660
      %v4662 = vpop.f32.mrb[0].mxu0
      %v4663 = vpop.f32.mrb[0].mxu0
      %v4664 = vadd.f32 0.0, %v4663
      %v4665 = vpop.f32.mrb[0].mxu0
      %4666 = vmatprep.mubr.bf16.mxu0 0
      %4667 = vmatmul.mubr.bf16.gmra.mrb[0].mxu0 %v4512
      %v4668 = vpop.f32.mrb[0].mxu0
      %v4669 = vadd.f32 0.0, %v4668
      %v4670 = vpop.f32.mrb[0].mxu0
      %v4671 = vpop.f32.mrb[0].mxu0
      %v4672 = vadd.f32 0.0, %v4671
      %v4673 = vpop.f32.mrb[0].mxu0
      %4674 = vmatprep.mubr.bf16.mxu0 0
      %4675 = vmatmul.mubr.bf16.gmra.mrb[0].mxu0 %v4513
      %v4676 = vpop.f32.mrb[0].mxu0
      %v4677 = vadd.f32 0.0, %v4676
      %v4678 = vpop.f32.mrb[0].mxu0
      %v4679 = vpop.f32.mrb[0].mxu0
      %v4680 = vadd.f32 0.0, %v4679
      %v4681 = vpop.f32.mrb[0].mxu0
      %4682 = vmatprep.mubr.bf16.mxu0 0
      %4683 = vmatmul.mubr.bf16.gmra.mrb[0].mxu0 %v4514
      %v4684 = vpop.f32.mrb[0].mxu0
      %v4685 = vadd.f32 0.0, %v4684
      %v4686 = vpop.f32.mrb[0].mxu0
      %v4687 = vpop.f32.mrb[0].mxu0
      %v4688 = vadd.f32 0.0, %v4687
      %v4689 = vpop.f32.mrb[0].mxu0
      %4690 = vmatprep.mubr.bf16.mxu0 0
      %4691 = vmatmul.mubr.bf16.gmra.mrb[0].mxu0 %v4515
      %v4692 = vpop.f32.mrb[0].mxu0
      %v4693 = vadd.f32 0.0, %v4692
      %v4694 = vpop.f32.mrb[0].mxu0
      %v4695 = vpop.f32.mrb[0].mxu0
      %v4696 = vadd.f32 0.0, %v4695
      %v4697 = vpop.f32.mrb[0].mxu0
      %4698 = vmatprep.mubr.bf16.mxu0 0
      %4699 = vmatmul.mubr.bf16.gmra.mrb[0].mxu0 %v4516
      %v4700 = vpop.f32.mrb[0].mxu0
      %v4701 = vadd.f32 0.0, %v4700
      %v4702 = vpop.f32.mrb[0].mxu0
      %v4703 = vpop.f32.mrb[0].mxu0
      %v4704 = vadd.f32 0.0, %v4703
      %v4705 = vpop.f32.mrb[0].mxu0
      %4706 = vmatprep.mubr.bf16.mxu0 0
      %4707 = vmatmul.mubr.bf16.gmra.mrb[0].mxu0 %v4517
      %v4708 = vpop.f32.mrb[0].mxu0
      %v4709 = vadd.f32 0.0, %v4708
      %v4710 = vpop.f32.mrb[0].mxu0
      %v4711 = vpop.f32.mrb[0].mxu0
      %v4712 = vadd.f32 0.0, %v4711
      %v4713 = vpop.f32.mrb[0].mxu0
      %4714 = vmatprep.mubr.bf16.mxu0 0
      %4715 = vmatmul.mubr.bf16.gmra.mrb[0].mxu0 %v4518
      %v4716 = vpop.f32.mrb[0].mxu0
      %v4717 = vadd.f32 0.0, %v4716
      %v4718 = vpop.f32.mrb[0].mxu0
      %v4719 = vpop.f32.mrb[0].mxu0
      %v4720 = vadd.f32 0.0, %v4719
      %v4721 = vpop.f32.mrb[0].mxu0
      %4722 = vmatprep.mubr.bf16.mxu0 0
      %4723 = vmatmul.mubr.bf16.gmra.mrb[0].mxu0 %v4519
      %v4724 = vpop.f32.mrb[0].mxu0
      %v4725 = vadd.f32 0.0, %v4724
      %v4726 = vpop.f32.mrb[0].mxu0
      %v4727 = vpop.f32.mrb[0].mxu0
      %v4728 = vadd.f32 0.0, %v4727
      %v4729 = vpop.f32.mrb[0].mxu0
      %4730 = vmatprep.mubr.bf16.mxu0 0
      %4731 = vmatmul.mubr.bf16.gmra.mrb[0].mxu0 %v4520
      %v4732 = vpop.f32.mrb[0].mxu0
      %v4733 = vadd.f32 0.0, %v4732
      %v4734 = vpop.f32.mrb[0].mxu0
      %v4735 = vpop.f32.mrb[0].mxu0
      %v4736 = vadd.f32 0.0, %v4735
      %v4737 = vpop.f32.mrb[0].mxu0
      %4738 = vmatprep.mubr.bf16.mxu0 0
      %4739 = vmatmul.mubr.bf16.gmra.mrb[0].mxu0 %v4521
      %v4740 = vpop.f32.mrb[0].mxu0
      %v4741 = vadd.f32 0.0, %v4740
      %v4742 = vpop.f32.mrb[0].mxu0
      %v4743 = vpop.f32.mrb[0].mxu0
      %v4744 = vadd.f32 0.0, %v4743
      %v4745 = vpop.f32.mrb[0].mxu0
      %4746 = vdwg.mxu0
      %v4747 = vadd.f32 %v3986, %v4621
      %v4748 = vadd.f32 %v3987, %v4624
      %v4749 = vadd.f32 %v3988, %v4629
      %v4750 = vadd.f32 %v3989, %v4632
      %v4751 = vadd.f32 %v3990, %v4637
      %v4752 = vadd.f32 %v3991, %v4640
      %v4753 = vadd.f32 %v3992, %v4645
      %v4754 = vadd.f32 %v3993, %v4648
      %v4755 = vadd.f32 %v3994, %v4653
      %v4756 = vadd.f32 %v3995, %v4656
      %v4757 = vadd.f32 %v3996, %v4661
      %v4758 = vadd.f32 %v3997, %v4664
      %v4759 = vadd.f32 %v3998, %v4669
      %v4760 = vadd.f32 %v3999, %v4672
      %v4761 = vadd.f32 %v4000, %v4677
      %v4762 = vadd.f32 %v4001, %v4680
      %v4763 = vadd.f32 %v4002, %v4685
      %v4764 = vadd.f32 %v4003, %v4688
      %v4765 = vadd.f32 %v4004, %v4693
      %v4766 = vadd.f32 %v4005, %v4696
      %v4767 = vadd.f32 %v4006, %v4701
      %v4768 = vadd.f32 %v4007, %v4704
      %v4769 = vadd.f32 %v4008, %v4709
      %v4770 = vadd.f32 %v4009, %v4712
      %v4771 = vadd.f32 %v4010, %v4717
      %v4772 = vadd.f32 %v4011, %v4720
      %v4773 = vadd.f32 %v4012, %v4725
      %v4774 = vadd.f32 %v4013, %v4728
      %v4775 = vadd.f32 %v4014, %v4733
      %v4776 = vadd.f32 %v4015, %v4736
      %v4777 = vadd.f32 %v4016, %v4741
      %v4778 = vadd.f32 %v4017, %v4744
      %v4779 = vld [vmem:[%s4] sm:$0x1]
      %v4781 = vlaneseq
      %v4782 = vshrl.u32 %v4781, 7
      %v4783 = vsub.s32 0, %v4782
      %v4784 = vrot.slane %v4779, %v4783
      %v4786 = vadd.f32 %v4747, %v4784
      %v4787 = vadd.f32 %v4748, %v4784
      %v4788 = vadd.f32 %v4749, %v4784
      %v4789 = vadd.f32 %v4750, %v4784
      %v4790 = vadd.f32 %v4751, %v4784
      %v4791 = vadd.f32 %v4752, %v4784
      %v4792 = vadd.f32 %v4753, %v4784
      %v4793 = vadd.f32 %v4754, %v4784
      %v4794 = vadd.f32 %v4755, %v4784
      %v4795 = vadd.f32 %v4756, %v4784
      %v4796 = vadd.f32 %v4757, %v4784
      %v4797 = vadd.f32 %v4758, %v4784
      %v4798 = vadd.f32 %v4759, %v4784
      %v4799 = vadd.f32 %v4760, %v4784
      %v4800 = vadd.f32 %v4761, %v4784
      %v4801 = vadd.f32 %v4762, %v4784
      %v4802 = vadd.f32 %v4763, %v4784
      %v4803 = vadd.f32 %v4764, %v4784
      %v4804 = vadd.f32 %v4765, %v4784
      %v4805 = vadd.f32 %v4766, %v4784
      %v4806 = vadd.f32 %v4767, %v4784
      %v4807 = vadd.f32 %v4768, %v4784
      %v4808 = vadd.f32 %v4769, %v4784
      %v4809 = vadd.f32 %v4770, %v4784
      %v4810 = vadd.f32 %v4771, %v4784
      %v4811 = vadd.f32 %v4772, %v4784
      %v4812 = vadd.f32 %v4773, %v4784
      %v4813 = vadd.f32 %v4774, %v4784
      %v4814 = vadd.f32 %v4775, %v4784
      %v4815 = vadd.f32 %v4776, %v4784
      %v4816 = vadd.f32 %v4777, %v4784
      %v4817 = vadd.f32 %v4778, %v4784
      %4818 = vst [vmem:[%s226] sm:$0xff] %v4786
      %4819 = vst [vmem:[%s226 + $0x8] sm:$0xff] %v4787
      %4820 = vst [vmem:[%s226 + $0x10] sm:$0xff] %v4788
      %4821 = vst [vmem:[%s226 + $0x18] sm:$0xff] %v4789
      %4822 = vst [vmem:[%s226 + $0x20] sm:$0xff] %v4790
      %4823 = vst [vmem:[%s226 + $0x28] sm:$0xff] %v4791
      %4824 = vst [vmem:[%s226 + $0x30] sm:$0xff] %v4792
      %4825 = vst [vmem:[%s226 + $0x38] sm:$0xff] %v4793
      %4826 = vst [vmem:[%s226 + $0x40] sm:$0xff] %v4794
      %4827 = vst [vmem:[%s226 + $0x48] sm:$0xff] %v4795
      %4828 = vst [vmem:[%s226 + $0x50] sm:$0xff] %v4796
      %4829 = vst [vmem:[%s226 + $0x58] sm:$0xff] %v4797
      %4830 = vst [vmem:[%s226 + $0x60] sm:$0xff] %v4798
      %4831 = vst [vmem:[%s226 + $0x68] sm:$0xff] %v4799
      %4832 = vst [vmem:[%s226 + $0x70] sm:$0xff] %v4800
      %4833 = vst [vmem:[%s226 + $0x78] sm:$0xff] %v4801
      %4834 = vst [vmem:[%s226 + $0x80] sm:$0xff] %v4802
      %4835 = vst [vmem:[%s226 + $0x88] sm:$0xff] %v4803
      %4836 = vst [vmem:[%s226 + $0x90] sm:$0xff] %v4804
      %4837 = vst [vmem:[%s226 + $0x98] sm:$0xff] %v4805
      %4838 = vst [vmem:[%s226 + $0xa0] sm:$0xff] %v4806
      %4839 = vst [vmem:[%s226 + $0xa8] sm:$0xff] %v4807
      %4840 = vst [vmem:[%s226 + $0xb0] sm:$0xff] %v4808
      %4841 = vst [vmem:[%s226 + $0xb8] sm:$0xff] %v4809
      %4842 = vst [vmem:[%s226 + $0xc0] sm:$0xff] %v4810
      %4843 = vst [vmem:[%s226 + $0xc8] sm:$0xff] %v4811
      %4844 = vst [vmem:[%s226 + $0xd0] sm:$0xff] %v4812
      %4845 = vst [vmem:[%s226 + $0xd8] sm:$0xff] %v4813
      %4846 = vst [vmem:[%s226 + $0xe0] sm:$0xff] %v4814
      %4847 = vst [vmem:[%s226 + $0xe8] sm:$0xff] %v4815
      %4848 = vst [vmem:[%s226 + $0xf0] sm:$0xff] %v4816
      %4849 = vst [vmem:[%s226 + $0xf8] sm:$0xff] %v4817
      %s4850 = smul.u32 32, %s16
      %p4851 = scmp.lt.s32.totalorder %s4850, 63
      %s4852 = scalar_select %p4851, %s4850, 63
      %s4853 = smul.addr %s4852, 8
      %s4854 = scalar_lea.vmem %s5, %s4853
      // Predicated region
      $region41: #{speech_model_forward.1} parent=39 // pred_check
        %p4855 = pneg %p144
      $region42: #{speech_model_forward.1} parent=39 // pred_check_branch
        %4857 = sbr.rel (%p4855) target = $region44
      $region43: #{speech_model_forward.1} parent=39 // pred_region
        %s4858 = smul.u32 32, %s16
      $region44: #{speech_model_forward.1} parent=39 // pred_fallthru
        _
    $region40: #{speech_model_forward.1} parent=5 // pred_fallthru
      _
    %p4859 = scmp.le.s32.totalorder 2, %s11
    // Predicated region
    $region45: #{speech_model_forward.1} parent=5 // pred_check
      %p4860 = pneg %p4859
    $region46: #{speech_model_forward.1} parent=5 // pred_check_branch
      %4862 = sbr.rel (%p4860) target = $region48
    $region47: #{speech_model_forward.1} parent=5 // pred_region
      %s4863 = ssub.s32 %s11, 2
      // Predicated region
      $region49: #{speech_model_forward.1} parent=47 // pred_check
        %p4864 = pneg %p150
      $region50: #{speech_model_forward.1} parent=47 // pred_check_branch
        %4866 = sbr.rel (%p4864) target = $region52
      $region51: #{speech_model_forward.1} parent=47 // pred_region
        %s4867 = smul.u32 32, %s17
        %p4868 = scmp.lt.s32.totalorder %s4867, 63
        %s4869 = scalar_select %p4868, %s4867, 63
        %s4870 = smul.addr %s4869, 8
        %s4871 = scalar_lea.vmem %s5, %s4870
      $region52: #{speech_model_forward.1} parent=47 // pred_fallthru
        _
    $region48: #{speech_model_forward.1} parent=5 // pred_fallthru
      _
  $region6: #{speech_model_forward.1} parent=0 // loop_footer
    %s15 = sadd.s32 1, %s11
  $region7: #{speech_model_forward.1} parent=0 // loop_footer_branch
    %10 = sbr.rel target = $region3
  $region8: #{speech_model_forward.1} parent=0 // loop_exit
    _

</llo_original>
